<compile_context>
chip_gen: v5e
topology: v5e:2x2
jax: 0.10.0
libtpu: 0.0.40
codegen_flags: <defaults>
</compile_context>

<pallas_src>
import functools

import jax
import jax.numpy as jnp
from jax.experimental import pallas as pl
from jax.experimental.pallas import tpu as pltpu


# ----------------------------- Pallas kernel --------------------------------
def _conv_relu_kernel(x_ref, w_ref, b_ref, o_ref, acc_ref, *,
                      kh, kw, stride, th, ow, c):
    """Fused im2col + matmul + bias + ReLU for one (batch, row-block) step.

    x_ref  : (1, H_pad, W_pad, C)   whole padded image for this batch element
                                    (resident across the row-block grid axis)
    w_ref  : (KH*KW*C, OC_pad)      weight matrix, lane-padded, resident
    b_ref  : (1, OC_pad)            f32 bias row, resident
    o_ref  : (1, TH, OW_pad, OC_pad) output tile (lane-dense last dim)
    acc_ref: (TH*OW_pad, OC_pad)    f32 VMEM accumulator scratch
    """
    r = pl.program_id(1)                 # which block of output rows
    row0 = r * (th * stride)             # first padded-input row for tap i=0
    m2, ocp = acc_ref.shape

    acc_ref[...] = jnp.zeros_like(acc_ref)

    # Unrolled loop over the KH*KW kernel taps: shifted slice of the resident
    # image + (M, C) x (C, OC_pad) matmul on the MXU, accumulated in f32.
    for i in range(kh):
        for j in range(kw):
            if stride == 1:
                slab = x_ref[0, pl.ds(row0 + i, th), pl.ds(j, ow), :]
            else:
                slab = x_ref[0, pl.ds(row0 + i, th, stride),
                             pl.ds(j, ow, stride), :]
            w_tap = w_ref[pl.ds((i * kw + j) * c, c), :]
            acc_ref[...] += jnp.dot(slab.reshape(m2, c), w_tap,
                                    preferred_element_type=jnp.float32)

    out = jnp.maximum(acc_ref[...] + b_ref[...], 0.0)
    o_ref[...] = out.reshape(1, th, ow, ocp).astype(o_ref.dtype)


def _choose_row_block(oh, ow_pad, oc_pad, budget_bytes=6 * 1024 * 1024):
    """Largest divisor of OH whose f32 accumulator + double-buffered output
    tile fit the VMEM budget (biggest tile => fewest grid steps => least
    per-step pipeline overhead)."""
    best = 1
    for th in range(1, oh + 1):
        if oh % th:
            continue
        need = th * ow_pad * oc_pad * 4 * (1 + 2)   # acc + 2x buffered out
        if need <= budget_bytes:
            best = th
    return best


# ------------------------------- wrapper --------------------------------------
@functools.partial(jax.jit, static_argnames=("stride", "pad", "compute_dtype"))
def basic_conv2d(x_nchw, weight, bias, *, stride=1, pad=1,
                 compute_dtype=jnp.float32):
    """Equivalent of BasicConv2d.forward: Conv2d(stride, pad) -> ReLU.

    x_nchw : (N, C, H, W)        float32
    weight : (OC, C, KH, KW)     float32  (PyTorch Conv2d layout)
    bias   : (OC,)               float32
    returns: (N, OC, OH, OW)     float32
    On v6e/v7x use compute_dtype=jnp.bfloat16 for big layers (f32 accumulate).
    """
    OC, C, KH, KW = weight.shape
    N, _, H, W = x_nchw.shape
    OH = (H + 2 * pad - KH) // stride + 1
    OW = (W + 2 * pad - KW) // stride + 1
    K = KH * KW * C

    # Lane-dense output channels; sublane-aligned output width.
    OC_pad = ((OC + 127) // 128) * 128
    OW_pad = ((OW + 7) // 8) * 8
    extra_w = (OW_pad - OW) * stride

    # NHWC + spatial zero-pad (one small pad of the raw input; no duplicated
    # patch matrix is ever materialized in HBM).
    x_nhwc = jnp.transpose(x_nchw, (0, 2, 3, 1))
    x_padded = jnp.pad(
        x_nhwc, ((0, 0), (pad, pad), (pad, pad + extra_w), (0, 0))
    ).astype(compute_dtype)
    H_pad = H + 2 * pad
    W_pad = W + 2 * pad + extra_w

    # (kh, kw, c)-ordered weight matrix, zero-padded along OC; f32 bias row.
    w_mat = jnp.transpose(weight, (2, 3, 1, 0)).reshape(K, OC)
    w_mat = jnp.pad(w_mat, ((0, 0), (0, OC_pad - OC))).astype(compute_dtype)
    b_row = jnp.pad(bias, (0, OC_pad - OC)).reshape(1, OC_pad).astype(jnp.float32)

    TH = _choose_row_block(OH, OW_pad, OC_pad)
    grid = (N, OH // TH)

    kernel = functools.partial(_conv_relu_kernel, kh=KH, kw=KW, stride=stride,
                               th=TH, ow=OW_pad, c=C)

    itemsize = jnp.dtype(compute_dtype).itemsize
    cost = pl.CostEstimate(
        flops=2 * N * OH * OW_pad * K * OC_pad,
        transcendentals=0,
        bytes_accessed=(N * H_pad * W_pad * C * itemsize
                        + K * OC_pad * itemsize
                        + N * OH * OW_pad * OC_pad * 4),
    )

    out = pl.pallas_call(
        kernel,
        out_shape=jax.ShapeDtypeStruct((N, OH, OW_pad, OC_pad), jnp.float32),
        grid_spec=pltpu.PrefetchScalarGridSpec(
            num_scalar_prefetch=0,
            grid=grid,
            in_specs=[
                # whole padded image of batch n; re-fetched only when n changes
                pl.BlockSpec((1, H_pad, W_pad, C), lambda n, r: (n, 0, 0, 0)),
                # weight + bias resident across the whole grid
                pl.BlockSpec((K, OC_pad), lambda n, r: (0, 0)),
                pl.BlockSpec((1, OC_pad), lambda n, r: (0, 0)),
            ],
            out_specs=pl.BlockSpec((1, TH, OW_pad, OC_pad),
                                   lambda n, r: (n, r, 0, 0)),
            scratch_shapes=[pltpu.VMEM((TH * OW_pad, OC_pad), jnp.float32)],
        ),
        compiler_params=pltpu.CompilerParams(
            dimension_semantics=("parallel", "parallel")),
        cost_estimate=cost,
    )(x_padded, w_mat, b_row)

    out = out[:, :, :OW, :OC]                 # drop lane / width padding
    return jnp.transpose(out, (0, 3, 1, 2))   # back to NCHW


# ------------------------------- main ----------------------------------------
if __name__ == "__main__":
    key = jax.random.PRNGKey(0)
    k_x, k_w, k_b = jax.random.split(key, 3)

    # BasicConv2d(in_channels=4, out_channels=8, kernel_size=3, padding=1)
    N, C, H, W = 2, 4, 16, 16
    OC, KH, KW = 8, 3, 3
    stride, pad = 1, 1

    x = jax.random.normal(k_x, (N, C, H, W), dtype=jnp.float32)
    fan_in = C * KH * KW
    bound = 1.0 / (fan_in ** 0.5)
    weight = jax.random.uniform(k_w, (OC, C, KH, KW), jnp.float32, -bound, bound)
    bias = jax.random.uniform(k_b, (OC,), jnp.float32, -bound, bound)

    y = basic_conv2d(x, weight, bias, stride=stride, pad=pad)
    jax.block_until_ready(y)

    # Cross-check against the XLA conv reference.
    ref = jax.lax.conv_general_dilated(
        x, weight, window_strides=(stride, stride),
        padding=((pad, pad), (pad, pad)),
        dimension_numbers=("NCHW", "OIHW", "NCHW"))
    ref = jnp.maximum(ref + bias.reshape(1, OC, 1, 1), 0.0)

    assert y.shape == (N, OC, H, W)
    assert jnp.allclose(y, ref, atol=1e-4, rtol=1e-4)

    print("KERNEL_OK")
</pallas_src>

<mosaic_0001>
module attributes {stable_mosaic.version = 11 : i64} {
  func.func @_conv_relu_kernel(%arg0: i32, %arg1: i32, %arg2: memref<1x18x18x4xf32, #tpu.memory_space<vmem>>, %arg3: memref<36x128xf32, #tpu.memory_space<vmem>>, %arg4: memref<1x128xf32, #tpu.memory_space<vmem>>, %arg5: memref<1x16x16x128xf32, #tpu.memory_space<vmem>>, %arg6: memref<256x128xf32, #tpu.memory_space<vmem>>) attributes {dimension_semantics = [#tpu.dimension_semantics<parallel>, #tpu.dimension_semantics<parallel>], iteration_bounds = array<i64: 2, 1>, scalar_prefetch = 0 : i64, scratch_operands = 1 : i64, tpu.core_type = #tpu.core_type<tc>, window_params = [{transform_indices = @transform_0, window_bounds = array<i64: 1, 18, 18, 4>}, {pipeline_mode = #tpu.pipeline_mode<synchronous>, transform_indices = @transform_1, window_bounds = array<i64: 36, 128>}, {pipeline_mode = #tpu.pipeline_mode<synchronous>, transform_indices = @transform_2, window_bounds = array<i64: 1, 128>}, {transform_indices = @transform_3, window_bounds = array<i64: 1, 16, 16, 128>}]} {
    %c16_i32 = arith.constant 16 : i32
    %0 = arith.muli %arg1, %c16_i32 : i32
    %cst = arith.constant 0.000000e+00 : f32
    %1 = vector.broadcast %cst : f32 to vector<256x128xf32>
    %c0 = arith.constant 0 : index
    %c0_0 = arith.constant 0 : index
    %2 = vector.load %arg6[%c0, %c0_0] : memref<256x128xf32, #tpu.memory_space<vmem>>, vector<256x128xf32>
    tpu.vector_store %arg6[%c0, %c0_0], %1 {strides = array<i32>} : memref<256x128xf32, #tpu.memory_space<vmem>>, vector<256x128xf32>,
    %c0_i32 = arith.constant 0 : i32
    %3 = arith.addi %0, %c0_i32 : i32
    %c0_1 = arith.constant 0 : index
    %4 = arith.index_cast %3 : i32 to index
    %c0_2 = arith.constant 0 : index
    %c0_3 = arith.constant 0 : index
    %5 = vector.load %arg2[%c0_1, %4, %c0_2, %c0_3] : memref<1x18x18x4xf32, #tpu.memory_space<vmem>>, vector<1x16x16x4xf32>
    %6 = vector.shape_cast %5 : vector<1x16x16x4xf32> to vector<16x16x4xf32>
    %c0_4 = arith.constant 0 : index
    %c0_5 = arith.constant 0 : index
    %7 = vector.load %arg3[%c0_4, %c0_5] : memref<36x128xf32, #tpu.memory_space<vmem>>, vector<4x128xf32>
    %c0_6 = arith.constant 0 : index
    %c0_7 = arith.constant 0 : index
    %8 = vector.load %arg6[%c0_6, %c0_7] : memref<256x128xf32, #tpu.memory_space<vmem>>, vector<256x128xf32>
    %9 = vector.shape_cast %6 : vector<16x16x4xf32> to vector<256x4xf32>
    %cst_8 = arith.constant dense<0.000000e+00> : vector<256x128xf32>
    %10 = tpu.matmul %9, %7, %cst_8 {dimension_numbers = #tpu.dot_dimension_numbers<[1], [0], [0], [1], [0, 0, 1, 1], [], []>} : vector<256x4xf32>, vector<4x128xf32>, vector<256x128xf32> -> vector<256x128xf32>
    %11 = arith.addf %8, %10 : vector<256x128xf32>
    %c0_9 = arith.constant 0 : index
    %c0_10 = arith.constant 0 : index
    %12 = vector.load %arg6[%c0_9, %c0_10] : memref<256x128xf32, #tpu.memory_space<vmem>>, vector<256x128xf32>
    tpu.vector_store %arg6[%c0_9, %c0_10], %11 {strides = array<i32>} : memref<256x128xf32, #tpu.memory_space<vmem>>, vector<256x128xf32>,
    %c0_i32_11 = arith.constant 0 : i32
    %13 = arith.addi %0, %c0_i32_11 : i32
    %c0_12 = arith.constant 0 : index
    %14 = arith.index_cast %13 : i32 to index
    %c1 = arith.constant 1 : index
    %c0_13 = arith.constant 0 : index
    %15 = vector.load %arg2[%c0_12, %14, %c1, %c0_13] : memref<1x18x18x4xf32, #tpu.memory_space<vmem>>, vector<1x16x16x4xf32>
    %16 = vector.shape_cast %15 : vector<1x16x16x4xf32> to vector<16x16x4xf32>
    %c4 = arith.constant 4 : index
    %c0_14 = arith.constant 0 : index
    %17 = vector.load %arg3[%c4, %c0_14] : memref<36x128xf32, #tpu.memory_space<vmem>>, vector<4x128xf32>
    %c0_15 = arith.constant 0 : index
    %c0_16 = arith.constant 0 : index
    %18 = vector.load %arg6[%c0_15, %c0_16] : memref<256x128xf32, #tpu.memory_space<vmem>>, vector<256x128xf32>
    %19 = vector.shape_cast %16 : vector<16x16x4xf32> to vector<256x4xf32>
    %cst_17 = arith.constant dense<0.000000e+00> : vector<256x128xf32>
    %20 = tpu.matmul %19, %17, %cst_17 {dimension_numbers = #tpu.dot_dimension_numbers<[1], [0], [0], [1], [0, 0, 1, 1], [], []>} : vector<256x4xf32>, vector<4x128xf32>, vector<256x128xf32> -> vector<256x128xf32>
    %21 = arith.addf %18, %20 : vector<256x128xf32>
    %c0_18 = arith.constant 0 : index
    %c0_19 = arith.constant 0 : index
    %22 = vector.load %arg6[%c0_18, %c0_19] : memref<256x128xf32, #tpu.memory_space<vmem>>, vector<256x128xf32>
    tpu.vector_store %arg6[%c0_18, %c0_19], %21 {strides = array<i32>} : memref<256x128xf32, #tpu.memory_space<vmem>>, vector<256x128xf32>,
    %c0_i32_20 = arith.constant 0 : i32
    %23 = arith.addi %0, %c0_i32_20 : i32
    %c0_21 = arith.constant 0 : index
    %24 = arith.index_cast %23 : i32 to index
    %c2 = arith.constant 2 : index
    %c0_22 = arith.constant 0 : index
    %25 = vector.load %arg2[%c0_21, %24, %c2, %c0_22] : memref<1x18x18x4xf32, #tpu.memory_space<vmem>>, vector<1x16x16x4xf32>
    %26 = vector.shape_cast %25 : vector<1x16x16x4xf32> to vector<16x16x4xf32>
    %c8 = arith.constant 8 : index
    %c0_23 = arith.constant 0 : index
    %27 = vector.load %arg3[%c8, %c0_23] : memref<36x128xf32, #tpu.memory_space<vmem>>, vector<4x128xf32>
    %c0_24 = arith.constant 0 : index
    %c0_25 = arith.constant 0 : index
    %28 = vector.load %arg6[%c0_24, %c0_25] : memref<256x128xf32, #tpu.memory_space<vmem>>, vector<256x128xf32>
    %29 = vector.shape_cast %26 : vector<16x16x4xf32> to vector<256x4xf32>
    %cst_26 = arith.constant dense<0.000000e+00> : vector<256x128xf32>
    %30 = tpu.matmul %29, %27, %cst_26 {dimension_numbers = #tpu.dot_dimension_numbers<[1], [0], [0], [1], [0, 0, 1, 1], [], []>} : vector<256x4xf32>, vector<4x128xf32>, vector<256x128xf32> -> vector<256x128xf32>
    %31 = arith.addf %28, %30 : vector<256x128xf32>
    %c0_27 = arith.constant 0 : index
    %c0_28 = arith.constant 0 : index
    %32 = vector.load %arg6[%c0_27, %c0_28] : memref<256x128xf32, #tpu.memory_space<vmem>>, vector<256x128xf32>
    tpu.vector_store %arg6[%c0_27, %c0_28], %31 {strides = array<i32>} : memref<256x128xf32, #tpu.memory_space<vmem>>, vector<256x128xf32>,
    %c1_i32 = arith.constant 1 : i32
    %33 = arith.addi %0, %c1_i32 : i32
    %c0_29 = arith.constant 0 : index
    %34 = arith.index_cast %33 : i32 to index
    %c0_30 = arith.constant 0 : index
    %c0_31 = arith.constant 0 : index
    %35 = vector.load %arg2[%c0_29, %34, %c0_30, %c0_31] : memref<1x18x18x4xf32, #tpu.memory_space<vmem>>, vector<1x16x16x4xf32>
    %36 = vector.shape_cast %35 : vector<1x16x16x4xf32> to vector<16x16x4xf32>
    %c12 = arith.constant 12 : index
    %c0_32 = arith.constant 0 : index
    %37 = vector.load %arg3[%c12, %c0_32] : memref<36x128xf32, #tpu.memory_space<vmem>>, vector<4x128xf32>
    %c0_33 = arith.constant 0 : index
    %c0_34 = arith.constant 0 : index
    %38 = vector.load %arg6[%c0_33, %c0_34] : memref<256x128xf32, #tpu.memory_space<vmem>>, vector<256x128xf32>
    %39 = vector.shape_cast %36 : vector<16x16x4xf32> to vector<256x4xf32>
    %cst_35 = arith.constant dense<0.000000e+00> : vector<256x128xf32>
    %40 = tpu.matmul %39, %37, %cst_35 {dimension_numbers = #tpu.dot_dimension_numbers<[1], [0], [0], [1], [0, 0, 1, 1], [], []>} : vector<256x4xf32>, vector<4x128xf32>, vector<256x128xf32> -> vector<256x128xf32>
    %41 = arith.addf %38, %40 : vector<256x128xf32>
    %c0_36 = arith.constant 0 : index
    %c0_37 = arith.constant 0 : index
    %42 = vector.load %arg6[%c0_36, %c0_37] : memref<256x128xf32, #tpu.memory_space<vmem>>, vector<256x128xf32>
    tpu.vector_store %arg6[%c0_36, %c0_37], %41 {strides = array<i32>} : memref<256x128xf32, #tpu.memory_space<vmem>>, vector<256x128xf32>,
    %c1_i32_38 = arith.constant 1 : i32
    %43 = arith.addi %0, %c1_i32_38 : i32
    %c0_39 = arith.constant 0 : index
    %44 = arith.index_cast %43 : i32 to index
    %c1_40 = arith.constant 1 : index
    %c0_41 = arith.constant 0 : index
    %45 = vector.load %arg2[%c0_39, %44, %c1_40, %c0_41] : memref<1x18x18x4xf32, #tpu.memory_space<vmem>>, vector<1x16x16x4xf32>
    %46 = vector.shape_cast %45 : vector<1x16x16x4xf32> to vector<16x16x4xf32>
    %c16 = arith.constant 16 : index
    %c0_42 = arith.constant 0 : index
    %47 = vector.load %arg3[%c16, %c0_42] : memref<36x128xf32, #tpu.memory_space<vmem>>, vector<4x128xf32>
    %c0_43 = arith.constant 0 : index
    %c0_44 = arith.constant 0 : index
    %48 = vector.load %arg6[%c0_43, %c0_44] : memref<256x128xf32, #tpu.memory_space<vmem>>, vector<256x128xf32>
    %49 = vector.shape_cast %46 : vector<16x16x4xf32> to vector<256x4xf32>
    %cst_45 = arith.constant dense<0.000000e+00> : vector<256x128xf32>
    %50 = tpu.matmul %49, %47, %cst_45 {dimension_numbers = #tpu.dot_dimension_numbers<[1], [0], [0], [1], [0, 0, 1, 1], [], []>} : vector<256x4xf32>, vector<4x128xf32>, vector<256x128xf32> -> vector<256x128xf32>
    %51 = arith.addf %48, %50 : vector<256x128xf32>
    %c0_46 = arith.constant 0 : index
    %c0_47 = arith.constant 0 : index
    %52 = vector.load %arg6[%c0_46, %c0_47] : memref<256x128xf32, #tpu.memory_space<vmem>>, vector<256x128xf32>
    tpu.vector_store %arg6[%c0_46, %c0_47], %51 {strides = array<i32>} : memref<256x128xf32, #tpu.memory_space<vmem>>, vector<256x128xf32>,
    %c1_i32_48 = arith.constant 1 : i32
    %53 = arith.addi %0, %c1_i32_48 : i32
    %c0_49 = arith.constant 0 : index
    %54 = arith.index_cast %53 : i32 to index
    %c2_50 = arith.constant 2 : index
    %c0_51 = arith.constant 0 : index
    %55 = vector.load %arg2[%c0_49, %54, %c2_50, %c0_51] : memref<1x18x18x4xf32, #tpu.memory_space<vmem>>, vector<1x16x16x4xf32>
    %56 = vector.shape_cast %55 : vector<1x16x16x4xf32> to vector<16x16x4xf32>
    %c20 = arith.constant 20 : index
    %c0_52 = arith.constant 0 : index
    %57 = vector.load %arg3[%c20, %c0_52] : memref<36x128xf32, #tpu.memory_space<vmem>>, vector<4x128xf32>
    %c0_53 = arith.constant 0 : index
    %c0_54 = arith.constant 0 : index
    %58 = vector.load %arg6[%c0_53, %c0_54] : memref<256x128xf32, #tpu.memory_space<vmem>>, vector<256x128xf32>
    %59 = vector.shape_cast %56 : vector<16x16x4xf32> to vector<256x4xf32>
    %cst_55 = arith.constant dense<0.000000e+00> : vector<256x128xf32>
    %60 = tpu.matmul %59, %57, %cst_55 {dimension_numbers = #tpu.dot_dimension_numbers<[1], [0], [0], [1], [0, 0, 1, 1], [], []>} : vector<256x4xf32>, vector<4x128xf32>, vector<256x128xf32> -> vector<256x128xf32>
    %61 = arith.addf %58, %60 : vector<256x128xf32>
    %c0_56 = arith.constant 0 : index
    %c0_57 = arith.constant 0 : index
    %62 = vector.load %arg6[%c0_56, %c0_57] : memref<256x128xf32, #tpu.memory_space<vmem>>, vector<256x128xf32>
    tpu.vector_store %arg6[%c0_56, %c0_57], %61 {strides = array<i32>} : memref<256x128xf32, #tpu.memory_space<vmem>>, vector<256x128xf32>,
    %c2_i32 = arith.constant 2 : i32
    %63 = arith.addi %0, %c2_i32 : i32
    %c0_58 = arith.constant 0 : index
    %64 = arith.index_cast %63 : i32 to index
    %c0_59 = arith.constant 0 : index
    %c0_60 = arith.constant 0 : index
    %65 = vector.load %arg2[%c0_58, %64, %c0_59, %c0_60] : memref<1x18x18x4xf32, #tpu.memory_space<vmem>>, vector<1x16x16x4xf32>
    %66 = vector.shape_cast %65 : vector<1x16x16x4xf32> to vector<16x16x4xf32>
    %c24 = arith.constant 24 : index
    %c0_61 = arith.constant 0 : index
    %67 = vector.load %arg3[%c24, %c0_61] : memref<36x128xf32, #tpu.memory_space<vmem>>, vector<4x128xf32>
    %c0_62 = arith.constant 0 : index
    %c0_63 = arith.constant 0 : index
    %68 = vector.load %arg6[%c0_62, %c0_63] : memref<256x128xf32, #tpu.memory_space<vmem>>, vector<256x128xf32>
    %69 = vector.shape_cast %66 : vector<16x16x4xf32> to vector<256x4xf32>
    %cst_64 = arith.constant dense<0.000000e+00> : vector<256x128xf32>
    %70 = tpu.matmul %69, %67, %cst_64 {dimension_numbers = #tpu.dot_dimension_numbers<[1], [0], [0], [1], [0, 0, 1, 1], [], []>} : vector<256x4xf32>, vector<4x128xf32>, vector<256x128xf32> -> vector<256x128xf32>
    %71 = arith.addf %68, %70 : vector<256x128xf32>
    %c0_65 = arith.constant 0 : index
    %c0_66 = arith.constant 0 : index
    %72 = vector.load %arg6[%c0_65, %c0_66] : memref<256x128xf32, #tpu.memory_space<vmem>>, vector<256x128xf32>
    tpu.vector_store %arg6[%c0_65, %c0_66], %71 {strides = array<i32>} : memref<256x128xf32, #tpu.memory_space<vmem>>, vector<256x128xf32>,
    %c2_i32_67 = arith.constant 2 : i32
    %73 = arith.addi %0, %c2_i32_67 : i32
    %c0_68 = arith.constant 0 : index
    %74 = arith.index_cast %73 : i32 to index
    %c1_69 = arith.constant 1 : index
    %c0_70 = arith.constant 0 : index
    %75 = vector.load %arg2[%c0_68, %74, %c1_69, %c0_70] : memref<1x18x18x4xf32, #tpu.memory_space<vmem>>, vector<1x16x16x4xf32>
    %76 = vector.shape_cast %75 : vector<1x16x16x4xf32> to vector<16x16x4xf32>
    %c28 = arith.constant 28 : index
    %c0_71 = arith.constant 0 : index
    %77 = vector.load %arg3[%c28, %c0_71] : memref<36x128xf32, #tpu.memory_space<vmem>>, vector<4x128xf32>
    %c0_72 = arith.constant 0 : index
    %c0_73 = arith.constant 0 : index
    %78 = vector.load %arg6[%c0_72, %c0_73] : memref<256x128xf32, #tpu.memory_space<vmem>>, vector<256x128xf32>
    %79 = vector.shape_cast %76 : vector<16x16x4xf32> to vector<256x4xf32>
    %cst_74 = arith.constant dense<0.000000e+00> : vector<256x128xf32>
    %80 = tpu.matmul %79, %77, %cst_74 {dimension_numbers = #tpu.dot_dimension_numbers<[1], [0], [0], [1], [0, 0, 1, 1], [], []>} : vector<256x4xf32>, vector<4x128xf32>, vector<256x128xf32> -> vector<256x128xf32>
    %81 = arith.addf %78, %80 : vector<256x128xf32>
    %c0_75 = arith.constant 0 : index
    %c0_76 = arith.constant 0 : index
    %82 = vector.load %arg6[%c0_75, %c0_76] : memref<256x128xf32, #tpu.memory_space<vmem>>, vector<256x128xf32>
    tpu.vector_store %arg6[%c0_75, %c0_76], %81 {strides = array<i32>} : memref<256x128xf32, #tpu.memory_space<vmem>>, vector<256x128xf32>,
    %c2_i32_77 = arith.constant 2 : i32
    %83 = arith.addi %0, %c2_i32_77 : i32
    %c0_78 = arith.constant 0 : index
    %84 = arith.index_cast %83 : i32 to index
    %c2_79 = arith.constant 2 : index
    %c0_80 = arith.constant 0 : index
    %85 = vector.load %arg2[%c0_78, %84, %c2_79, %c0_80] : memref<1x18x18x4xf32, #tpu.memory_space<vmem>>, vector<1x16x16x4xf32>
    %86 = vector.shape_cast %85 : vector<1x16x16x4xf32> to vector<16x16x4xf32>
    %c32 = arith.constant 32 : index
    %c0_81 = arith.constant 0 : index
    %87 = vector.load %arg3[%c32, %c0_81] : memref<36x128xf32, #tpu.memory_space<vmem>>, vector<4x128xf32>
    %c0_82 = arith.constant 0 : index
    %c0_83 = arith.constant 0 : index
    %88 = vector.load %arg6[%c0_82, %c0_83] : memref<256x128xf32, #tpu.memory_space<vmem>>, vector<256x128xf32>
    %89 = vector.shape_cast %86 : vector<16x16x4xf32> to vector<256x4xf32>
    %cst_84 = arith.constant dense<0.000000e+00> : vector<256x128xf32>
    %90 = tpu.matmul %89, %87, %cst_84 {dimension_numbers = #tpu.dot_dimension_numbers<[1], [0], [0], [1], [0, 0, 1, 1], [], []>} : vector<256x4xf32>, vector<4x128xf32>, vector<256x128xf32> -> vector<256x128xf32>
    %91 = arith.addf %88, %90 : vector<256x128xf32>
    %c0_85 = arith.constant 0 : index
    %c0_86 = arith.constant 0 : index
    %92 = vector.load %arg6[%c0_85, %c0_86] : memref<256x128xf32, #tpu.memory_space<vmem>>, vector<256x128xf32>
    tpu.vector_store %arg6[%c0_85, %c0_86], %91 {strides = array<i32>} : memref<256x128xf32, #tpu.memory_space<vmem>>, vector<256x128xf32>,
    %c0_87 = arith.constant 0 : index
    %c0_88 = arith.constant 0 : index
    %93 = vector.load %arg6[%c0_87, %c0_88] : memref<256x128xf32, #tpu.memory_space<vmem>>, vector<256x128xf32>
    %c0_89 = arith.constant 0 : index
    %c0_90 = arith.constant 0 : index
    %94 = vector.load %arg4[%c0_89, %c0_90] : memref<1x128xf32, #tpu.memory_space<vmem>>, vector<1x128xf32>
    %95 = vector.broadcast %94 : vector<1x128xf32> to vector<256x128xf32>
    %96 = arith.addf %93, %95 : vector<256x128xf32>
    %cst_91 = arith.constant 0.000000e+00 : f32
    %97 = vector.broadcast %cst_91 : f32 to vector<256x128xf32>
    %98 = arith.maximumf %96, %97 : vector<256x128xf32>
    %99 = vector.shape_cast %98 : vector<256x128xf32> to vector<1x16x16x128xf32>
    %c0_92 = arith.constant 0 : index
    %c0_93 = arith.constant 0 : index
    %c0_94 = arith.constant 0 : index
    %c0_95 = arith.constant 0 : index
    %100 = vector.load %arg5[%c0_92, %c0_93, %c0_94, %c0_95] : memref<1x16x16x128xf32, #tpu.memory_space<vmem>>, vector<1x16x16x128xf32>
    tpu.vector_store %arg5[%c0_92, %c0_93, %c0_94, %c0_95], %99 {strides = array<i32>} : memref<1x16x16x128xf32, #tpu.memory_space<vmem>>, vector<1x16x16x128xf32>,
    return
  }
  func.func @transform_0(%arg0: i32, %arg1: i32) -> (i32, i32, i32, i32) {
    %c0_i32 = arith.constant 0 : i32
    %c0_i32_0 = arith.constant 0 : i32
    %c0_i32_1 = arith.constant 0 : i32
    %c0_i32_2 = arith.constant 0 : i32
    return %arg0, %c0_i32, %c0_i32_0, %c0_i32_1 : i32, i32, i32, i32
  }
  func.func @transform_1(%arg0: i32, %arg1: i32) -> (i32, i32) {
    %c0_i32 = arith.constant 0 : i32
    %c0_i32_0 = arith.constant 0 : i32
    %c0_i32_1 = arith.constant 0 : i32
    return %c0_i32, %c0_i32_0 : i32, i32
  }
  func.func @transform_2(%arg0: i32, %arg1: i32) -> (i32, i32) {
    %c0_i32 = arith.constant 0 : i32
    %c0_i32_0 = arith.constant 0 : i32
    %c0_i32_1 = arith.constant 0 : i32
    return %c0_i32, %c0_i32_0 : i32, i32
  }
  func.func @transform_3(%arg0: i32, %arg1: i32) -> (i32, i32, i32, i32) {
    %c0_i32 = arith.constant 0 : i32
    %c0_i32_0 = arith.constant 0 : i32
    %c0_i32_1 = arith.constant 0 : i32
    return %arg0, %arg1, %c0_i32, %c0_i32_0 : i32, i32, i32, i32
  }
}

</mosaic_0001>

<llo_original>
// kernel: basic_conv2d.1
$region0: #{basic_conv2d.1}
  #allocation0 [shape = 'u32[]', space=smem, size = 0x4, offset = 0x4, fixed_abs, tag = 'smem constant byte address 0x4 - core index']
  #allocation1 [shape = 'u32[72,128]{1,0:T(1,128)}', space=vmem, size = 0x9000, scoped, tag = 'internal scratch']
  #allocation2 [shape = 'f32[256,128]{1,0:T(8,128)}', space=vmem, size = 0x20000, scoped, tag = 'scratch operand']
  %s0 = inlined_call_operand.vmem [shape: f32[2,18,18,4], index: 0, kind: input, shape index: {}]
  %s1 = inlined_call_operand.vmem [shape: f32[36,128], index: 1, kind: input, shape index: {}]
  %s2 = inlined_call_operand.vmem [shape: f32[1,128], index: 2, kind: input, shape index: {}]
  %s3 = inlined_call_operand.vmem [shape: f32[2,16,16,128], index: 3, kind: output, shape index: {}]
  %s4 = sld [smem:[#allocation0]]
  $region45: #{basic_conv2d.1} parent=0
    _
  %s6 = ssub.s32 1, %s4
  %s7 = scalar_select 0, %s6, %s4
  loop: start=0, step=1, limit=4
  $region2: #{basic_conv2d.1} parent=0 // loop_pre_header
    _
  $region3: #{basic_conv2d.1} parent=0 // loop_header
    %s9 = sphi 0, %s13
    %p10 = scmp.ge.s32.totalorder %s9, 4
    %s16 = sphi 0, %s28
    %s17 = sphi 0, %s24
    %s18 = sphi 0, %s16
    %s19 = sphi 0, %s17
    %s20 = sphi 0, %s18
    %s21 = sphi 0, %s19
    %s31 = sphi 0, %s33
    %s34 = sphi 0, %s31
    %s35 = sphi 0, %s34
    %s51 = sphi 0, %s35
    %s55 = sphi 0, %s55
    %s57 = sphi 0, %s55
    %s58 = sphi 0, %s57
    %s72 = sphi 0, %s58
    %s76 = sphi 0, %s76
    %s78 = sphi 0, %s76
    %s79 = sphi 0, %s78
    %s93 = sphi 0, %s79
    %s101 = sphi 0, %s103
    %s104 = sphi 0, %s101
    %s105 = sphi 0, %s104
    %s121 = sphi 0, %s105
  $region4: #{basic_conv2d.1} parent=0 // loop_header_branch
    %12 = sbr.rel (%p10) target = $region8
  $region5: #{basic_conv2d.1} parent=0 // loop_body
    %s14 = ssub.s32 %s9, 1
    %s15 = ssub.s32 %s9, 2
    %s22 = sadd.s32 1, %s17
    %p23 = scmp.ge.s32.totalorder %s22, 1
    %s24 = scalar_select %p23, 0, %s22
    %s25 = sadd.s32 1, %s16
    %s26 = scalar_select %p23, %s25, %s16
    %p27 = scmp.ge.s32.totalorder %s26, 2
    %s28 = scalar_select %p27, 0, %s26
    %s29 = ssub.s32 %s16, %s28
    %p30 = scmp.eq.s32.totalorder %s29, 0
    %s32 = sadd.s32 %s31, 1
    %s33 = scalar_select %p30, %s31, %s32
    %p36 = pneg %p30
    %p37 = scmp.eq.s32.totalorder %s9, 1
    %p38 = por %p36, %p37
    %p39 = scmp.ne.s32.totalorder %s31, %s34
    %p40 = scmp.eq.s32.totalorder %s9, 0
    %p41 = por %p39, %p40
    %p42 = scmp.ne.s32.totalorder %s31, %s34
    %p43 = scmp.eq.s32.totalorder %s14, 1
    %p44 = por %p42, %p43
    %p45 = scmp.ne.s32.totalorder %s34, %s35
    %p46 = scmp.eq.s32.totalorder %s14, 0
    %p47 = por %p45, %p46
    %p48 = scmp.ne.s32.totalorder %s34, %s35
    %p49 = scmp.eq.s32.totalorder %s15, 1
    %p50 = por %p48, %p49
    %p52 = scmp.ne.s32.totalorder %s35, %s51
    %p53 = scmp.eq.s32.totalorder %s15, 0
    %p54 = por %p52, %p53
    %s56 = sadd.s32 %s55, 1
    %p59 = scmp.eq.s32.totalorder %s9, 1
    %p60 = scmp.ne.s32.totalorder %s55, %s57
    %p61 = scmp.eq.s32.totalorder %s9, 0
    %p62 = por %p60, %p61
    %p63 = scmp.ne.s32.totalorder %s55, %s57
    %p64 = scmp.eq.s32.totalorder %s14, 1
    %p65 = por %p63, %p64
    %p66 = scmp.ne.s32.totalorder %s57, %s58
    %p67 = scmp.eq.s32.totalorder %s14, 0
    %p68 = por %p66, %p67
    %p69 = scmp.ne.s32.totalorder %s57, %s58
    %p70 = scmp.eq.s32.totalorder %s15, 1
    %p71 = por %p69, %p70
    %p73 = scmp.ne.s32.totalorder %s58, %s72
    %p74 = scmp.eq.s32.totalorder %s15, 0
    %p75 = por %p73, %p74
    %s77 = sadd.s32 %s76, 1
    %p80 = scmp.eq.s32.totalorder %s9, 1
    %p81 = scmp.ne.s32.totalorder %s76, %s78
    %p82 = scmp.eq.s32.totalorder %s9, 0
    %p83 = por %p81, %p82
    %p84 = scmp.ne.s32.totalorder %s76, %s78
    %p85 = scmp.eq.s32.totalorder %s14, 1
    %p86 = por %p84, %p85
    %p87 = scmp.ne.s32.totalorder %s78, %s79
    %p88 = scmp.eq.s32.totalorder %s14, 0
    %p89 = por %p87, %p88
    %p90 = scmp.ne.s32.totalorder %s78, %s79
    %p91 = scmp.eq.s32.totalorder %s15, 1
    %p92 = por %p90, %p91
    %p94 = scmp.ne.s32.totalorder %s79, %s93
    %p95 = scmp.eq.s32.totalorder %s15, 0
    %p96 = por %p94, %p95
    %s97 = ssub.s32 %s16, %s28
    %s98 = ssub.s32 %s17, %s24
    %s99 = sor.u32 %s97, %s98
    %p100 = scmp.eq.s32.totalorder %s99, 0
    %s102 = sadd.s32 %s101, 1
    %s103 = scalar_select %p100, %s101, %s102
    %p106 = pneg %p100
    %p107 = scmp.eq.s32.totalorder %s9, 1
    %p108 = por %p106, %p107
    %p109 = scmp.ne.s32.totalorder %s101, %s104
    %p110 = scmp.eq.s32.totalorder %s9, 0
    %p111 = por %p109, %p110
    %p112 = scmp.ne.s32.totalorder %s101, %s104
    %p113 = scmp.eq.s32.totalorder %s14, 1
    %p114 = por %p112, %p113
    %p115 = scmp.ne.s32.totalorder %s104, %s105
    %p116 = scmp.eq.s32.totalorder %s14, 0
    %p117 = por %p115, %p116
    %p118 = scmp.ne.s32.totalorder %s104, %s105
    %p119 = scmp.eq.s32.totalorder %s15, 1
    %p120 = por %p118, %p119
    %p122 = scmp.ne.s32.totalorder %s105, %s121
    %p123 = scmp.eq.s32.totalorder %s15, 0
    %p124 = por %p122, %p123
    %p125 = scmp.le.s32.totalorder 1, %s9
    %p126 = scmp.lt.s32.totalorder %s9, 3
    %p127 = pnand %p125, %p126
    %p128 = pneg %p127
    // Predicated region
    $region9: #{basic_conv2d.1} parent=5 // pred_check
      _
    $region10: #{basic_conv2d.1} parent=5 // pred_check_branch
      %130 = sbr.rel (%p127) target = $region12
    $region11: #{basic_conv2d.1} parent=5 // pred_region
      %s131 = ssub.s32 %s9, 1
      // Predicated region
      $region13: #{basic_conv2d.1} parent=11 // pred_check
        %p132 = pneg %p68
      $region14: #{basic_conv2d.1} parent=11 // pred_check_branch
        %134 = sbr.rel (%p132) target = $region16
      $region15: #{basic_conv2d.1} parent=11 // pred_region
        _
      $region16: #{basic_conv2d.1} parent=11 // pred_fallthru
        _
      // Predicated region
      $region17: #{basic_conv2d.1} parent=11 // pred_check
        %p135 = pneg %p89
      $region18: #{basic_conv2d.1} parent=11 // pred_check_branch
        %137 = sbr.rel (%p135) target = $region20
      $region19: #{basic_conv2d.1} parent=11 // pred_region
        _
      $region20: #{basic_conv2d.1} parent=11 // pred_fallthru
        _
    $region12: #{basic_conv2d.1} parent=5 // pred_fallthru
      _
    %p138 = scmp.lt.s32.totalorder %s9, 2
    // Predicated region
    $region21: #{basic_conv2d.1} parent=5 // pred_check
      %p139 = pneg %p138
    $region22: #{basic_conv2d.1} parent=5 // pred_check_branch
      %141 = sbr.rel (%p139) target = $region24
    $region23: #{basic_conv2d.1} parent=5 // pred_region
      // Predicated region
      $region25: #{basic_conv2d.1} parent=23 // pred_check
        %p142 = pneg %p41
      $region26: #{basic_conv2d.1} parent=23 // pred_check_branch
        %144 = sbr.rel (%p142) target = $region28
      $region27: #{basic_conv2d.1} parent=23 // pred_region
        %p145 = scmp.lt.s32.totalorder %s16, 1
        %s146 = scalar_select %p145, %s16, 1
        %s147 = smul.addr %s146, 54
        %s148 = smul.addr %s147, 8
        %s149 = scalar_lea.vmem %s0, %s148
      $region28: #{basic_conv2d.1} parent=23 // pred_fallthru
        _
    $region24: #{basic_conv2d.1} parent=5 // pred_fallthru
      _
    %p150 = scmp.le.s32.totalorder 1, %s9
    %p151 = scmp.lt.s32.totalorder %s9, 3
    %p152 = pnand %p150, %p151
    %p153 = pneg %p152
    // Predicated region
    $region29: #{basic_conv2d.1} parent=5 // pred_check
      _
    $region30: #{basic_conv2d.1} parent=5 // pred_check_branch
      %155 = sbr.rel (%p152) target = $region32
    $region31: #{basic_conv2d.1} parent=5 // pred_region
      %s156 = ssub.s32 %s9, 1
      %p157 = scmp.lt.s32.totalorder %s18, 1
      %s158 = scalar_select %p157, %s18, 1
      %s159 = smul.addr %s158, 54
      %s160 = smul.addr %s159, 8
      %s161 = scalar_lea.vmem %s0, %s160
      %p162 = pneg %p47
      %p163 = pneg %p44
      %p164 = pneg %p68
      %p165 = pneg %p65
      %p166 = pneg %p89
      %p167 = pneg %p86
      %p168 = pneg %p117
      %p169 = pneg %p114
      %s170 = smul.u32 16, %s19
      %p171 = scmp.lt.s32.totalorder %s18, 1
      %s172 = scalar_select %p171, %s18, 1
      %p173 = scmp.lt.s32.totalorder %s170, 15
      %s174 = scalar_select %p173, %s170, 15
      %s175 = smul.addr %s174, 2
      %s176 = smul.addr %s172, 32
      %s177 = sadd.s32 %s175, %s176
      %s178 = smul.addr %s177, 8
      %s179 = scalar_lea.vmem %s3, %s178
      %p180 = scmp.lt.s32.totalorder %s18, 1
      %s181 = scalar_select %p180, %s18, 1
      %s182 = smul.addr %s181, 54
      %s183 = smul.addr %s182, 8
      %s184 = scalar_lea.vmem %s0, %s183
      %s185 = smul.u32 16, %s19
      %p186 = scmp.lt.s32.totalorder %s18, 1
      %s187 = scalar_select %p186, %s18, 1
      %p188 = scmp.lt.s32.totalorder %s185, 15
      %s189 = scalar_select %p188, %s185, 15
      %s190 = smul.addr %s189, 2
      %s191 = smul.addr %s187, 32
      %s192 = sadd.s32 %s190, %s191
      %s193 = smul.addr %s192, 8
      %s194 = scalar_lea.vmem %s3, %s193
      %s195 = smul.u32 16, %s19
      %s196 = smul.u32 %s19, 16
      %197 = vst [vmem:[#allocation2] sm:$0xff] 0.0
      %198 = vst [vmem:[#allocation2 + $0x8] sm:$0xff] 0.0
      %199 = vst [vmem:[#allocation2 + $0x10] sm:$0xff] 0.0
      %200 = vst [vmem:[#allocation2 + $0x18] sm:$0xff] 0.0
      %201 = vst [vmem:[#allocation2 + $0x20] sm:$0xff] 0.0
      %202 = vst [vmem:[#allocation2 + $0x28] sm:$0xff] 0.0
      %203 = vst [vmem:[#allocation2 + $0x30] sm:$0xff] 0.0
      %204 = vst [vmem:[#allocation2 + $0x38] sm:$0xff] 0.0
      %205 = vst [vmem:[#allocation2 + $0x40] sm:$0xff] 0.0
      %206 = vst [vmem:[#allocation2 + $0x48] sm:$0xff] 0.0
      %207 = vst [vmem:[#allocation2 + $0x50] sm:$0xff] 0.0
      %208 = vst [vmem:[#allocation2 + $0x58] sm:$0xff] 0.0
      %209 = vst [vmem:[#allocation2 + $0x60] sm:$0xff] 0.0
      %210 = vst [vmem:[#allocation2 + $0x68] sm:$0xff] 0.0
      %211 = vst [vmem:[#allocation2 + $0x70] sm:$0xff] 0.0
      %212 = vst [vmem:[#allocation2 + $0x78] sm:$0xff] 0.0
      %213 = vst [vmem:[#allocation2 + $0x80] sm:$0xff] 0.0
      %214 = vst [vmem:[#allocation2 + $0x88] sm:$0xff] 0.0
      %215 = vst [vmem:[#allocation2 + $0x90] sm:$0xff] 0.0
      %216 = vst [vmem:[#allocation2 + $0x98] sm:$0xff] 0.0
      %217 = vst [vmem:[#allocation2 + $0xa0] sm:$0xff] 0.0
      %218 = vst [vmem:[#allocation2 + $0xa8] sm:$0xff] 0.0
      %219 = vst [vmem:[#allocation2 + $0xb0] sm:$0xff] 0.0
      %220 = vst [vmem:[#allocation2 + $0xb8] sm:$0xff] 0.0
      %221 = vst [vmem:[#allocation2 + $0xc0] sm:$0xff] 0.0
      %222 = vst [vmem:[#allocation2 + $0xc8] sm:$0xff] 0.0
      %223 = vst [vmem:[#allocation2 + $0xd0] sm:$0xff] 0.0
      %224 = vst [vmem:[#allocation2 + $0xd8] sm:$0xff] 0.0
      %225 = vst [vmem:[#allocation2 + $0xe0] sm:$0xff] 0.0
      %226 = vst [vmem:[#allocation2 + $0xe8] sm:$0xff] 0.0
      %227 = vst [vmem:[#allocation2 + $0xf0] sm:$0xff] 0.0
      %228 = vst [vmem:[#allocation2 + $0xf8] sm:$0xff] 0.0
      %s229 = smul.u32 %s196, 24
      %s230 = scalar_lea.vmem %s184, %s229
      %v231 = vld [vmem:[%s230] sm:$0xff]
      %v232 = vld [vmem:[%s230 + $0x8] sm:$0xff]
      %v233 = vld [vmem:[%s230 + $0x18] sm:$0xff]
      %v234 = vld [vmem:[%s230 + $0x20] sm:$0xff]
      %v235 = vld [vmem:[%s230 + $0x30] sm:$0xff]
      %v236 = vld [vmem:[%s230 + $0x38] sm:$0xff]
      %v237 = vld [vmem:[%s230 + $0x48] sm:$0xff]
      %v238 = vld [vmem:[%s230 + $0x50] sm:$0xff]
      %v239 = vld [vmem:[%s230 + $0x60] sm:$0xff]
      %v240 = vld [vmem:[%s230 + $0x68] sm:$0xff]
      %v241 = vld [vmem:[%s230 + $0x78] sm:$0xff]
      %v242 = vld [vmem:[%s230 + $0x80] sm:$0xff]
      %v243 = vld [vmem:[%s230 + $0x90] sm:$0xff]
      %v244 = vld [vmem:[%s230 + $0x98] sm:$0xff]
      %v245 = vld [vmem:[%s230 + $0xa8] sm:$0xff]
      %v246 = vld [vmem:[%s230 + $0xb0] sm:$0xff]
      %v247 = vld [vmem:[%s230 + $0xc0] sm:$0xff]
      %v248 = vld [vmem:[%s230 + $0xc8] sm:$0xff]
      %v249 = vld [vmem:[%s230 + $0xd8] sm:$0xff]
      %v250 = vld [vmem:[%s230 + $0xe0] sm:$0xff]
      %v251 = vld [vmem:[%s230 + $0xf0] sm:$0xff]
      %v252 = vld [vmem:[%s230 + $0xf8] sm:$0xff]
      %v253 = vld [vmem:[%s230 + $0x108] sm:$0xff]
      %v254 = vld [vmem:[%s230 + $0x110] sm:$0xff]
      %v255 = vld [vmem:[%s230 + $0x120] sm:$0xff]
      %v256 = vld [vmem:[%s230 + $0x128] sm:$0xff]
      %v257 = vld [vmem:[%s230 + $0x138] sm:$0xff]
      %v258 = vld [vmem:[%s230 + $0x140] sm:$0xff]
      %v259 = vld [vmem:[%s230 + $0x150] sm:$0xff]
      %v260 = vld [vmem:[%s230 + $0x158] sm:$0xff]
      %v261 = vld [vmem:[%s230 + $0x168] sm:$0xff]
      %v262 = vld [vmem:[%s230 + $0x170] sm:$0xff]
      %v263 = vld [vmem:[%s1] sm:$0xf]
      %v264 = vld [vmem:[#allocation2] sm:$0xff]
      %v265 = vld [vmem:[#allocation2 + $0x8] sm:$0xff]
      %v266 = vld [vmem:[#allocation2 + $0x10] sm:$0xff]
      %v267 = vld [vmem:[#allocation2 + $0x18] sm:$0xff]
      %v268 = vld [vmem:[#allocation2 + $0x20] sm:$0xff]
      %v269 = vld [vmem:[#allocation2 + $0x28] sm:$0xff]
      %v270 = vld [vmem:[#allocation2 + $0x30] sm:$0xff]
      %v271 = vld [vmem:[#allocation2 + $0x38] sm:$0xff]
      %v272 = vld [vmem:[#allocation2 + $0x40] sm:$0xff]
      %v273 = vld [vmem:[#allocation2 + $0x48] sm:$0xff]
      %v274 = vld [vmem:[#allocation2 + $0x50] sm:$0xff]
      %v275 = vld [vmem:[#allocation2 + $0x58] sm:$0xff]
      %v276 = vld [vmem:[#allocation2 + $0x60] sm:$0xff]
      %v277 = vld [vmem:[#allocation2 + $0x68] sm:$0xff]
      %v278 = vld [vmem:[#allocation2 + $0x70] sm:$0xff]
      %v279 = vld [vmem:[#allocation2 + $0x78] sm:$0xff]
      %v280 = vld [vmem:[#allocation2 + $0x80] sm:$0xff]
      %v281 = vld [vmem:[#allocation2 + $0x88] sm:$0xff]
      %v282 = vld [vmem:[#allocation2 + $0x90] sm:$0xff]
      %v283 = vld [vmem:[#allocation2 + $0x98] sm:$0xff]
      %v284 = vld [vmem:[#allocation2 + $0xa0] sm:$0xff]
      %v285 = vld [vmem:[#allocation2 + $0xa8] sm:$0xff]
      %v286 = vld [vmem:[#allocation2 + $0xb0] sm:$0xff]
      %v287 = vld [vmem:[#allocation2 + $0xb8] sm:$0xff]
      %v288 = vld [vmem:[#allocation2 + $0xc0] sm:$0xff]
      %v289 = vld [vmem:[#allocation2 + $0xc8] sm:$0xff]
      %v290 = vld [vmem:[#allocation2 + $0xd0] sm:$0xff]
      %v291 = vld [vmem:[#allocation2 + $0xd8] sm:$0xff]
      %v292 = vld [vmem:[#allocation2 + $0xe0] sm:$0xff]
      %v293 = vld [vmem:[#allocation2 + $0xe8] sm:$0xff]
      %v294 = vld [vmem:[#allocation2 + $0xf0] sm:$0xff]
      %v295 = vld [vmem:[#allocation2 + $0xf8] sm:$0xff]
      %vm296 = vcmask 31744
      %v298 = vsel %vm296, %v231, 0
      %v301 = vsel %vm296, %v232, 0
      %v304 = vsel %vm296, %v233, 0
      %v307 = vsel %vm296, %v234, 0
      %v310 = vsel %vm296, %v235, 0
      %v313 = vsel %vm296, %v236, 0
      %v316 = vsel %vm296, %v237, 0
      %v319 = vsel %vm296, %v238, 0
      %v322 = vsel %vm296, %v239, 0
      %v325 = vsel %vm296, %v240, 0
      %v328 = vsel %vm296, %v241, 0
      %v331 = vsel %vm296, %v242, 0
      %v334 = vsel %vm296, %v243, 0
      %v337 = vsel %vm296, %v244, 0
      %v340 = vsel %vm296, %v245, 0
      %v343 = vsel %vm296, %v246, 0
      %v346 = vsel %vm296, %v247, 0
      %v349 = vsel %vm296, %v248, 0
      %v352 = vsel %vm296, %v249, 0
      %v355 = vsel %vm296, %v250, 0
      %v358 = vsel %vm296, %v251, 0
      %v361 = vsel %vm296, %v252, 0
      %v364 = vsel %vm296, %v253, 0
      %v367 = vsel %vm296, %v254, 0
      %v370 = vsel %vm296, %v255, 0
      %v373 = vsel %vm296, %v256, 0
      %v376 = vsel %vm296, %v257, 0
      %v379 = vsel %vm296, %v258, 0
      %v382 = vsel %vm296, %v259, 0
      %v385 = vsel %vm296, %v260, 0
      %v388 = vsel %vm296, %v261, 0
      %v391 = vsel %vm296, %v262, 0
      %vm393 = vcmask 1043456
      %v395 = vsel %vm393, %v263, 0
      %397 = vmatpush.msra.mxu0 0.0
      %398 = vmatpush.msra.mxu0 0.0
      %399 = vmatpush.msra.mxu0 0.0
      %400 = vmatpush.msra.mxu0 0.0
      %401 = vmatpush.msra.mxu0 0.0
      %402 = vmatpush.msra.mxu0 0.0
      %403 = vmatpush.msra.mxu0 0.0
      %404 = vmatpush.msra.mxu0 0.0
      %405 = vmatpush.msra.mxu0 0.0
      %406 = vmatpush.msra.mxu0 0.0
      %407 = vmatpush.msra.mxu0 0.0
      %408 = vmatpush.msra.mxu0 0.0
      %409 = vmatpush.msra.mxu0 0.0
      %410 = vmatpush.msra.mxu0 0.0
      %411 = vmatpush.msra.mxu0 0.0
      %412 = vmatpush.msra.mxu0 %v395
      %413 = vmatmul.f32.gmra.mxu0 %v298
      %v414 = vpop.f32.mrf.mxu0
      %v415 = vadd.f32 0.0, %v414
      %416 = vmatmul.f32.gmra.mxu0 %v301
      %v417 = vpop.f32.mrf.mxu0
      %v418 = vadd.f32 0.0, %v417
      %419 = vmatmul.f32.gmra.mxu0 %v304
      %v420 = vpop.f32.mrf.mxu0
      %v421 = vadd.f32 0.0, %v420
      %422 = vmatmul.f32.gmra.mxu0 %v307
      %v423 = vpop.f32.mrf.mxu0
      %v424 = vadd.f32 0.0, %v423
      %425 = vmatmul.f32.gmra.mxu0 %v310
      %v426 = vpop.f32.mrf.mxu0
      %v427 = vadd.f32 0.0, %v426
      %428 = vmatmul.f32.gmra.mxu0 %v313
      %v429 = vpop.f32.mrf.mxu0
      %v430 = vadd.f32 0.0, %v429
      %431 = vmatmul.f32.gmra.mxu0 %v316
      %v432 = vpop.f32.mrf.mxu0
      %v433 = vadd.f32 0.0, %v432
      %434 = vmatmul.f32.gmra.mxu0 %v319
      %v435 = vpop.f32.mrf.mxu0
      %v436 = vadd.f32 0.0, %v435
      %437 = vmatmul.f32.gmra.mxu0 %v322
      %v438 = vpop.f32.mrf.mxu0
      %v439 = vadd.f32 0.0, %v438
      %440 = vmatmul.f32.gmra.mxu0 %v325
      %v441 = vpop.f32.mrf.mxu0
      %v442 = vadd.f32 0.0, %v441
      %443 = vmatmul.f32.gmra.mxu0 %v328
      %v444 = vpop.f32.mrf.mxu0
      %v445 = vadd.f32 0.0, %v444
      %446 = vmatmul.f32.gmra.mxu0 %v331
      %v447 = vpop.f32.mrf.mxu0
      %v448 = vadd.f32 0.0, %v447
      %449 = vmatmul.f32.gmra.mxu0 %v334
      %v450 = vpop.f32.mrf.mxu0
      %v451 = vadd.f32 0.0, %v450
      %452 = vmatmul.f32.gmra.mxu0 %v337
      %v453 = vpop.f32.mrf.mxu0
      %v454 = vadd.f32 0.0, %v453
      %455 = vmatmul.f32.gmra.mxu0 %v340
      %v456 = vpop.f32.mrf.mxu0
      %v457 = vadd.f32 0.0, %v456
      %458 = vmatmul.f32.gmra.mxu0 %v343
      %v459 = vpop.f32.mrf.mxu0
      %v460 = vadd.f32 0.0, %v459
      %461 = vmatmul.f32.gmra.mxu0 %v346
      %v462 = vpop.f32.mrf.mxu0
      %v463 = vadd.f32 0.0, %v462
      %464 = vmatmul.f32.gmra.mxu0 %v349
      %v465 = vpop.f32.mrf.mxu0
      %v466 = vadd.f32 0.0, %v465
      %467 = vmatmul.f32.gmra.mxu0 %v352
      %v468 = vpop.f32.mrf.mxu0
      %v469 = vadd.f32 0.0, %v468
      %470 = vmatmul.f32.gmra.mxu0 %v355
      %v471 = vpop.f32.mrf.mxu0
      %v472 = vadd.f32 0.0, %v471
      %473 = vmatmul.f32.gmra.mxu0 %v358
      %v474 = vpop.f32.mrf.mxu0
      %v475 = vadd.f32 0.0, %v474
      %476 = vmatmul.f32.gmra.mxu0 %v361
      %v477 = vpop.f32.mrf.mxu0
      %v478 = vadd.f32 0.0, %v477
      %479 = vmatmul.f32.gmra.mxu0 %v364
      %v480 = vpop.f32.mrf.mxu0
      %v481 = vadd.f32 0.0, %v480
      %482 = vmatmul.f32.gmra.mxu0 %v367
      %v483 = vpop.f32.mrf.mxu0
      %v484 = vadd.f32 0.0, %v483
      %485 = vmatmul.f32.gmra.mxu0 %v370
      %v486 = vpop.f32.mrf.mxu0
      %v487 = vadd.f32 0.0, %v486
      %488 = vmatmul.f32.gmra.mxu0 %v373
      %v489 = vpop.f32.mrf.mxu0
      %v490 = vadd.f32 0.0, %v489
      %491 = vmatmul.f32.gmra.mxu0 %v376
      %v492 = vpop.f32.mrf.mxu0
      %v493 = vadd.f32 0.0, %v492
      %494 = vmatmul.f32.gmra.mxu0 %v379
      %v495 = vpop.f32.mrf.mxu0
      %v496 = vadd.f32 0.0, %v495
      %497 = vmatmul.f32.gmra.mxu0 %v382
      %v498 = vpop.f32.mrf.mxu0
      %v499 = vadd.f32 0.0, %v498
      %500 = vmatmul.f32.gmra.mxu0 %v385
      %v501 = vpop.f32.mrf.mxu0
      %v502 = vadd.f32 0.0, %v501
      %503 = vmatmul.f32.gmra.mxu0 %v388
      %v504 = vpop.f32.mrf.mxu0
      %v505 = vadd.f32 0.0, %v504
      %506 = vmatmul.f32.gmra.mxu0 %v391
      %v507 = vpop.f32.mrf.mxu0
      %v508 = vadd.f32 0.0, %v507
      %509 = vdwg.mxu0
      %v510 = vadd.f32 %v264, %v415
      %v511 = vadd.f32 %v265, %v418
      %v512 = vadd.f32 %v266, %v421
      %v513 = vadd.f32 %v267, %v424
      %v514 = vadd.f32 %v268, %v427
      %v515 = vadd.f32 %v269, %v430
      %v516 = vadd.f32 %v270, %v433
      %v517 = vadd.f32 %v271, %v436
      %v518 = vadd.f32 %v272, %v439
      %v519 = vadd.f32 %v273, %v442
      %v520 = vadd.f32 %v274, %v445
      %v521 = vadd.f32 %v275, %v448
      %v522 = vadd.f32 %v276, %v451
      %v523 = vadd.f32 %v277, %v454
      %v524 = vadd.f32 %v278, %v457
      %v525 = vadd.f32 %v279, %v460
      %v526 = vadd.f32 %v280, %v463
      %v527 = vadd.f32 %v281, %v466
      %v528 = vadd.f32 %v282, %v469
      %v529 = vadd.f32 %v283, %v472
      %v530 = vadd.f32 %v284, %v475
      %v531 = vadd.f32 %v285, %v478
      %v532 = vadd.f32 %v286, %v481
      %v533 = vadd.f32 %v287, %v484
      %v534 = vadd.f32 %v288, %v487
      %v535 = vadd.f32 %v289, %v490
      %v536 = vadd.f32 %v290, %v493
      %v537 = vadd.f32 %v291, %v496
      %v538 = vadd.f32 %v292, %v499
      %v539 = vadd.f32 %v293, %v502
      %v540 = vadd.f32 %v294, %v505
      %v541 = vadd.f32 %v295, %v508
      %542 = vst [vmem:[#allocation2] sm:$0xff] %v510
      %543 = vst [vmem:[#allocation2 + $0x8] sm:$0xff] %v511
      %544 = vst [vmem:[#allocation2 + $0x10] sm:$0xff] %v512
      %545 = vst [vmem:[#allocation2 + $0x18] sm:$0xff] %v513
      %546 = vst [vmem:[#allocation2 + $0x20] sm:$0xff] %v514
      %547 = vst [vmem:[#allocation2 + $0x28] sm:$0xff] %v515
      %548 = vst [vmem:[#allocation2 + $0x30] sm:$0xff] %v516
      %549 = vst [vmem:[#allocation2 + $0x38] sm:$0xff] %v517
      %550 = vst [vmem:[#allocation2 + $0x40] sm:$0xff] %v518
      %551 = vst [vmem:[#allocation2 + $0x48] sm:$0xff] %v519
      %552 = vst [vmem:[#allocation2 + $0x50] sm:$0xff] %v520
      %553 = vst [vmem:[#allocation2 + $0x58] sm:$0xff] %v521
      %554 = vst [vmem:[#allocation2 + $0x60] sm:$0xff] %v522
      %555 = vst [vmem:[#allocation2 + $0x68] sm:$0xff] %v523
      %556 = vst [vmem:[#allocation2 + $0x70] sm:$0xff] %v524
      %557 = vst [vmem:[#allocation2 + $0x78] sm:$0xff] %v525
      %558 = vst [vmem:[#allocation2 + $0x80] sm:$0xff] %v526
      %559 = vst [vmem:[#allocation2 + $0x88] sm:$0xff] %v527
      %560 = vst [vmem:[#allocation2 + $0x90] sm:$0xff] %v528
      %561 = vst [vmem:[#allocation2 + $0x98] sm:$0xff] %v529
      %562 = vst [vmem:[#allocation2 + $0xa0] sm:$0xff] %v530
      %563 = vst [vmem:[#allocation2 + $0xa8] sm:$0xff] %v531
      %564 = vst [vmem:[#allocation2 + $0xb0] sm:$0xff] %v532
      %565 = vst [vmem:[#allocation2 + $0xb8] sm:$0xff] %v533
      %566 = vst [vmem:[#allocation2 + $0xc0] sm:$0xff] %v534
      %567 = vst [vmem:[#allocation2 + $0xc8] sm:$0xff] %v535
      %568 = vst [vmem:[#allocation2 + $0xd0] sm:$0xff] %v536
      %569 = vst [vmem:[#allocation2 + $0xd8] sm:$0xff] %v537
      %570 = vst [vmem:[#allocation2 + $0xe0] sm:$0xff] %v538
      %571 = vst [vmem:[#allocation2 + $0xe8] sm:$0xff] %v539
      %572 = vst [vmem:[#allocation2 + $0xf0] sm:$0xff] %v540
      %573 = vst [vmem:[#allocation2 + $0xf8] sm:$0xff] %v541
      %v574 = vld [vmem:[%s230 + $0x1] sm:$0xff]
      %v575 = vld [vmem:[%s230 + $0x9] sm:$0xff]
      %v576 = vld [vmem:[%s230 + $0x19] sm:$0xff]
      %v577 = vld [vmem:[%s230 + $0x21] sm:$0xff]
      %v578 = vld [vmem:[%s230 + $0x31] sm:$0xff]
      %v579 = vld [vmem:[%s230 + $0x39] sm:$0xff]
      %v580 = vld [vmem:[%s230 + $0x49] sm:$0xff]
      %v581 = vld [vmem:[%s230 + $0x51] sm:$0xff]
      %v582 = vld [vmem:[%s230 + $0x61] sm:$0xff]
      %v583 = vld [vmem:[%s230 + $0x69] sm:$0xff]
      %v584 = vld [vmem:[%s230 + $0x79] sm:$0xff]
      %v585 = vld [vmem:[%s230 + $0x81] sm:$0xff]
      %v586 = vld [vmem:[%s230 + $0x91] sm:$0xff]
      %v587 = vld [vmem:[%s230 + $0x99] sm:$0xff]
      %v588 = vld [vmem:[%s230 + $0xa9] sm:$0xff]
      %v589 = vld [vmem:[%s230 + $0xb1] sm:$0xff]
      %v590 = vld [vmem:[%s230 + $0xc1] sm:$0xff]
      %v591 = vld [vmem:[%s230 + $0xc9] sm:$0xff]
      %v592 = vld [vmem:[%s230 + $0xd9] sm:$0xff]
      %v593 = vld [vmem:[%s230 + $0xe1] sm:$0xff]
      %v594 = vld [vmem:[%s230 + $0xf1] sm:$0xff]
      %v595 = vld [vmem:[%s230 + $0xf9] sm:$0xff]
      %v596 = vld [vmem:[%s230 + $0x109] sm:$0xff]
      %v597 = vld [vmem:[%s230 + $0x111] sm:$0xff]
      %v598 = vld [vmem:[%s230 + $0x121] sm:$0xff]
      %v599 = vld [vmem:[%s230 + $0x129] sm:$0xff]
      %v600 = vld [vmem:[%s230 + $0x139] sm:$0xff]
      %v601 = vld [vmem:[%s230 + $0x141] sm:$0xff]
      %v602 = vld [vmem:[%s230 + $0x151] sm:$0xff]
      %v603 = vld [vmem:[%s230 + $0x159] sm:$0xff]
      %v604 = vld [vmem:[%s230 + $0x169] sm:$0xff]
      %v605 = vld [vmem:[%s230 + $0x171] sm:$0xff]
      %v606 = vld [vmem:[%s1 + $0x4] sm:$0xf]
      %v607 = vld [vmem:[#allocation2] sm:$0xff]
      %v608 = vld [vmem:[#allocation2 + $0x8] sm:$0xff]
      %v609 = vld [vmem:[#allocation2 + $0x10] sm:$0xff]
      %v610 = vld [vmem:[#allocation2 + $0x18] sm:$0xff]
      %v611 = vld [vmem:[#allocation2 + $0x20] sm:$0xff]
      %v612 = vld [vmem:[#allocation2 + $0x28] sm:$0xff]
      %v613 = vld [vmem:[#allocation2 + $0x30] sm:$0xff]
      %v614 = vld [vmem:[#allocation2 + $0x38] sm:$0xff]
      %v615 = vld [vmem:[#allocation2 + $0x40] sm:$0xff]
      %v616 = vld [vmem:[#allocation2 + $0x48] sm:$0xff]
      %v617 = vld [vmem:[#allocation2 + $0x50] sm:$0xff]
      %v618 = vld [vmem:[#allocation2 + $0x58] sm:$0xff]
      %v619 = vld [vmem:[#allocation2 + $0x60] sm:$0xff]
      %v620 = vld [vmem:[#allocation2 + $0x68] sm:$0xff]
      %v621 = vld [vmem:[#allocation2 + $0x70] sm:$0xff]
      %v622 = vld [vmem:[#allocation2 + $0x78] sm:$0xff]
      %v623 = vld [vmem:[#allocation2 + $0x80] sm:$0xff]
      %v624 = vld [vmem:[#allocation2 + $0x88] sm:$0xff]
      %v625 = vld [vmem:[#allocation2 + $0x90] sm:$0xff]
      %v626 = vld [vmem:[#allocation2 + $0x98] sm:$0xff]
      %v627 = vld [vmem:[#allocation2 + $0xa0] sm:$0xff]
      %v628 = vld [vmem:[#allocation2 + $0xa8] sm:$0xff]
      %v629 = vld [vmem:[#allocation2 + $0xb0] sm:$0xff]
      %v630 = vld [vmem:[#allocation2 + $0xb8] sm:$0xff]
      %v631 = vld [vmem:[#allocation2 + $0xc0] sm:$0xff]
      %v632 = vld [vmem:[#allocation2 + $0xc8] sm:$0xff]
      %v633 = vld [vmem:[#allocation2 + $0xd0] sm:$0xff]
      %v634 = vld [vmem:[#allocation2 + $0xd8] sm:$0xff]
      %v635 = vld [vmem:[#allocation2 + $0xe0] sm:$0xff]
      %v636 = vld [vmem:[#allocation2 + $0xe8] sm:$0xff]
      %v637 = vld [vmem:[#allocation2 + $0xf0] sm:$0xff]
      %v638 = vld [vmem:[#allocation2 + $0xf8] sm:$0xff]
      %v640 = vsel %vm296, %v574, 0
      %v643 = vsel %vm296, %v575, 0
      %v646 = vsel %vm296, %v576, 0
      %v649 = vsel %vm296, %v577, 0
      %v652 = vsel %vm296, %v578, 0
      %v655 = vsel %vm296, %v579, 0
      %v658 = vsel %vm296, %v580, 0
      %v661 = vsel %vm296, %v581, 0
      %v664 = vsel %vm296, %v582, 0
      %v667 = vsel %vm296, %v583, 0
      %v670 = vsel %vm296, %v584, 0
      %v673 = vsel %vm296, %v585, 0
      %v676 = vsel %vm296, %v586, 0
      %v679 = vsel %vm296, %v587, 0
      %v682 = vsel %vm296, %v588, 0
      %v685 = vsel %vm296, %v589, 0
      %v688 = vsel %vm296, %v590, 0
      %v691 = vsel %vm296, %v591, 0
      %v694 = vsel %vm296, %v592, 0
      %v697 = vsel %vm296, %v593, 0
      %v700 = vsel %vm296, %v594, 0
      %v703 = vsel %vm296, %v595, 0
      %v706 = vsel %vm296, %v596, 0
      %v709 = vsel %vm296, %v597, 0
      %v712 = vsel %vm296, %v598, 0
      %v715 = vsel %vm296, %v599, 0
      %v718 = vsel %vm296, %v600, 0
      %v721 = vsel %vm296, %v601, 0
      %v724 = vsel %vm296, %v602, 0
      %v727 = vsel %vm296, %v603, 0
      %v730 = vsel %vm296, %v604, 0
      %v733 = vsel %vm296, %v605, 0
      %v736 = vsel %vm393, %v606, 0
      %738 = vmatpush.msra.mxu0 0.0
      %739 = vmatpush.msra.mxu0 0.0
      %740 = vmatpush.msra.mxu0 0.0
      %741 = vmatpush.msra.mxu0 0.0
      %742 = vmatpush.msra.mxu0 0.0
      %743 = vmatpush.msra.mxu0 0.0
      %744 = vmatpush.msra.mxu0 0.0
      %745 = vmatpush.msra.mxu0 0.0
      %746 = vmatpush.msra.mxu0 0.0
      %747 = vmatpush.msra.mxu0 0.0
      %748 = vmatpush.msra.mxu0 0.0
      %749 = vmatpush.msra.mxu0 0.0
      %750 = vmatpush.msra.mxu0 0.0
      %751 = vmatpush.msra.mxu0 0.0
      %752 = vmatpush.msra.mxu0 0.0
      %753 = vmatpush.msra.mxu0 %v736
      %754 = vmatmul.f32.gmra.mxu0 %v640
      %v755 = vpop.f32.mrf.mxu0
      %v756 = vadd.f32 0.0, %v755
      %757 = vmatmul.f32.gmra.mxu0 %v643
      %v758 = vpop.f32.mrf.mxu0
      %v759 = vadd.f32 0.0, %v758
      %760 = vmatmul.f32.gmra.mxu0 %v646
      %v761 = vpop.f32.mrf.mxu0
      %v762 = vadd.f32 0.0, %v761
      %763 = vmatmul.f32.gmra.mxu0 %v649
      %v764 = vpop.f32.mrf.mxu0
      %v765 = vadd.f32 0.0, %v764
      %766 = vmatmul.f32.gmra.mxu0 %v652
      %v767 = vpop.f32.mrf.mxu0
      %v768 = vadd.f32 0.0, %v767
      %769 = vmatmul.f32.gmra.mxu0 %v655
      %v770 = vpop.f32.mrf.mxu0
      %v771 = vadd.f32 0.0, %v770
      %772 = vmatmul.f32.gmra.mxu0 %v658
      %v773 = vpop.f32.mrf.mxu0
      %v774 = vadd.f32 0.0, %v773
      %775 = vmatmul.f32.gmra.mxu0 %v661
      %v776 = vpop.f32.mrf.mxu0
      %v777 = vadd.f32 0.0, %v776
      %778 = vmatmul.f32.gmra.mxu0 %v664
      %v779 = vpop.f32.mrf.mxu0
      %v780 = vadd.f32 0.0, %v779
      %781 = vmatmul.f32.gmra.mxu0 %v667
      %v782 = vpop.f32.mrf.mxu0
      %v783 = vadd.f32 0.0, %v782
      %784 = vmatmul.f32.gmra.mxu0 %v670
      %v785 = vpop.f32.mrf.mxu0
      %v786 = vadd.f32 0.0, %v785
      %787 = vmatmul.f32.gmra.mxu0 %v673
      %v788 = vpop.f32.mrf.mxu0
      %v789 = vadd.f32 0.0, %v788
      %790 = vmatmul.f32.gmra.mxu0 %v676
      %v791 = vpop.f32.mrf.mxu0
      %v792 = vadd.f32 0.0, %v791
      %793 = vmatmul.f32.gmra.mxu0 %v679
      %v794 = vpop.f32.mrf.mxu0
      %v795 = vadd.f32 0.0, %v794
      %796 = vmatmul.f32.gmra.mxu0 %v682
      %v797 = vpop.f32.mrf.mxu0
      %v798 = vadd.f32 0.0, %v797
      %799 = vmatmul.f32.gmra.mxu0 %v685
      %v800 = vpop.f32.mrf.mxu0
      %v801 = vadd.f32 0.0, %v800
      %802 = vmatmul.f32.gmra.mxu0 %v688
      %v803 = vpop.f32.mrf.mxu0
      %v804 = vadd.f32 0.0, %v803
      %805 = vmatmul.f32.gmra.mxu0 %v691
      %v806 = vpop.f32.mrf.mxu0
      %v807 = vadd.f32 0.0, %v806
      %808 = vmatmul.f32.gmra.mxu0 %v694
      %v809 = vpop.f32.mrf.mxu0
      %v810 = vadd.f32 0.0, %v809
      %811 = vmatmul.f32.gmra.mxu0 %v697
      %v812 = vpop.f32.mrf.mxu0
      %v813 = vadd.f32 0.0, %v812
      %814 = vmatmul.f32.gmra.mxu0 %v700
      %v815 = vpop.f32.mrf.mxu0
      %v816 = vadd.f32 0.0, %v815
      %817 = vmatmul.f32.gmra.mxu0 %v703
      %v818 = vpop.f32.mrf.mxu0
      %v819 = vadd.f32 0.0, %v818
      %820 = vmatmul.f32.gmra.mxu0 %v706
      %v821 = vpop.f32.mrf.mxu0
      %v822 = vadd.f32 0.0, %v821
      %823 = vmatmul.f32.gmra.mxu0 %v709
      %v824 = vpop.f32.mrf.mxu0
      %v825 = vadd.f32 0.0, %v824
      %826 = vmatmul.f32.gmra.mxu0 %v712
      %v827 = vpop.f32.mrf.mxu0
      %v828 = vadd.f32 0.0, %v827
      %829 = vmatmul.f32.gmra.mxu0 %v715
      %v830 = vpop.f32.mrf.mxu0
      %v831 = vadd.f32 0.0, %v830
      %832 = vmatmul.f32.gmra.mxu0 %v718
      %v833 = vpop.f32.mrf.mxu0
      %v834 = vadd.f32 0.0, %v833
      %835 = vmatmul.f32.gmra.mxu0 %v721
      %v836 = vpop.f32.mrf.mxu0
      %v837 = vadd.f32 0.0, %v836
      %838 = vmatmul.f32.gmra.mxu0 %v724
      %v839 = vpop.f32.mrf.mxu0
      %v840 = vadd.f32 0.0, %v839
      %841 = vmatmul.f32.gmra.mxu0 %v727
      %v842 = vpop.f32.mrf.mxu0
      %v843 = vadd.f32 0.0, %v842
      %844 = vmatmul.f32.gmra.mxu0 %v730
      %v845 = vpop.f32.mrf.mxu0
      %v846 = vadd.f32 0.0, %v845
      %847 = vmatmul.f32.gmra.mxu0 %v733
      %v848 = vpop.f32.mrf.mxu0
      %v849 = vadd.f32 0.0, %v848
      %850 = vdwg.mxu0
      %v851 = vadd.f32 %v607, %v756
      %v852 = vadd.f32 %v608, %v759
      %v853 = vadd.f32 %v609, %v762
      %v854 = vadd.f32 %v610, %v765
      %v855 = vadd.f32 %v611, %v768
      %v856 = vadd.f32 %v612, %v771
      %v857 = vadd.f32 %v613, %v774
      %v858 = vadd.f32 %v614, %v777
      %v859 = vadd.f32 %v615, %v780
      %v860 = vadd.f32 %v616, %v783
      %v861 = vadd.f32 %v617, %v786
      %v862 = vadd.f32 %v618, %v789
      %v863 = vadd.f32 %v619, %v792
      %v864 = vadd.f32 %v620, %v795
      %v865 = vadd.f32 %v621, %v798
      %v866 = vadd.f32 %v622, %v801
      %v867 = vadd.f32 %v623, %v804
      %v868 = vadd.f32 %v624, %v807
      %v869 = vadd.f32 %v625, %v810
      %v870 = vadd.f32 %v626, %v813
      %v871 = vadd.f32 %v627, %v816
      %v872 = vadd.f32 %v628, %v819
      %v873 = vadd.f32 %v629, %v822
      %v874 = vadd.f32 %v630, %v825
      %v875 = vadd.f32 %v631, %v828
      %v876 = vadd.f32 %v632, %v831
      %v877 = vadd.f32 %v633, %v834
      %v878 = vadd.f32 %v634, %v837
      %v879 = vadd.f32 %v635, %v840
      %v880 = vadd.f32 %v636, %v843
      %v881 = vadd.f32 %v637, %v846
      %v882 = vadd.f32 %v638, %v849
      %883 = vst [vmem:[#allocation2] sm:$0xff] %v851
      %884 = vst [vmem:[#allocation2 + $0x8] sm:$0xff] %v852
      %885 = vst [vmem:[#allocation2 + $0x10] sm:$0xff] %v853
      %886 = vst [vmem:[#allocation2 + $0x18] sm:$0xff] %v854
      %887 = vst [vmem:[#allocation2 + $0x20] sm:$0xff] %v855
      %888 = vst [vmem:[#allocation2 + $0x28] sm:$0xff] %v856
      %889 = vst [vmem:[#allocation2 + $0x30] sm:$0xff] %v857
      %890 = vst [vmem:[#allocation2 + $0x38] sm:$0xff] %v858
      %891 = vst [vmem:[#allocation2 + $0x40] sm:$0xff] %v859
      %892 = vst [vmem:[#allocation2 + $0x48] sm:$0xff] %v860
      %893 = vst [vmem:[#allocation2 + $0x50] sm:$0xff] %v861
      %894 = vst [vmem:[#allocation2 + $0x58] sm:$0xff] %v862
      %895 = vst [vmem:[#allocation2 + $0x60] sm:$0xff] %v863
      %896 = vst [vmem:[#allocation2 + $0x68] sm:$0xff] %v864
      %897 = vst [vmem:[#allocation2 + $0x70] sm:$0xff] %v865
      %898 = vst [vmem:[#allocation2 + $0x78] sm:$0xff] %v866
      %899 = vst [vmem:[#allocation2 + $0x80] sm:$0xff] %v867
      %900 = vst [vmem:[#allocation2 + $0x88] sm:$0xff] %v868
      %901 = vst [vmem:[#allocation2 + $0x90] sm:$0xff] %v869
      %902 = vst [vmem:[#allocation2 + $0x98] sm:$0xff] %v870
      %903 = vst [vmem:[#allocation2 + $0xa0] sm:$0xff] %v871
      %904 = vst [vmem:[#allocation2 + $0xa8] sm:$0xff] %v872
      %905 = vst [vmem:[#allocation2 + $0xb0] sm:$0xff] %v873
      %906 = vst [vmem:[#allocation2 + $0xb8] sm:$0xff] %v874
      %907 = vst [vmem:[#allocation2 + $0xc0] sm:$0xff] %v875
      %908 = vst [vmem:[#allocation2 + $0xc8] sm:$0xff] %v876
      %909 = vst [vmem:[#allocation2 + $0xd0] sm:$0xff] %v877
      %910 = vst [vmem:[#allocation2 + $0xd8] sm:$0xff] %v878
      %911 = vst [vmem:[#allocation2 + $0xe0] sm:$0xff] %v879
      %912 = vst [vmem:[#allocation2 + $0xe8] sm:$0xff] %v880
      %913 = vst [vmem:[#allocation2 + $0xf0] sm:$0xff] %v881
      %914 = vst [vmem:[#allocation2 + $0xf8] sm:$0xff] %v882
      %v915 = vld [vmem:[%s230 + $0x2] sm:$0xff]
      %v916 = vld [vmem:[%s230 + $0xa] sm:$0xff]
      %v917 = vld [vmem:[%s230 + $0x1a] sm:$0xff]
      %v918 = vld [vmem:[%s230 + $0x22] sm:$0xff]
      %v919 = vld [vmem:[%s230 + $0x32] sm:$0xff]
      %v920 = vld [vmem:[%s230 + $0x3a] sm:$0xff]
      %v921 = vld [vmem:[%s230 + $0x4a] sm:$0xff]
      %v922 = vld [vmem:[%s230 + $0x52] sm:$0xff]
      %v923 = vld [vmem:[%s230 + $0x62] sm:$0xff]
      %v924 = vld [vmem:[%s230 + $0x6a] sm:$0xff]
      %v925 = vld [vmem:[%s230 + $0x7a] sm:$0xff]
      %v926 = vld [vmem:[%s230 + $0x82] sm:$0xff]
      %v927 = vld [vmem:[%s230 + $0x92] sm:$0xff]
      %v928 = vld [vmem:[%s230 + $0x9a] sm:$0xff]
      %v929 = vld [vmem:[%s230 + $0xaa] sm:$0xff]
      %v930 = vld [vmem:[%s230 + $0xb2] sm:$0xff]
      %v931 = vld [vmem:[%s230 + $0xc2] sm:$0xff]
      %v932 = vld [vmem:[%s230 + $0xca] sm:$0xff]
      %v933 = vld [vmem:[%s230 + $0xda] sm:$0xff]
      %v934 = vld [vmem:[%s230 + $0xe2] sm:$0xff]
      %v935 = vld [vmem:[%s230 + $0xf2] sm:$0xff]
      %v936 = vld [vmem:[%s230 + $0xfa] sm:$0xff]
      %v937 = vld [vmem:[%s230 + $0x10a] sm:$0xff]
      %v938 = vld [vmem:[%s230 + $0x112] sm:$0xff]
      %v939 = vld [vmem:[%s230 + $0x122] sm:$0xff]
      %v940 = vld [vmem:[%s230 + $0x12a] sm:$0xff]
      %v941 = vld [vmem:[%s230 + $0x13a] sm:$0xff]
      %v942 = vld [vmem:[%s230 + $0x142] sm:$0xff]
      %v943 = vld [vmem:[%s230 + $0x152] sm:$0xff]
      %v944 = vld [vmem:[%s230 + $0x15a] sm:$0xff]
      %v945 = vld [vmem:[%s230 + $0x16a] sm:$0xff]
      %v946 = vld [vmem:[%s230 + $0x172] sm:$0xff]
      %v947 = vld [vmem:[%s1 + $0x8] sm:$0xf]
      %v948 = vld [vmem:[#allocation2] sm:$0xff]
      %v949 = vld [vmem:[#allocation2 + $0x8] sm:$0xff]
      %v950 = vld [vmem:[#allocation2 + $0x10] sm:$0xff]
      %v951 = vld [vmem:[#allocation2 + $0x18] sm:$0xff]
      %v952 = vld [vmem:[#allocation2 + $0x20] sm:$0xff]
      %v953 = vld [vmem:[#allocation2 + $0x28] sm:$0xff]
      %v954 = vld [vmem:[#allocation2 + $0x30] sm:$0xff]
      %v955 = vld [vmem:[#allocation2 + $0x38] sm:$0xff]
      %v956 = vld [vmem:[#allocation2 + $0x40] sm:$0xff]
      %v957 = vld [vmem:[#allocation2 + $0x48] sm:$0xff]
      %v958 = vld [vmem:[#allocation2 + $0x50] sm:$0xff]
      %v959 = vld [vmem:[#allocation2 + $0x58] sm:$0xff]
      %v960 = vld [vmem:[#allocation2 + $0x60] sm:$0xff]
      %v961 = vld [vmem:[#allocation2 + $0x68] sm:$0xff]
      %v962 = vld [vmem:[#allocation2 + $0x70] sm:$0xff]
      %v963 = vld [vmem:[#allocation2 + $0x78] sm:$0xff]
      %v964 = vld [vmem:[#allocation2 + $0x80] sm:$0xff]
      %v965 = vld [vmem:[#allocation2 + $0x88] sm:$0xff]
      %v966 = vld [vmem:[#allocation2 + $0x90] sm:$0xff]
      %v967 = vld [vmem:[#allocation2 + $0x98] sm:$0xff]
      %v968 = vld [vmem:[#allocation2 + $0xa0] sm:$0xff]
      %v969 = vld [vmem:[#allocation2 + $0xa8] sm:$0xff]
      %v970 = vld [vmem:[#allocation2 + $0xb0] sm:$0xff]
      %v971 = vld [vmem:[#allocation2 + $0xb8] sm:$0xff]
      %v972 = vld [vmem:[#allocation2 + $0xc0] sm:$0xff]
      %v973 = vld [vmem:[#allocation2 + $0xc8] sm:$0xff]
      %v974 = vld [vmem:[#allocation2 + $0xd0] sm:$0xff]
      %v975 = vld [vmem:[#allocation2 + $0xd8] sm:$0xff]
      %v976 = vld [vmem:[#allocation2 + $0xe0] sm:$0xff]
      %v977 = vld [vmem:[#allocation2 + $0xe8] sm:$0xff]
      %v978 = vld [vmem:[#allocation2 + $0xf0] sm:$0xff]
      %v979 = vld [vmem:[#allocation2 + $0xf8] sm:$0xff]
      %v981 = vsel %vm296, %v915, 0
      %v984 = vsel %vm296, %v916, 0
      %v987 = vsel %vm296, %v917, 0
      %v990 = vsel %vm296, %v918, 0
      %v993 = vsel %vm296, %v919, 0
      %v996 = vsel %vm296, %v920, 0
      %v999 = vsel %vm296, %v921, 0
      %v1002 = vsel %vm296, %v922, 0
      %v1005 = vsel %vm296, %v923, 0
      %v1008 = vsel %vm296, %v924, 0
      %v1011 = vsel %vm296, %v925, 0
      %v1014 = vsel %vm296, %v926, 0
      %v1017 = vsel %vm296, %v927, 0
      %v1020 = vsel %vm296, %v928, 0
      %v1023 = vsel %vm296, %v929, 0
      %v1026 = vsel %vm296, %v930, 0
      %v1029 = vsel %vm296, %v931, 0
      %v1032 = vsel %vm296, %v932, 0
      %v1035 = vsel %vm296, %v933, 0
      %v1038 = vsel %vm296, %v934, 0
      %v1041 = vsel %vm296, %v935, 0
      %v1044 = vsel %vm296, %v936, 0
      %v1047 = vsel %vm296, %v937, 0
      %v1050 = vsel %vm296, %v938, 0
      %v1053 = vsel %vm296, %v939, 0
      %v1056 = vsel %vm296, %v940, 0
      %v1059 = vsel %vm296, %v941, 0
      %v1062 = vsel %vm296, %v942, 0
      %v1065 = vsel %vm296, %v943, 0
      %v1068 = vsel %vm296, %v944, 0
      %v1071 = vsel %vm296, %v945, 0
      %v1074 = vsel %vm296, %v946, 0
      %v1077 = vsel %vm393, %v947, 0
      %1079 = vmatpush.msra.mxu0 0.0
      %1080 = vmatpush.msra.mxu0 0.0
      %1081 = vmatpush.msra.mxu0 0.0
      %1082 = vmatpush.msra.mxu0 0.0
      %1083 = vmatpush.msra.mxu0 0.0
      %1084 = vmatpush.msra.mxu0 0.0
      %1085 = vmatpush.msra.mxu0 0.0
      %1086 = vmatpush.msra.mxu0 0.0
      %1087 = vmatpush.msra.mxu0 0.0
      %1088 = vmatpush.msra.mxu0 0.0
      %1089 = vmatpush.msra.mxu0 0.0
      %1090 = vmatpush.msra.mxu0 0.0
      %1091 = vmatpush.msra.mxu0 0.0
      %1092 = vmatpush.msra.mxu0 0.0
      %1093 = vmatpush.msra.mxu0 0.0
      %1094 = vmatpush.msra.mxu0 %v1077
      %1095 = vmatmul.f32.gmra.mxu0 %v981
      %v1096 = vpop.f32.mrf.mxu0
      %v1097 = vadd.f32 0.0, %v1096
      %1098 = vmatmul.f32.gmra.mxu0 %v984
      %v1099 = vpop.f32.mrf.mxu0
      %v1100 = vadd.f32 0.0, %v1099
      %1101 = vmatmul.f32.gmra.mxu0 %v987
      %v1102 = vpop.f32.mrf.mxu0
      %v1103 = vadd.f32 0.0, %v1102
      %1104 = vmatmul.f32.gmra.mxu0 %v990
      %v1105 = vpop.f32.mrf.mxu0
      %v1106 = vadd.f32 0.0, %v1105
      %1107 = vmatmul.f32.gmra.mxu0 %v993
      %v1108 = vpop.f32.mrf.mxu0
      %v1109 = vadd.f32 0.0, %v1108
      %1110 = vmatmul.f32.gmra.mxu0 %v996
      %v1111 = vpop.f32.mrf.mxu0
      %v1112 = vadd.f32 0.0, %v1111
      %1113 = vmatmul.f32.gmra.mxu0 %v999
      %v1114 = vpop.f32.mrf.mxu0
      %v1115 = vadd.f32 0.0, %v1114
      %1116 = vmatmul.f32.gmra.mxu0 %v1002
      %v1117 = vpop.f32.mrf.mxu0
      %v1118 = vadd.f32 0.0, %v1117
      %1119 = vmatmul.f32.gmra.mxu0 %v1005
      %v1120 = vpop.f32.mrf.mxu0
      %v1121 = vadd.f32 0.0, %v1120
      %1122 = vmatmul.f32.gmra.mxu0 %v1008
      %v1123 = vpop.f32.mrf.mxu0
      %v1124 = vadd.f32 0.0, %v1123
      %1125 = vmatmul.f32.gmra.mxu0 %v1011
      %v1126 = vpop.f32.mrf.mxu0
      %v1127 = vadd.f32 0.0, %v1126
      %1128 = vmatmul.f32.gmra.mxu0 %v1014
      %v1129 = vpop.f32.mrf.mxu0
      %v1130 = vadd.f32 0.0, %v1129
      %1131 = vmatmul.f32.gmra.mxu0 %v1017
      %v1132 = vpop.f32.mrf.mxu0
      %v1133 = vadd.f32 0.0, %v1132
      %1134 = vmatmul.f32.gmra.mxu0 %v1020
      %v1135 = vpop.f32.mrf.mxu0
      %v1136 = vadd.f32 0.0, %v1135
      %1137 = vmatmul.f32.gmra.mxu0 %v1023
      %v1138 = vpop.f32.mrf.mxu0
      %v1139 = vadd.f32 0.0, %v1138
      %1140 = vmatmul.f32.gmra.mxu0 %v1026
      %v1141 = vpop.f32.mrf.mxu0
      %v1142 = vadd.f32 0.0, %v1141
      %1143 = vmatmul.f32.gmra.mxu0 %v1029
      %v1144 = vpop.f32.mrf.mxu0
      %v1145 = vadd.f32 0.0, %v1144
      %1146 = vmatmul.f32.gmra.mxu0 %v1032
      %v1147 = vpop.f32.mrf.mxu0
      %v1148 = vadd.f32 0.0, %v1147
      %1149 = vmatmul.f32.gmra.mxu0 %v1035
      %v1150 = vpop.f32.mrf.mxu0
      %v1151 = vadd.f32 0.0, %v1150
      %1152 = vmatmul.f32.gmra.mxu0 %v1038
      %v1153 = vpop.f32.mrf.mxu0
      %v1154 = vadd.f32 0.0, %v1153
      %1155 = vmatmul.f32.gmra.mxu0 %v1041
      %v1156 = vpop.f32.mrf.mxu0
      %v1157 = vadd.f32 0.0, %v1156
      %1158 = vmatmul.f32.gmra.mxu0 %v1044
      %v1159 = vpop.f32.mrf.mxu0
      %v1160 = vadd.f32 0.0, %v1159
      %1161 = vmatmul.f32.gmra.mxu0 %v1047
      %v1162 = vpop.f32.mrf.mxu0
      %v1163 = vadd.f32 0.0, %v1162
      %1164 = vmatmul.f32.gmra.mxu0 %v1050
      %v1165 = vpop.f32.mrf.mxu0
      %v1166 = vadd.f32 0.0, %v1165
      %1167 = vmatmul.f32.gmra.mxu0 %v1053
      %v1168 = vpop.f32.mrf.mxu0
      %v1169 = vadd.f32 0.0, %v1168
      %1170 = vmatmul.f32.gmra.mxu0 %v1056
      %v1171 = vpop.f32.mrf.mxu0
      %v1172 = vadd.f32 0.0, %v1171
      %1173 = vmatmul.f32.gmra.mxu0 %v1059
      %v1174 = vpop.f32.mrf.mxu0
      %v1175 = vadd.f32 0.0, %v1174
      %1176 = vmatmul.f32.gmra.mxu0 %v1062
      %v1177 = vpop.f32.mrf.mxu0
      %v1178 = vadd.f32 0.0, %v1177
      %1179 = vmatmul.f32.gmra.mxu0 %v1065
      %v1180 = vpop.f32.mrf.mxu0
      %v1181 = vadd.f32 0.0, %v1180
      %1182 = vmatmul.f32.gmra.mxu0 %v1068
      %v1183 = vpop.f32.mrf.mxu0
      %v1184 = vadd.f32 0.0, %v1183
      %1185 = vmatmul.f32.gmra.mxu0 %v1071
      %v1186 = vpop.f32.mrf.mxu0
      %v1187 = vadd.f32 0.0, %v1186
      %1188 = vmatmul.f32.gmra.mxu0 %v1074
      %v1189 = vpop.f32.mrf.mxu0
      %v1190 = vadd.f32 0.0, %v1189
      %1191 = vdwg.mxu0
      %v1192 = vadd.f32 %v948, %v1097
      %v1193 = vadd.f32 %v949, %v1100
      %v1194 = vadd.f32 %v950, %v1103
      %v1195 = vadd.f32 %v951, %v1106
      %v1196 = vadd.f32 %v952, %v1109
      %v1197 = vadd.f32 %v953, %v1112
      %v1198 = vadd.f32 %v954, %v1115
      %v1199 = vadd.f32 %v955, %v1118
      %v1200 = vadd.f32 %v956, %v1121
      %v1201 = vadd.f32 %v957, %v1124
      %v1202 = vadd.f32 %v958, %v1127
      %v1203 = vadd.f32 %v959, %v1130
      %v1204 = vadd.f32 %v960, %v1133
      %v1205 = vadd.f32 %v961, %v1136
      %v1206 = vadd.f32 %v962, %v1139
      %v1207 = vadd.f32 %v963, %v1142
      %v1208 = vadd.f32 %v964, %v1145
      %v1209 = vadd.f32 %v965, %v1148
      %v1210 = vadd.f32 %v966, %v1151
      %v1211 = vadd.f32 %v967, %v1154
      %v1212 = vadd.f32 %v968, %v1157
      %v1213 = vadd.f32 %v969, %v1160
      %v1214 = vadd.f32 %v970, %v1163
      %v1215 = vadd.f32 %v971, %v1166
      %v1216 = vadd.f32 %v972, %v1169
      %v1217 = vadd.f32 %v973, %v1172
      %v1218 = vadd.f32 %v974, %v1175
      %v1219 = vadd.f32 %v975, %v1178
      %v1220 = vadd.f32 %v976, %v1181
      %v1221 = vadd.f32 %v977, %v1184
      %v1222 = vadd.f32 %v978, %v1187
      %v1223 = vadd.f32 %v979, %v1190
      %1224 = vst [vmem:[#allocation2] sm:$0xff] %v1192
      %1225 = vst [vmem:[#allocation2 + $0x8] sm:$0xff] %v1193
      %1226 = vst [vmem:[#allocation2 + $0x10] sm:$0xff] %v1194
      %1227 = vst [vmem:[#allocation2 + $0x18] sm:$0xff] %v1195
      %1228 = vst [vmem:[#allocation2 + $0x20] sm:$0xff] %v1196
      %1229 = vst [vmem:[#allocation2 + $0x28] sm:$0xff] %v1197
      %1230 = vst [vmem:[#allocation2 + $0x30] sm:$0xff] %v1198
      %1231 = vst [vmem:[#allocation2 + $0x38] sm:$0xff] %v1199
      %1232 = vst [vmem:[#allocation2 + $0x40] sm:$0xff] %v1200
      %1233 = vst [vmem:[#allocation2 + $0x48] sm:$0xff] %v1201
      %1234 = vst [vmem:[#allocation2 + $0x50] sm:$0xff] %v1202
      %1235 = vst [vmem:[#allocation2 + $0x58] sm:$0xff] %v1203
      %1236 = vst [vmem:[#allocation2 + $0x60] sm:$0xff] %v1204
      %1237 = vst [vmem:[#allocation2 + $0x68] sm:$0xff] %v1205
      %1238 = vst [vmem:[#allocation2 + $0x70] sm:$0xff] %v1206
      %1239 = vst [vmem:[#allocation2 + $0x78] sm:$0xff] %v1207
      %1240 = vst [vmem:[#allocation2 + $0x80] sm:$0xff] %v1208
      %1241 = vst [vmem:[#allocation2 + $0x88] sm:$0xff] %v1209
      %1242 = vst [vmem:[#allocation2 + $0x90] sm:$0xff] %v1210
      %1243 = vst [vmem:[#allocation2 + $0x98] sm:$0xff] %v1211
      %1244 = vst [vmem:[#allocation2 + $0xa0] sm:$0xff] %v1212
      %1245 = vst [vmem:[#allocation2 + $0xa8] sm:$0xff] %v1213
      %1246 = vst [vmem:[#allocation2 + $0xb0] sm:$0xff] %v1214
      %1247 = vst [vmem:[#allocation2 + $0xb8] sm:$0xff] %v1215
      %1248 = vst [vmem:[#allocation2 + $0xc0] sm:$0xff] %v1216
      %1249 = vst [vmem:[#allocation2 + $0xc8] sm:$0xff] %v1217
      %1250 = vst [vmem:[#allocation2 + $0xd0] sm:$0xff] %v1218
      %1251 = vst [vmem:[#allocation2 + $0xd8] sm:$0xff] %v1219
      %1252 = vst [vmem:[#allocation2 + $0xe0] sm:$0xff] %v1220
      %1253 = vst [vmem:[#allocation2 + $0xe8] sm:$0xff] %v1221
      %1254 = vst [vmem:[#allocation2 + $0xf0] sm:$0xff] %v1222
      %1255 = vst [vmem:[#allocation2 + $0xf8] sm:$0xff] %v1223
      %s1256 = sadd.s32 %s196, 1
      %s1257 = smul.u32 %s1256, 24
      %s1258 = scalar_lea.vmem %s184, %s1257
      %v1259 = vld [vmem:[%s1258] sm:$0xff]
      %v1260 = vld [vmem:[%s1258 + $0x8] sm:$0xff]
      %v1261 = vld [vmem:[%s1258 + $0x18] sm:$0xff]
      %v1262 = vld [vmem:[%s1258 + $0x20] sm:$0xff]
      %v1263 = vld [vmem:[%s1258 + $0x30] sm:$0xff]
      %v1264 = vld [vmem:[%s1258 + $0x38] sm:$0xff]
      %v1265 = vld [vmem:[%s1258 + $0x48] sm:$0xff]
      %v1266 = vld [vmem:[%s1258 + $0x50] sm:$0xff]
      %v1267 = vld [vmem:[%s1258 + $0x60] sm:$0xff]
      %v1268 = vld [vmem:[%s1258 + $0x68] sm:$0xff]
      %v1269 = vld [vmem:[%s1258 + $0x78] sm:$0xff]
      %v1270 = vld [vmem:[%s1258 + $0x80] sm:$0xff]
      %v1271 = vld [vmem:[%s1258 + $0x90] sm:$0xff]
      %v1272 = vld [vmem:[%s1258 + $0x98] sm:$0xff]
      %v1273 = vld [vmem:[%s1258 + $0xa8] sm:$0xff]
      %v1274 = vld [vmem:[%s1258 + $0xb0] sm:$0xff]
      %v1275 = vld [vmem:[%s1258 + $0xc0] sm:$0xff]
      %v1276 = vld [vmem:[%s1258 + $0xc8] sm:$0xff]
      %v1277 = vld [vmem:[%s1258 + $0xd8] sm:$0xff]
      %v1278 = vld [vmem:[%s1258 + $0xe0] sm:$0xff]
      %v1279 = vld [vmem:[%s1258 + $0xf0] sm:$0xff]
      %v1280 = vld [vmem:[%s1258 + $0xf8] sm:$0xff]
      %v1281 = vld [vmem:[%s1258 + $0x108] sm:$0xff]
      %v1282 = vld [vmem:[%s1258 + $0x110] sm:$0xff]
      %v1283 = vld [vmem:[%s1258 + $0x120] sm:$0xff]
      %v1284 = vld [vmem:[%s1258 + $0x128] sm:$0xff]
      %v1285 = vld [vmem:[%s1258 + $0x138] sm:$0xff]
      %v1286 = vld [vmem:[%s1258 + $0x140] sm:$0xff]
      %v1287 = vld [vmem:[%s1258 + $0x150] sm:$0xff]
      %v1288 = vld [vmem:[%s1258 + $0x158] sm:$0xff]
      %v1289 = vld [vmem:[%s1258 + $0x168] sm:$0xff]
      %v1290 = vld [vmem:[%s1258 + $0x170] sm:$0xff]
      %v1291 = vld [vmem:[%s1 + $0xc] sm:$0xf]
      %v1292 = vld [vmem:[#allocation2] sm:$0xff]
      %v1293 = vld [vmem:[#allocation2 + $0x8] sm:$0xff]
      %v1294 = vld [vmem:[#allocation2 + $0x10] sm:$0xff]
      %v1295 = vld [vmem:[#allocation2 + $0x18] sm:$0xff]
      %v1296 = vld [vmem:[#allocation2 + $0x20] sm:$0xff]
      %v1297 = vld [vmem:[#allocation2 + $0x28] sm:$0xff]
      %v1298 = vld [vmem:[#allocation2 + $0x30] sm:$0xff]
      %v1299 = vld [vmem:[#allocation2 + $0x38] sm:$0xff]
      %v1300 = vld [vmem:[#allocation2 + $0x40] sm:$0xff]
      %v1301 = vld [vmem:[#allocation2 + $0x48] sm:$0xff]
      %v1302 = vld [vmem:[#allocation2 + $0x50] sm:$0xff]
      %v1303 = vld [vmem:[#allocation2 + $0x58] sm:$0xff]
      %v1304 = vld [vmem:[#allocation2 + $0x60] sm:$0xff]
      %v1305 = vld [vmem:[#allocation2 + $0x68] sm:$0xff]
      %v1306 = vld [vmem:[#allocation2 + $0x70] sm:$0xff]
      %v1307 = vld [vmem:[#allocation2 + $0x78] sm:$0xff]
      %v1308 = vld [vmem:[#allocation2 + $0x80] sm:$0xff]
      %v1309 = vld [vmem:[#allocation2 + $0x88] sm:$0xff]
      %v1310 = vld [vmem:[#allocation2 + $0x90] sm:$0xff]
      %v1311 = vld [vmem:[#allocation2 + $0x98] sm:$0xff]
      %v1312 = vld [vmem:[#allocation2 + $0xa0] sm:$0xff]
      %v1313 = vld [vmem:[#allocation2 + $0xa8] sm:$0xff]
      %v1314 = vld [vmem:[#allocation2 + $0xb0] sm:$0xff]
      %v1315 = vld [vmem:[#allocation2 + $0xb8] sm:$0xff]
      %v1316 = vld [vmem:[#allocation2 + $0xc0] sm:$0xff]
      %v1317 = vld [vmem:[#allocation2 + $0xc8] sm:$0xff]
      %v1318 = vld [vmem:[#allocation2 + $0xd0] sm:$0xff]
      %v1319 = vld [vmem:[#allocation2 + $0xd8] sm:$0xff]
      %v1320 = vld [vmem:[#allocation2 + $0xe0] sm:$0xff]
      %v1321 = vld [vmem:[#allocation2 + $0xe8] sm:$0xff]
      %v1322 = vld [vmem:[#allocation2 + $0xf0] sm:$0xff]
      %v1323 = vld [vmem:[#allocation2 + $0xf8] sm:$0xff]
      %v1325 = vsel %vm296, %v1259, 0
      %v1328 = vsel %vm296, %v1260, 0
      %v1331 = vsel %vm296, %v1261, 0
      %v1334 = vsel %vm296, %v1262, 0
      %v1337 = vsel %vm296, %v1263, 0
      %v1340 = vsel %vm296, %v1264, 0
      %v1343 = vsel %vm296, %v1265, 0
      %v1346 = vsel %vm296, %v1266, 0
      %v1349 = vsel %vm296, %v1267, 0
      %v1352 = vsel %vm296, %v1268, 0
      %v1355 = vsel %vm296, %v1269, 0
      %v1358 = vsel %vm296, %v1270, 0
      %v1361 = vsel %vm296, %v1271, 0
      %v1364 = vsel %vm296, %v1272, 0
      %v1367 = vsel %vm296, %v1273, 0
      %v1370 = vsel %vm296, %v1274, 0
      %v1373 = vsel %vm296, %v1275, 0
      %v1376 = vsel %vm296, %v1276, 0
      %v1379 = vsel %vm296, %v1277, 0
      %v1382 = vsel %vm296, %v1278, 0
      %v1385 = vsel %vm296, %v1279, 0
      %v1388 = vsel %vm296, %v1280, 0
      %v1391 = vsel %vm296, %v1281, 0
      %v1394 = vsel %vm296, %v1282, 0
      %v1397 = vsel %vm296, %v1283, 0
      %v1400 = vsel %vm296, %v1284, 0
      %v1403 = vsel %vm296, %v1285, 0
      %v1406 = vsel %vm296, %v1286, 0
      %v1409 = vsel %vm296, %v1287, 0
      %v1412 = vsel %vm296, %v1288, 0
      %v1415 = vsel %vm296, %v1289, 0
      %v1418 = vsel %vm296, %v1290, 0
      %v1421 = vsel %vm393, %v1291, 0
      %1423 = vmatpush.msra.mxu0 0.0
      %1424 = vmatpush.msra.mxu0 0.0
      %1425 = vmatpush.msra.mxu0 0.0
      %1426 = vmatpush.msra.mxu0 0.0
      %1427 = vmatpush.msra.mxu0 0.0
      %1428 = vmatpush.msra.mxu0 0.0
      %1429 = vmatpush.msra.mxu0 0.0
      %1430 = vmatpush.msra.mxu0 0.0
      %1431 = vmatpush.msra.mxu0 0.0
      %1432 = vmatpush.msra.mxu0 0.0
      %1433 = vmatpush.msra.mxu0 0.0
      %1434 = vmatpush.msra.mxu0 0.0
      %1435 = vmatpush.msra.mxu0 0.0
      %1436 = vmatpush.msra.mxu0 0.0
      %1437 = vmatpush.msra.mxu0 0.0
      %1438 = vmatpush.msra.mxu0 %v1421
      %1439 = vmatmul.f32.gmra.mxu0 %v1325
      %v1440 = vpop.f32.mrf.mxu0
      %v1441 = vadd.f32 0.0, %v1440
      %1442 = vmatmul.f32.gmra.mxu0 %v1328
      %v1443 = vpop.f32.mrf.mxu0
      %v1444 = vadd.f32 0.0, %v1443
      %1445 = vmatmul.f32.gmra.mxu0 %v1331
      %v1446 = vpop.f32.mrf.mxu0
      %v1447 = vadd.f32 0.0, %v1446
      %1448 = vmatmul.f32.gmra.mxu0 %v1334
      %v1449 = vpop.f32.mrf.mxu0
      %v1450 = vadd.f32 0.0, %v1449
      %1451 = vmatmul.f32.gmra.mxu0 %v1337
      %v1452 = vpop.f32.mrf.mxu0
      %v1453 = vadd.f32 0.0, %v1452
      %1454 = vmatmul.f32.gmra.mxu0 %v1340
      %v1455 = vpop.f32.mrf.mxu0
      %v1456 = vadd.f32 0.0, %v1455
      %1457 = vmatmul.f32.gmra.mxu0 %v1343
      %v1458 = vpop.f32.mrf.mxu0
      %v1459 = vadd.f32 0.0, %v1458
      %1460 = vmatmul.f32.gmra.mxu0 %v1346
      %v1461 = vpop.f32.mrf.mxu0
      %v1462 = vadd.f32 0.0, %v1461
      %1463 = vmatmul.f32.gmra.mxu0 %v1349
      %v1464 = vpop.f32.mrf.mxu0
      %v1465 = vadd.f32 0.0, %v1464
      %1466 = vmatmul.f32.gmra.mxu0 %v1352
      %v1467 = vpop.f32.mrf.mxu0
      %v1468 = vadd.f32 0.0, %v1467
      %1469 = vmatmul.f32.gmra.mxu0 %v1355
      %v1470 = vpop.f32.mrf.mxu0
      %v1471 = vadd.f32 0.0, %v1470
      %1472 = vmatmul.f32.gmra.mxu0 %v1358
      %v1473 = vpop.f32.mrf.mxu0
      %v1474 = vadd.f32 0.0, %v1473
      %1475 = vmatmul.f32.gmra.mxu0 %v1361
      %v1476 = vpop.f32.mrf.mxu0
      %v1477 = vadd.f32 0.0, %v1476
      %1478 = vmatmul.f32.gmra.mxu0 %v1364
      %v1479 = vpop.f32.mrf.mxu0
      %v1480 = vadd.f32 0.0, %v1479
      %1481 = vmatmul.f32.gmra.mxu0 %v1367
      %v1482 = vpop.f32.mrf.mxu0
      %v1483 = vadd.f32 0.0, %v1482
      %1484 = vmatmul.f32.gmra.mxu0 %v1370
      %v1485 = vpop.f32.mrf.mxu0
      %v1486 = vadd.f32 0.0, %v1485
      %1487 = vmatmul.f32.gmra.mxu0 %v1373
      %v1488 = vpop.f32.mrf.mxu0
      %v1489 = vadd.f32 0.0, %v1488
      %1490 = vmatmul.f32.gmra.mxu0 %v1376
      %v1491 = vpop.f32.mrf.mxu0
      %v1492 = vadd.f32 0.0, %v1491
      %1493 = vmatmul.f32.gmra.mxu0 %v1379
      %v1494 = vpop.f32.mrf.mxu0
      %v1495 = vadd.f32 0.0, %v1494
      %1496 = vmatmul.f32.gmra.mxu0 %v1382
      %v1497 = vpop.f32.mrf.mxu0
      %v1498 = vadd.f32 0.0, %v1497
      %1499 = vmatmul.f32.gmra.mxu0 %v1385
      %v1500 = vpop.f32.mrf.mxu0
      %v1501 = vadd.f32 0.0, %v1500
      %1502 = vmatmul.f32.gmra.mxu0 %v1388
      %v1503 = vpop.f32.mrf.mxu0
      %v1504 = vadd.f32 0.0, %v1503
      %1505 = vmatmul.f32.gmra.mxu0 %v1391
      %v1506 = vpop.f32.mrf.mxu0
      %v1507 = vadd.f32 0.0, %v1506
      %1508 = vmatmul.f32.gmra.mxu0 %v1394
      %v1509 = vpop.f32.mrf.mxu0
      %v1510 = vadd.f32 0.0, %v1509
      %1511 = vmatmul.f32.gmra.mxu0 %v1397
      %v1512 = vpop.f32.mrf.mxu0
      %v1513 = vadd.f32 0.0, %v1512
      %1514 = vmatmul.f32.gmra.mxu0 %v1400
      %v1515 = vpop.f32.mrf.mxu0
      %v1516 = vadd.f32 0.0, %v1515
      %1517 = vmatmul.f32.gmra.mxu0 %v1403
      %v1518 = vpop.f32.mrf.mxu0
      %v1519 = vadd.f32 0.0, %v1518
      %1520 = vmatmul.f32.gmra.mxu0 %v1406
      %v1521 = vpop.f32.mrf.mxu0
      %v1522 = vadd.f32 0.0, %v1521
      %1523 = vmatmul.f32.gmra.mxu0 %v1409
      %v1524 = vpop.f32.mrf.mxu0
      %v1525 = vadd.f32 0.0, %v1524
      %1526 = vmatmul.f32.gmra.mxu0 %v1412
      %v1527 = vpop.f32.mrf.mxu0
      %v1528 = vadd.f32 0.0, %v1527
      %1529 = vmatmul.f32.gmra.mxu0 %v1415
      %v1530 = vpop.f32.mrf.mxu0
      %v1531 = vadd.f32 0.0, %v1530
      %1532 = vmatmul.f32.gmra.mxu0 %v1418
      %v1533 = vpop.f32.mrf.mxu0
      %v1534 = vadd.f32 0.0, %v1533
      %1535 = vdwg.mxu0
      %v1536 = vadd.f32 %v1292, %v1441
      %v1537 = vadd.f32 %v1293, %v1444
      %v1538 = vadd.f32 %v1294, %v1447
      %v1539 = vadd.f32 %v1295, %v1450
      %v1540 = vadd.f32 %v1296, %v1453
      %v1541 = vadd.f32 %v1297, %v1456
      %v1542 = vadd.f32 %v1298, %v1459
      %v1543 = vadd.f32 %v1299, %v1462
      %v1544 = vadd.f32 %v1300, %v1465
      %v1545 = vadd.f32 %v1301, %v1468
      %v1546 = vadd.f32 %v1302, %v1471
      %v1547 = vadd.f32 %v1303, %v1474
      %v1548 = vadd.f32 %v1304, %v1477
      %v1549 = vadd.f32 %v1305, %v1480
      %v1550 = vadd.f32 %v1306, %v1483
      %v1551 = vadd.f32 %v1307, %v1486
      %v1552 = vadd.f32 %v1308, %v1489
      %v1553 = vadd.f32 %v1309, %v1492
      %v1554 = vadd.f32 %v1310, %v1495
      %v1555 = vadd.f32 %v1311, %v1498
      %v1556 = vadd.f32 %v1312, %v1501
      %v1557 = vadd.f32 %v1313, %v1504
      %v1558 = vadd.f32 %v1314, %v1507
      %v1559 = vadd.f32 %v1315, %v1510
      %v1560 = vadd.f32 %v1316, %v1513
      %v1561 = vadd.f32 %v1317, %v1516
      %v1562 = vadd.f32 %v1318, %v1519
      %v1563 = vadd.f32 %v1319, %v1522
      %v1564 = vadd.f32 %v1320, %v1525
      %v1565 = vadd.f32 %v1321, %v1528
      %v1566 = vadd.f32 %v1322, %v1531
      %v1567 = vadd.f32 %v1323, %v1534
      %1568 = vst [vmem:[#allocation2] sm:$0xff] %v1536
      %1569 = vst [vmem:[#allocation2 + $0x8] sm:$0xff] %v1537
      %1570 = vst [vmem:[#allocation2 + $0x10] sm:$0xff] %v1538
      %1571 = vst [vmem:[#allocation2 + $0x18] sm:$0xff] %v1539
      %1572 = vst [vmem:[#allocation2 + $0x20] sm:$0xff] %v1540
      %1573 = vst [vmem:[#allocation2 + $0x28] sm:$0xff] %v1541
      %1574 = vst [vmem:[#allocation2 + $0x30] sm:$0xff] %v1542
      %1575 = vst [vmem:[#allocation2 + $0x38] sm:$0xff] %v1543
      %1576 = vst [vmem:[#allocation2 + $0x40] sm:$0xff] %v1544
      %1577 = vst [vmem:[#allocation2 + $0x48] sm:$0xff] %v1545
      %1578 = vst [vmem:[#allocation2 + $0x50] sm:$0xff] %v1546
      %1579 = vst [vmem:[#allocation2 + $0x58] sm:$0xff] %v1547
      %1580 = vst [vmem:[#allocation2 + $0x60] sm:$0xff] %v1548
      %1581 = vst [vmem:[#allocation2 + $0x68] sm:$0xff] %v1549
      %1582 = vst [vmem:[#allocation2 + $0x70] sm:$0xff] %v1550
      %1583 = vst [vmem:[#allocation2 + $0x78] sm:$0xff] %v1551
      %1584 = vst [vmem:[#allocation2 + $0x80] sm:$0xff] %v1552
      %1585 = vst [vmem:[#allocation2 + $0x88] sm:$0xff] %v1553
      %1586 = vst [vmem:[#allocation2 + $0x90] sm:$0xff] %v1554
      %1587 = vst [vmem:[#allocation2 + $0x98] sm:$0xff] %v1555
      %1588 = vst [vmem:[#allocation2 + $0xa0] sm:$0xff] %v1556
      %1589 = vst [vmem:[#allocation2 + $0xa8] sm:$0xff] %v1557
      %1590 = vst [vmem:[#allocation2 + $0xb0] sm:$0xff] %v1558
      %1591 = vst [vmem:[#allocation2 + $0xb8] sm:$0xff] %v1559
      %1592 = vst [vmem:[#allocation2 + $0xc0] sm:$0xff] %v1560
      %1593 = vst [vmem:[#allocation2 + $0xc8] sm:$0xff] %v1561
      %1594 = vst [vmem:[#allocation2 + $0xd0] sm:$0xff] %v1562
      %1595 = vst [vmem:[#allocation2 + $0xd8] sm:$0xff] %v1563
      %1596 = vst [vmem:[#allocation2 + $0xe0] sm:$0xff] %v1564
      %1597 = vst [vmem:[#allocation2 + $0xe8] sm:$0xff] %v1565
      %1598 = vst [vmem:[#allocation2 + $0xf0] sm:$0xff] %v1566
      %1599 = vst [vmem:[#allocation2 + $0xf8] sm:$0xff] %v1567
      %v1600 = vld [vmem:[%s1258 + $0x1] sm:$0xff]
      %v1601 = vld [vmem:[%s1258 + $0x9] sm:$0xff]
      %v1602 = vld [vmem:[%s1258 + $0x19] sm:$0xff]
      %v1603 = vld [vmem:[%s1258 + $0x21] sm:$0xff]
      %v1604 = vld [vmem:[%s1258 + $0x31] sm:$0xff]
      %v1605 = vld [vmem:[%s1258 + $0x39] sm:$0xff]
      %v1606 = vld [vmem:[%s1258 + $0x49] sm:$0xff]
      %v1607 = vld [vmem:[%s1258 + $0x51] sm:$0xff]
      %v1608 = vld [vmem:[%s1258 + $0x61] sm:$0xff]
      %v1609 = vld [vmem:[%s1258 + $0x69] sm:$0xff]
      %v1610 = vld [vmem:[%s1258 + $0x79] sm:$0xff]
      %v1611 = vld [vmem:[%s1258 + $0x81] sm:$0xff]
      %v1612 = vld [vmem:[%s1258 + $0x91] sm:$0xff]
      %v1613 = vld [vmem:[%s1258 + $0x99] sm:$0xff]
      %v1614 = vld [vmem:[%s1258 + $0xa9] sm:$0xff]
      %v1615 = vld [vmem:[%s1258 + $0xb1] sm:$0xff]
      %v1616 = vld [vmem:[%s1258 + $0xc1] sm:$0xff]
      %v1617 = vld [vmem:[%s1258 + $0xc9] sm:$0xff]
      %v1618 = vld [vmem:[%s1258 + $0xd9] sm:$0xff]
      %v1619 = vld [vmem:[%s1258 + $0xe1] sm:$0xff]
      %v1620 = vld [vmem:[%s1258 + $0xf1] sm:$0xff]
      %v1621 = vld [vmem:[%s1258 + $0xf9] sm:$0xff]
      %v1622 = vld [vmem:[%s1258 + $0x109] sm:$0xff]
      %v1623 = vld [vmem:[%s1258 + $0x111] sm:$0xff]
      %v1624 = vld [vmem:[%s1258 + $0x121] sm:$0xff]
      %v1625 = vld [vmem:[%s1258 + $0x129] sm:$0xff]
      %v1626 = vld [vmem:[%s1258 + $0x139] sm:$0xff]
      %v1627 = vld [vmem:[%s1258 + $0x141] sm:$0xff]
      %v1628 = vld [vmem:[%s1258 + $0x151] sm:$0xff]
      %v1629 = vld [vmem:[%s1258 + $0x159] sm:$0xff]
      %v1630 = vld [vmem:[%s1258 + $0x169] sm:$0xff]
      %v1631 = vld [vmem:[%s1258 + $0x171] sm:$0xff]
      %v1632 = vld [vmem:[%s1 + $0x10] sm:$0xf]
      %v1633 = vld [vmem:[#allocation2] sm:$0xff]
      %v1634 = vld [vmem:[#allocation2 + $0x8] sm:$0xff]
      %v1635 = vld [vmem:[#allocation2 + $0x10] sm:$0xff]
      %v1636 = vld [vmem:[#allocation2 + $0x18] sm:$0xff]
      %v1637 = vld [vmem:[#allocation2 + $0x20] sm:$0xff]
      %v1638 = vld [vmem:[#allocation2 + $0x28] sm:$0xff]
      %v1639 = vld [vmem:[#allocation2 + $0x30] sm:$0xff]
      %v1640 = vld [vmem:[#allocation2 + $0x38] sm:$0xff]
      %v1641 = vld [vmem:[#allocation2 + $0x40] sm:$0xff]
      %v1642 = vld [vmem:[#allocation2 + $0x48] sm:$0xff]
      %v1643 = vld [vmem:[#allocation2 + $0x50] sm:$0xff]
      %v1644 = vld [vmem:[#allocation2 + $0x58] sm:$0xff]
      %v1645 = vld [vmem:[#allocation2 + $0x60] sm:$0xff]
      %v1646 = vld [vmem:[#allocation2 + $0x68] sm:$0xff]
      %v1647 = vld [vmem:[#allocation2 + $0x70] sm:$0xff]
      %v1648 = vld [vmem:[#allocation2 + $0x78] sm:$0xff]
      %v1649 = vld [vmem:[#allocation2 + $0x80] sm:$0xff]
      %v1650 = vld [vmem:[#allocation2 + $0x88] sm:$0xff]
      %v1651 = vld [vmem:[#allocation2 + $0x90] sm:$0xff]
      %v1652 = vld [vmem:[#allocation2 + $0x98] sm:$0xff]
      %v1653 = vld [vmem:[#allocation2 + $0xa0] sm:$0xff]
      %v1654 = vld [vmem:[#allocation2 + $0xa8] sm:$0xff]
      %v1655 = vld [vmem:[#allocation2 + $0xb0] sm:$0xff]
      %v1656 = vld [vmem:[#allocation2 + $0xb8] sm:$0xff]
      %v1657 = vld [vmem:[#allocation2 + $0xc0] sm:$0xff]
      %v1658 = vld [vmem:[#allocation2 + $0xc8] sm:$0xff]
      %v1659 = vld [vmem:[#allocation2 + $0xd0] sm:$0xff]
      %v1660 = vld [vmem:[#allocation2 + $0xd8] sm:$0xff]
      %v1661 = vld [vmem:[#allocation2 + $0xe0] sm:$0xff]
      %v1662 = vld [vmem:[#allocation2 + $0xe8] sm:$0xff]
      %v1663 = vld [vmem:[#allocation2 + $0xf0] sm:$0xff]
      %v1664 = vld [vmem:[#allocation2 + $0xf8] sm:$0xff]
      %v1666 = vsel %vm296, %v1600, 0
      %v1669 = vsel %vm296, %v1601, 0
      %v1672 = vsel %vm296, %v1602, 0
      %v1675 = vsel %vm296, %v1603, 0
      %v1678 = vsel %vm296, %v1604, 0
      %v1681 = vsel %vm296, %v1605, 0
      %v1684 = vsel %vm296, %v1606, 0
      %v1687 = vsel %vm296, %v1607, 0
      %v1690 = vsel %vm296, %v1608, 0
      %v1693 = vsel %vm296, %v1609, 0
      %v1696 = vsel %vm296, %v1610, 0
      %v1699 = vsel %vm296, %v1611, 0
      %v1702 = vsel %vm296, %v1612, 0
      %v1705 = vsel %vm296, %v1613, 0
      %v1708 = vsel %vm296, %v1614, 0
      %v1711 = vsel %vm296, %v1615, 0
      %v1714 = vsel %vm296, %v1616, 0
      %v1717 = vsel %vm296, %v1617, 0
      %v1720 = vsel %vm296, %v1618, 0
      %v1723 = vsel %vm296, %v1619, 0
      %v1726 = vsel %vm296, %v1620, 0
      %v1729 = vsel %vm296, %v1621, 0
      %v1732 = vsel %vm296, %v1622, 0
      %v1735 = vsel %vm296, %v1623, 0
      %v1738 = vsel %vm296, %v1624, 0
      %v1741 = vsel %vm296, %v1625, 0
      %v1744 = vsel %vm296, %v1626, 0
      %v1747 = vsel %vm296, %v1627, 0
      %v1750 = vsel %vm296, %v1628, 0
      %v1753 = vsel %vm296, %v1629, 0
      %v1756 = vsel %vm296, %v1630, 0
      %v1759 = vsel %vm296, %v1631, 0
      %v1762 = vsel %vm393, %v1632, 0
      %1764 = vmatpush.msra.mxu0 0.0
      %1765 = vmatpush.msra.mxu0 0.0
      %1766 = vmatpush.msra.mxu0 0.0
      %1767 = vmatpush.msra.mxu0 0.0
      %1768 = vmatpush.msra.mxu0 0.0
      %1769 = vmatpush.msra.mxu0 0.0
      %1770 = vmatpush.msra.mxu0 0.0
      %1771 = vmatpush.msra.mxu0 0.0
      %1772 = vmatpush.msra.mxu0 0.0
      %1773 = vmatpush.msra.mxu0 0.0
      %1774 = vmatpush.msra.mxu0 0.0
      %1775 = vmatpush.msra.mxu0 0.0
      %1776 = vmatpush.msra.mxu0 0.0
      %1777 = vmatpush.msra.mxu0 0.0
      %1778 = vmatpush.msra.mxu0 0.0
      %1779 = vmatpush.msra.mxu0 %v1762
      %1780 = vmatmul.f32.gmra.mxu0 %v1666
      %v1781 = vpop.f32.mrf.mxu0
      %v1782 = vadd.f32 0.0, %v1781
      %1783 = vmatmul.f32.gmra.mxu0 %v1669
      %v1784 = vpop.f32.mrf.mxu0
      %v1785 = vadd.f32 0.0, %v1784
      %1786 = vmatmul.f32.gmra.mxu0 %v1672
      %v1787 = vpop.f32.mrf.mxu0
      %v1788 = vadd.f32 0.0, %v1787
      %1789 = vmatmul.f32.gmra.mxu0 %v1675
      %v1790 = vpop.f32.mrf.mxu0
      %v1791 = vadd.f32 0.0, %v1790
      %1792 = vmatmul.f32.gmra.mxu0 %v1678
      %v1793 = vpop.f32.mrf.mxu0
      %v1794 = vadd.f32 0.0, %v1793
      %1795 = vmatmul.f32.gmra.mxu0 %v1681
      %v1796 = vpop.f32.mrf.mxu0
      %v1797 = vadd.f32 0.0, %v1796
      %1798 = vmatmul.f32.gmra.mxu0 %v1684
      %v1799 = vpop.f32.mrf.mxu0
      %v1800 = vadd.f32 0.0, %v1799
      %1801 = vmatmul.f32.gmra.mxu0 %v1687
      %v1802 = vpop.f32.mrf.mxu0
      %v1803 = vadd.f32 0.0, %v1802
      %1804 = vmatmul.f32.gmra.mxu0 %v1690
      %v1805 = vpop.f32.mrf.mxu0
      %v1806 = vadd.f32 0.0, %v1805
      %1807 = vmatmul.f32.gmra.mxu0 %v1693
      %v1808 = vpop.f32.mrf.mxu0
      %v1809 = vadd.f32 0.0, %v1808
      %1810 = vmatmul.f32.gmra.mxu0 %v1696
      %v1811 = vpop.f32.mrf.mxu0
      %v1812 = vadd.f32 0.0, %v1811
      %1813 = vmatmul.f32.gmra.mxu0 %v1699
      %v1814 = vpop.f32.mrf.mxu0
      %v1815 = vadd.f32 0.0, %v1814
      %1816 = vmatmul.f32.gmra.mxu0 %v1702
      %v1817 = vpop.f32.mrf.mxu0
      %v1818 = vadd.f32 0.0, %v1817
      %1819 = vmatmul.f32.gmra.mxu0 %v1705
      %v1820 = vpop.f32.mrf.mxu0
      %v1821 = vadd.f32 0.0, %v1820
      %1822 = vmatmul.f32.gmra.mxu0 %v1708
      %v1823 = vpop.f32.mrf.mxu0
      %v1824 = vadd.f32 0.0, %v1823
      %1825 = vmatmul.f32.gmra.mxu0 %v1711
      %v1826 = vpop.f32.mrf.mxu0
      %v1827 = vadd.f32 0.0, %v1826
      %1828 = vmatmul.f32.gmra.mxu0 %v1714
      %v1829 = vpop.f32.mrf.mxu0
      %v1830 = vadd.f32 0.0, %v1829
      %1831 = vmatmul.f32.gmra.mxu0 %v1717
      %v1832 = vpop.f32.mrf.mxu0
      %v1833 = vadd.f32 0.0, %v1832
      %1834 = vmatmul.f32.gmra.mxu0 %v1720
      %v1835 = vpop.f32.mrf.mxu0
      %v1836 = vadd.f32 0.0, %v1835
      %1837 = vmatmul.f32.gmra.mxu0 %v1723
      %v1838 = vpop.f32.mrf.mxu0
      %v1839 = vadd.f32 0.0, %v1838
      %1840 = vmatmul.f32.gmra.mxu0 %v1726
      %v1841 = vpop.f32.mrf.mxu0
      %v1842 = vadd.f32 0.0, %v1841
      %1843 = vmatmul.f32.gmra.mxu0 %v1729
      %v1844 = vpop.f32.mrf.mxu0
      %v1845 = vadd.f32 0.0, %v1844
      %1846 = vmatmul.f32.gmra.mxu0 %v1732
      %v1847 = vpop.f32.mrf.mxu0
      %v1848 = vadd.f32 0.0, %v1847
      %1849 = vmatmul.f32.gmra.mxu0 %v1735
      %v1850 = vpop.f32.mrf.mxu0
      %v1851 = vadd.f32 0.0, %v1850
      %1852 = vmatmul.f32.gmra.mxu0 %v1738
      %v1853 = vpop.f32.mrf.mxu0
      %v1854 = vadd.f32 0.0, %v1853
      %1855 = vmatmul.f32.gmra.mxu0 %v1741
      %v1856 = vpop.f32.mrf.mxu0
      %v1857 = vadd.f32 0.0, %v1856
      %1858 = vmatmul.f32.gmra.mxu0 %v1744
      %v1859 = vpop.f32.mrf.mxu0
      %v1860 = vadd.f32 0.0, %v1859
      %1861 = vmatmul.f32.gmra.mxu0 %v1747
      %v1862 = vpop.f32.mrf.mxu0
      %v1863 = vadd.f32 0.0, %v1862
      %1864 = vmatmul.f32.gmra.mxu0 %v1750
      %v1865 = vpop.f32.mrf.mxu0
      %v1866 = vadd.f32 0.0, %v1865
      %1867 = vmatmul.f32.gmra.mxu0 %v1753
      %v1868 = vpop.f32.mrf.mxu0
      %v1869 = vadd.f32 0.0, %v1868
      %1870 = vmatmul.f32.gmra.mxu0 %v1756
      %v1871 = vpop.f32.mrf.mxu0
      %v1872 = vadd.f32 0.0, %v1871
      %1873 = vmatmul.f32.gmra.mxu0 %v1759
      %v1874 = vpop.f32.mrf.mxu0
      %v1875 = vadd.f32 0.0, %v1874
      %1876 = vdwg.mxu0
      %v1877 = vadd.f32 %v1633, %v1782
      %v1878 = vadd.f32 %v1634, %v1785
      %v1879 = vadd.f32 %v1635, %v1788
      %v1880 = vadd.f32 %v1636, %v1791
      %v1881 = vadd.f32 %v1637, %v1794
      %v1882 = vadd.f32 %v1638, %v1797
      %v1883 = vadd.f32 %v1639, %v1800
      %v1884 = vadd.f32 %v1640, %v1803
      %v1885 = vadd.f32 %v1641, %v1806
      %v1886 = vadd.f32 %v1642, %v1809
      %v1887 = vadd.f32 %v1643, %v1812
      %v1888 = vadd.f32 %v1644, %v1815
      %v1889 = vadd.f32 %v1645, %v1818
      %v1890 = vadd.f32 %v1646, %v1821
      %v1891 = vadd.f32 %v1647, %v1824
      %v1892 = vadd.f32 %v1648, %v1827
      %v1893 = vadd.f32 %v1649, %v1830
      %v1894 = vadd.f32 %v1650, %v1833
      %v1895 = vadd.f32 %v1651, %v1836
      %v1896 = vadd.f32 %v1652, %v1839
      %v1897 = vadd.f32 %v1653, %v1842
      %v1898 = vadd.f32 %v1654, %v1845
      %v1899 = vadd.f32 %v1655, %v1848
      %v1900 = vadd.f32 %v1656, %v1851
      %v1901 = vadd.f32 %v1657, %v1854
      %v1902 = vadd.f32 %v1658, %v1857
      %v1903 = vadd.f32 %v1659, %v1860
      %v1904 = vadd.f32 %v1660, %v1863
      %v1905 = vadd.f32 %v1661, %v1866
      %v1906 = vadd.f32 %v1662, %v1869
      %v1907 = vadd.f32 %v1663, %v1872
      %v1908 = vadd.f32 %v1664, %v1875
      %1909 = vst [vmem:[#allocation2] sm:$0xff] %v1877
      %1910 = vst [vmem:[#allocation2 + $0x8] sm:$0xff] %v1878
      %1911 = vst [vmem:[#allocation2 + $0x10] sm:$0xff] %v1879
      %1912 = vst [vmem:[#allocation2 + $0x18] sm:$0xff] %v1880
      %1913 = vst [vmem:[#allocation2 + $0x20] sm:$0xff] %v1881
      %1914 = vst [vmem:[#allocation2 + $0x28] sm:$0xff] %v1882
      %1915 = vst [vmem:[#allocation2 + $0x30] sm:$0xff] %v1883
      %1916 = vst [vmem:[#allocation2 + $0x38] sm:$0xff] %v1884
      %1917 = vst [vmem:[#allocation2 + $0x40] sm:$0xff] %v1885
      %1918 = vst [vmem:[#allocation2 + $0x48] sm:$0xff] %v1886
      %1919 = vst [vmem:[#allocation2 + $0x50] sm:$0xff] %v1887
      %1920 = vst [vmem:[#allocation2 + $0x58] sm:$0xff] %v1888
      %1921 = vst [vmem:[#allocation2 + $0x60] sm:$0xff] %v1889
      %1922 = vst [vmem:[#allocation2 + $0x68] sm:$0xff] %v1890
      %1923 = vst [vmem:[#allocation2 + $0x70] sm:$0xff] %v1891
      %1924 = vst [vmem:[#allocation2 + $0x78] sm:$0xff] %v1892
      %1925 = vst [vmem:[#allocation2 + $0x80] sm:$0xff] %v1893
      %1926 = vst [vmem:[#allocation2 + $0x88] sm:$0xff] %v1894
      %1927 = vst [vmem:[#allocation2 + $0x90] sm:$0xff] %v1895
      %1928 = vst [vmem:[#allocation2 + $0x98] sm:$0xff] %v1896
      %1929 = vst [vmem:[#allocation2 + $0xa0] sm:$0xff] %v1897
      %1930 = vst [vmem:[#allocation2 + $0xa8] sm:$0xff] %v1898
      %1931 = vst [vmem:[#allocation2 + $0xb0] sm:$0xff] %v1899
      %1932 = vst [vmem:[#allocation2 + $0xb8] sm:$0xff] %v1900
      %1933 = vst [vmem:[#allocation2 + $0xc0] sm:$0xff] %v1901
      %1934 = vst [vmem:[#allocation2 + $0xc8] sm:$0xff] %v1902
      %1935 = vst [vmem:[#allocation2 + $0xd0] sm:$0xff] %v1903
      %1936 = vst [vmem:[#allocation2 + $0xd8] sm:$0xff] %v1904
      %1937 = vst [vmem:[#allocation2 + $0xe0] sm:$0xff] %v1905
      %1938 = vst [vmem:[#allocation2 + $0xe8] sm:$0xff] %v1906
      %1939 = vst [vmem:[#allocation2 + $0xf0] sm:$0xff] %v1907
      %1940 = vst [vmem:[#allocation2 + $0xf8] sm:$0xff] %v1908
      %v1941 = vld [vmem:[%s1258 + $0x2] sm:$0xff]
      %v1942 = vld [vmem:[%s1258 + $0xa] sm:$0xff]
      %v1943 = vld [vmem:[%s1258 + $0x1a] sm:$0xff]
      %v1944 = vld [vmem:[%s1258 + $0x22] sm:$0xff]
      %v1945 = vld [vmem:[%s1258 + $0x32] sm:$0xff]
      %v1946 = vld [vmem:[%s1258 + $0x3a] sm:$0xff]
      %v1947 = vld [vmem:[%s1258 + $0x4a] sm:$0xff]
      %v1948 = vld [vmem:[%s1258 + $0x52] sm:$0xff]
      %v1949 = vld [vmem:[%s1258 + $0x62] sm:$0xff]
      %v1950 = vld [vmem:[%s1258 + $0x6a] sm:$0xff]
      %v1951 = vld [vmem:[%s1258 + $0x7a] sm:$0xff]
      %v1952 = vld [vmem:[%s1258 + $0x82] sm:$0xff]
      %v1953 = vld [vmem:[%s1258 + $0x92] sm:$0xff]
      %v1954 = vld [vmem:[%s1258 + $0x9a] sm:$0xff]
      %v1955 = vld [vmem:[%s1258 + $0xaa] sm:$0xff]
      %v1956 = vld [vmem:[%s1258 + $0xb2] sm:$0xff]
      %v1957 = vld [vmem:[%s1258 + $0xc2] sm:$0xff]
      %v1958 = vld [vmem:[%s1258 + $0xca] sm:$0xff]
      %v1959 = vld [vmem:[%s1258 + $0xda] sm:$0xff]
      %v1960 = vld [vmem:[%s1258 + $0xe2] sm:$0xff]
      %v1961 = vld [vmem:[%s1258 + $0xf2] sm:$0xff]
      %v1962 = vld [vmem:[%s1258 + $0xfa] sm:$0xff]
      %v1963 = vld [vmem:[%s1258 + $0x10a] sm:$0xff]
      %v1964 = vld [vmem:[%s1258 + $0x112] sm:$0xff]
      %v1965 = vld [vmem:[%s1258 + $0x122] sm:$0xff]
      %v1966 = vld [vmem:[%s1258 + $0x12a] sm:$0xff]
      %v1967 = vld [vmem:[%s1258 + $0x13a] sm:$0xff]
      %v1968 = vld [vmem:[%s1258 + $0x142] sm:$0xff]
      %v1969 = vld [vmem:[%s1258 + $0x152] sm:$0xff]
      %v1970 = vld [vmem:[%s1258 + $0x15a] sm:$0xff]
      %v1971 = vld [vmem:[%s1258 + $0x16a] sm:$0xff]
      %v1972 = vld [vmem:[%s1258 + $0x172] sm:$0xff]
      %v1973 = vld [vmem:[%s1 + $0x14] sm:$0xf]
      %v1974 = vld [vmem:[#allocation2] sm:$0xff]
      %v1975 = vld [vmem:[#allocation2 + $0x8] sm:$0xff]
      %v1976 = vld [vmem:[#allocation2 + $0x10] sm:$0xff]
      %v1977 = vld [vmem:[#allocation2 + $0x18] sm:$0xff]
      %v1978 = vld [vmem:[#allocation2 + $0x20] sm:$0xff]
      %v1979 = vld [vmem:[#allocation2 + $0x28] sm:$0xff]
      %v1980 = vld [vmem:[#allocation2 + $0x30] sm:$0xff]
      %v1981 = vld [vmem:[#allocation2 + $0x38] sm:$0xff]
      %v1982 = vld [vmem:[#allocation2 + $0x40] sm:$0xff]
      %v1983 = vld [vmem:[#allocation2 + $0x48] sm:$0xff]
      %v1984 = vld [vmem:[#allocation2 + $0x50] sm:$0xff]
      %v1985 = vld [vmem:[#allocation2 + $0x58] sm:$0xff]
      %v1986 = vld [vmem:[#allocation2 + $0x60] sm:$0xff]
      %v1987 = vld [vmem:[#allocation2 + $0x68] sm:$0xff]
      %v1988 = vld [vmem:[#allocation2 + $0x70] sm:$0xff]
      %v1989 = vld [vmem:[#allocation2 + $0x78] sm:$0xff]
      %v1990 = vld [vmem:[#allocation2 + $0x80] sm:$0xff]
      %v1991 = vld [vmem:[#allocation2 + $0x88] sm:$0xff]
      %v1992 = vld [vmem:[#allocation2 + $0x90] sm:$0xff]
      %v1993 = vld [vmem:[#allocation2 + $0x98] sm:$0xff]
      %v1994 = vld [vmem:[#allocation2 + $0xa0] sm:$0xff]
      %v1995 = vld [vmem:[#allocation2 + $0xa8] sm:$0xff]
      %v1996 = vld [vmem:[#allocation2 + $0xb0] sm:$0xff]
      %v1997 = vld [vmem:[#allocation2 + $0xb8] sm:$0xff]
      %v1998 = vld [vmem:[#allocation2 + $0xc0] sm:$0xff]
      %v1999 = vld [vmem:[#allocation2 + $0xc8] sm:$0xff]
      %v2000 = vld [vmem:[#allocation2 + $0xd0] sm:$0xff]
      %v2001 = vld [vmem:[#allocation2 + $0xd8] sm:$0xff]
      %v2002 = vld [vmem:[#allocation2 + $0xe0] sm:$0xff]
      %v2003 = vld [vmem:[#allocation2 + $0xe8] sm:$0xff]
      %v2004 = vld [vmem:[#allocation2 + $0xf0] sm:$0xff]
      %v2005 = vld [vmem:[#allocation2 + $0xf8] sm:$0xff]
      %v2007 = vsel %vm296, %v1941, 0
      %v2010 = vsel %vm296, %v1942, 0
      %v2013 = vsel %vm296, %v1943, 0
      %v2016 = vsel %vm296, %v1944, 0
      %v2019 = vsel %vm296, %v1945, 0
      %v2022 = vsel %vm296, %v1946, 0
      %v2025 = vsel %vm296, %v1947, 0
      %v2028 = vsel %vm296, %v1948, 0
      %v2031 = vsel %vm296, %v1949, 0
      %v2034 = vsel %vm296, %v1950, 0
      %v2037 = vsel %vm296, %v1951, 0
      %v2040 = vsel %vm296, %v1952, 0
      %v2043 = vsel %vm296, %v1953, 0
      %v2046 = vsel %vm296, %v1954, 0
      %v2049 = vsel %vm296, %v1955, 0
      %v2052 = vsel %vm296, %v1956, 0
      %v2055 = vsel %vm296, %v1957, 0
      %v2058 = vsel %vm296, %v1958, 0
      %v2061 = vsel %vm296, %v1959, 0
      %v2064 = vsel %vm296, %v1960, 0
      %v2067 = vsel %vm296, %v1961, 0
      %v2070 = vsel %vm296, %v1962, 0
      %v2073 = vsel %vm296, %v1963, 0
      %v2076 = vsel %vm296, %v1964, 0
      %v2079 = vsel %vm296, %v1965, 0
      %v2082 = vsel %vm296, %v1966, 0
      %v2085 = vsel %vm296, %v1967, 0
      %v2088 = vsel %vm296, %v1968, 0
      %v2091 = vsel %vm296, %v1969, 0
      %v2094 = vsel %vm296, %v1970, 0
      %v2097 = vsel %vm296, %v1971, 0
      %v2100 = vsel %vm296, %v1972, 0
      %v2103 = vsel %vm393, %v1973, 0
      %2105 = vmatpush.msra.mxu0 0.0
      %2106 = vmatpush.msra.mxu0 0.0
      %2107 = vmatpush.msra.mxu0 0.0
      %2108 = vmatpush.msra.mxu0 0.0
      %2109 = vmatpush.msra.mxu0 0.0
      %2110 = vmatpush.msra.mxu0 0.0
      %2111 = vmatpush.msra.mxu0 0.0
      %2112 = vmatpush.msra.mxu0 0.0
      %2113 = vmatpush.msra.mxu0 0.0
      %2114 = vmatpush.msra.mxu0 0.0
      %2115 = vmatpush.msra.mxu0 0.0
      %2116 = vmatpush.msra.mxu0 0.0
      %2117 = vmatpush.msra.mxu0 0.0
      %2118 = vmatpush.msra.mxu0 0.0
      %2119 = vmatpush.msra.mxu0 0.0
      %2120 = vmatpush.msra.mxu0 %v2103
      %2121 = vmatmul.f32.gmra.mxu0 %v2007
      %v2122 = vpop.f32.mrf.mxu0
      %v2123 = vadd.f32 0.0, %v2122
      %2124 = vmatmul.f32.gmra.mxu0 %v2010
      %v2125 = vpop.f32.mrf.mxu0
      %v2126 = vadd.f32 0.0, %v2125
      %2127 = vmatmul.f32.gmra.mxu0 %v2013
      %v2128 = vpop.f32.mrf.mxu0
      %v2129 = vadd.f32 0.0, %v2128
      %2130 = vmatmul.f32.gmra.mxu0 %v2016
      %v2131 = vpop.f32.mrf.mxu0
      %v2132 = vadd.f32 0.0, %v2131
      %2133 = vmatmul.f32.gmra.mxu0 %v2019
      %v2134 = vpop.f32.mrf.mxu0
      %v2135 = vadd.f32 0.0, %v2134
      %2136 = vmatmul.f32.gmra.mxu0 %v2022
      %v2137 = vpop.f32.mrf.mxu0
      %v2138 = vadd.f32 0.0, %v2137
      %2139 = vmatmul.f32.gmra.mxu0 %v2025
      %v2140 = vpop.f32.mrf.mxu0
      %v2141 = vadd.f32 0.0, %v2140
      %2142 = vmatmul.f32.gmra.mxu0 %v2028
      %v2143 = vpop.f32.mrf.mxu0
      %v2144 = vadd.f32 0.0, %v2143
      %2145 = vmatmul.f32.gmra.mxu0 %v2031
      %v2146 = vpop.f32.mrf.mxu0
      %v2147 = vadd.f32 0.0, %v2146
      %2148 = vmatmul.f32.gmra.mxu0 %v2034
      %v2149 = vpop.f32.mrf.mxu0
      %v2150 = vadd.f32 0.0, %v2149
      %2151 = vmatmul.f32.gmra.mxu0 %v2037
      %v2152 = vpop.f32.mrf.mxu0
      %v2153 = vadd.f32 0.0, %v2152
      %2154 = vmatmul.f32.gmra.mxu0 %v2040
      %v2155 = vpop.f32.mrf.mxu0
      %v2156 = vadd.f32 0.0, %v2155
      %2157 = vmatmul.f32.gmra.mxu0 %v2043
      %v2158 = vpop.f32.mrf.mxu0
      %v2159 = vadd.f32 0.0, %v2158
      %2160 = vmatmul.f32.gmra.mxu0 %v2046
      %v2161 = vpop.f32.mrf.mxu0
      %v2162 = vadd.f32 0.0, %v2161
      %2163 = vmatmul.f32.gmra.mxu0 %v2049
      %v2164 = vpop.f32.mrf.mxu0
      %v2165 = vadd.f32 0.0, %v2164
      %2166 = vmatmul.f32.gmra.mxu0 %v2052
      %v2167 = vpop.f32.mrf.mxu0
      %v2168 = vadd.f32 0.0, %v2167
      %2169 = vmatmul.f32.gmra.mxu0 %v2055
      %v2170 = vpop.f32.mrf.mxu0
      %v2171 = vadd.f32 0.0, %v2170
      %2172 = vmatmul.f32.gmra.mxu0 %v2058
      %v2173 = vpop.f32.mrf.mxu0
      %v2174 = vadd.f32 0.0, %v2173
      %2175 = vmatmul.f32.gmra.mxu0 %v2061
      %v2176 = vpop.f32.mrf.mxu0
      %v2177 = vadd.f32 0.0, %v2176
      %2178 = vmatmul.f32.gmra.mxu0 %v2064
      %v2179 = vpop.f32.mrf.mxu0
      %v2180 = vadd.f32 0.0, %v2179
      %2181 = vmatmul.f32.gmra.mxu0 %v2067
      %v2182 = vpop.f32.mrf.mxu0
      %v2183 = vadd.f32 0.0, %v2182
      %2184 = vmatmul.f32.gmra.mxu0 %v2070
      %v2185 = vpop.f32.mrf.mxu0
      %v2186 = vadd.f32 0.0, %v2185
      %2187 = vmatmul.f32.gmra.mxu0 %v2073
      %v2188 = vpop.f32.mrf.mxu0
      %v2189 = vadd.f32 0.0, %v2188
      %2190 = vmatmul.f32.gmra.mxu0 %v2076
      %v2191 = vpop.f32.mrf.mxu0
      %v2192 = vadd.f32 0.0, %v2191
      %2193 = vmatmul.f32.gmra.mxu0 %v2079
      %v2194 = vpop.f32.mrf.mxu0
      %v2195 = vadd.f32 0.0, %v2194
      %2196 = vmatmul.f32.gmra.mxu0 %v2082
      %v2197 = vpop.f32.mrf.mxu0
      %v2198 = vadd.f32 0.0, %v2197
      %2199 = vmatmul.f32.gmra.mxu0 %v2085
      %v2200 = vpop.f32.mrf.mxu0
      %v2201 = vadd.f32 0.0, %v2200
      %2202 = vmatmul.f32.gmra.mxu0 %v2088
      %v2203 = vpop.f32.mrf.mxu0
      %v2204 = vadd.f32 0.0, %v2203
      %2205 = vmatmul.f32.gmra.mxu0 %v2091
      %v2206 = vpop.f32.mrf.mxu0
      %v2207 = vadd.f32 0.0, %v2206
      %2208 = vmatmul.f32.gmra.mxu0 %v2094
      %v2209 = vpop.f32.mrf.mxu0
      %v2210 = vadd.f32 0.0, %v2209
      %2211 = vmatmul.f32.gmra.mxu0 %v2097
      %v2212 = vpop.f32.mrf.mxu0
      %v2213 = vadd.f32 0.0, %v2212
      %2214 = vmatmul.f32.gmra.mxu0 %v2100
      %v2215 = vpop.f32.mrf.mxu0
      %v2216 = vadd.f32 0.0, %v2215
      %2217 = vdwg.mxu0
      %v2218 = vadd.f32 %v1974, %v2123
      %v2219 = vadd.f32 %v1975, %v2126
      %v2220 = vadd.f32 %v1976, %v2129
      %v2221 = vadd.f32 %v1977, %v2132
      %v2222 = vadd.f32 %v1978, %v2135
      %v2223 = vadd.f32 %v1979, %v2138
      %v2224 = vadd.f32 %v1980, %v2141
      %v2225 = vadd.f32 %v1981, %v2144
      %v2226 = vadd.f32 %v1982, %v2147
      %v2227 = vadd.f32 %v1983, %v2150
      %v2228 = vadd.f32 %v1984, %v2153
      %v2229 = vadd.f32 %v1985, %v2156
      %v2230 = vadd.f32 %v1986, %v2159
      %v2231 = vadd.f32 %v1987, %v2162
      %v2232 = vadd.f32 %v1988, %v2165
      %v2233 = vadd.f32 %v1989, %v2168
      %v2234 = vadd.f32 %v1990, %v2171
      %v2235 = vadd.f32 %v1991, %v2174
      %v2236 = vadd.f32 %v1992, %v2177
      %v2237 = vadd.f32 %v1993, %v2180
      %v2238 = vadd.f32 %v1994, %v2183
      %v2239 = vadd.f32 %v1995, %v2186
      %v2240 = vadd.f32 %v1996, %v2189
      %v2241 = vadd.f32 %v1997, %v2192
      %v2242 = vadd.f32 %v1998, %v2195
      %v2243 = vadd.f32 %v1999, %v2198
      %v2244 = vadd.f32 %v2000, %v2201
      %v2245 = vadd.f32 %v2001, %v2204
      %v2246 = vadd.f32 %v2002, %v2207
      %v2247 = vadd.f32 %v2003, %v2210
      %v2248 = vadd.f32 %v2004, %v2213
      %v2249 = vadd.f32 %v2005, %v2216
      %2250 = vst [vmem:[#allocation2] sm:$0xff] %v2218
      %2251 = vst [vmem:[#allocation2 + $0x8] sm:$0xff] %v2219
      %2252 = vst [vmem:[#allocation2 + $0x10] sm:$0xff] %v2220
      %2253 = vst [vmem:[#allocation2 + $0x18] sm:$0xff] %v2221
      %2254 = vst [vmem:[#allocation2 + $0x20] sm:$0xff] %v2222
      %2255 = vst [vmem:[#allocation2 + $0x28] sm:$0xff] %v2223
      %2256 = vst [vmem:[#allocation2 + $0x30] sm:$0xff] %v2224
      %2257 = vst [vmem:[#allocation2 + $0x38] sm:$0xff] %v2225
      %2258 = vst [vmem:[#allocation2 + $0x40] sm:$0xff] %v2226
      %2259 = vst [vmem:[#allocation2 + $0x48] sm:$0xff] %v2227
      %2260 = vst [vmem:[#allocation2 + $0x50] sm:$0xff] %v2228
      %2261 = vst [vmem:[#allocation2 + $0x58] sm:$0xff] %v2229
      %2262 = vst [vmem:[#allocation2 + $0x60] sm:$0xff] %v2230
      %2263 = vst [vmem:[#allocation2 + $0x68] sm:$0xff] %v2231
      %2264 = vst [vmem:[#allocation2 + $0x70] sm:$0xff] %v2232
      %2265 = vst [vmem:[#allocation2 + $0x78] sm:$0xff] %v2233
      %2266 = vst [vmem:[#allocation2 + $0x80] sm:$0xff] %v2234
      %2267 = vst [vmem:[#allocation2 + $0x88] sm:$0xff] %v2235
      %2268 = vst [vmem:[#allocation2 + $0x90] sm:$0xff] %v2236
      %2269 = vst [vmem:[#allocation2 + $0x98] sm:$0xff] %v2237
      %2270 = vst [vmem:[#allocation2 + $0xa0] sm:$0xff] %v2238
      %2271 = vst [vmem:[#allocation2 + $0xa8] sm:$0xff] %v2239
      %2272 = vst [vmem:[#allocation2 + $0xb0] sm:$0xff] %v2240
      %2273 = vst [vmem:[#allocation2 + $0xb8] sm:$0xff] %v2241
      %2274 = vst [vmem:[#allocation2 + $0xc0] sm:$0xff] %v2242
      %2275 = vst [vmem:[#allocation2 + $0xc8] sm:$0xff] %v2243
      %2276 = vst [vmem:[#allocation2 + $0xd0] sm:$0xff] %v2244
      %2277 = vst [vmem:[#allocation2 + $0xd8] sm:$0xff] %v2245
      %2278 = vst [vmem:[#allocation2 + $0xe0] sm:$0xff] %v2246
      %2279 = vst [vmem:[#allocation2 + $0xe8] sm:$0xff] %v2247
      %2280 = vst [vmem:[#allocation2 + $0xf0] sm:$0xff] %v2248
      %2281 = vst [vmem:[#allocation2 + $0xf8] sm:$0xff] %v2249
      %s2282 = sadd.s32 %s196, 2
      %s2283 = smul.u32 %s2282, 24
      %s2284 = scalar_lea.vmem %s184, %s2283
      %v2285 = vld [vmem:[%s2284] sm:$0xff]
      %v2286 = vld [vmem:[%s2284 + $0x8] sm:$0xff]
      %v2287 = vld [vmem:[%s2284 + $0x18] sm:$0xff]
      %v2288 = vld [vmem:[%s2284 + $0x20] sm:$0xff]
      %v2289 = vld [vmem:[%s2284 + $0x30] sm:$0xff]
      %v2290 = vld [vmem:[%s2284 + $0x38] sm:$0xff]
      %v2291 = vld [vmem:[%s2284 + $0x48] sm:$0xff]
      %v2292 = vld [vmem:[%s2284 + $0x50] sm:$0xff]
      %v2293 = vld [vmem:[%s2284 + $0x60] sm:$0xff]
      %v2294 = vld [vmem:[%s2284 + $0x68] sm:$0xff]
      %v2295 = vld [vmem:[%s2284 + $0x78] sm:$0xff]
      %v2296 = vld [vmem:[%s2284 + $0x80] sm:$0xff]
      %v2297 = vld [vmem:[%s2284 + $0x90] sm:$0xff]
      %v2298 = vld [vmem:[%s2284 + $0x98] sm:$0xff]
      %v2299 = vld [vmem:[%s2284 + $0xa8] sm:$0xff]
      %v2300 = vld [vmem:[%s2284 + $0xb0] sm:$0xff]
      %v2301 = vld [vmem:[%s2284 + $0xc0] sm:$0xff]
      %v2302 = vld [vmem:[%s2284 + $0xc8] sm:$0xff]
      %v2303 = vld [vmem:[%s2284 + $0xd8] sm:$0xff]
      %v2304 = vld [vmem:[%s2284 + $0xe0] sm:$0xff]
      %v2305 = vld [vmem:[%s2284 + $0xf0] sm:$0xff]
      %v2306 = vld [vmem:[%s2284 + $0xf8] sm:$0xff]
      %v2307 = vld [vmem:[%s2284 + $0x108] sm:$0xff]
      %v2308 = vld [vmem:[%s2284 + $0x110] sm:$0xff]
      %v2309 = vld [vmem:[%s2284 + $0x120] sm:$0xff]
      %v2310 = vld [vmem:[%s2284 + $0x128] sm:$0xff]
      %v2311 = vld [vmem:[%s2284 + $0x138] sm:$0xff]
      %v2312 = vld [vmem:[%s2284 + $0x140] sm:$0xff]
      %v2313 = vld [vmem:[%s2284 + $0x150] sm:$0xff]
      %v2314 = vld [vmem:[%s2284 + $0x158] sm:$0xff]
      %v2315 = vld [vmem:[%s2284 + $0x168] sm:$0xff]
      %v2316 = vld [vmem:[%s2284 + $0x170] sm:$0xff]
      %v2317 = vld [vmem:[%s1 + $0x18] sm:$0xf]
      %v2318 = vld [vmem:[#allocation2] sm:$0xff]
      %v2319 = vld [vmem:[#allocation2 + $0x8] sm:$0xff]
      %v2320 = vld [vmem:[#allocation2 + $0x10] sm:$0xff]
      %v2321 = vld [vmem:[#allocation2 + $0x18] sm:$0xff]
      %v2322 = vld [vmem:[#allocation2 + $0x20] sm:$0xff]
      %v2323 = vld [vmem:[#allocation2 + $0x28] sm:$0xff]
      %v2324 = vld [vmem:[#allocation2 + $0x30] sm:$0xff]
      %v2325 = vld [vmem:[#allocation2 + $0x38] sm:$0xff]
      %v2326 = vld [vmem:[#allocation2 + $0x40] sm:$0xff]
      %v2327 = vld [vmem:[#allocation2 + $0x48] sm:$0xff]
      %v2328 = vld [vmem:[#allocation2 + $0x50] sm:$0xff]
      %v2329 = vld [vmem:[#allocation2 + $0x58] sm:$0xff]
      %v2330 = vld [vmem:[#allocation2 + $0x60] sm:$0xff]
      %v2331 = vld [vmem:[#allocation2 + $0x68] sm:$0xff]
      %v2332 = vld [vmem:[#allocation2 + $0x70] sm:$0xff]
      %v2333 = vld [vmem:[#allocation2 + $0x78] sm:$0xff]
      %v2334 = vld [vmem:[#allocation2 + $0x80] sm:$0xff]
      %v2335 = vld [vmem:[#allocation2 + $0x88] sm:$0xff]
      %v2336 = vld [vmem:[#allocation2 + $0x90] sm:$0xff]
      %v2337 = vld [vmem:[#allocation2 + $0x98] sm:$0xff]
      %v2338 = vld [vmem:[#allocation2 + $0xa0] sm:$0xff]
      %v2339 = vld [vmem:[#allocation2 + $0xa8] sm:$0xff]
      %v2340 = vld [vmem:[#allocation2 + $0xb0] sm:$0xff]
      %v2341 = vld [vmem:[#allocation2 + $0xb8] sm:$0xff]
      %v2342 = vld [vmem:[#allocation2 + $0xc0] sm:$0xff]
      %v2343 = vld [vmem:[#allocation2 + $0xc8] sm:$0xff]
      %v2344 = vld [vmem:[#allocation2 + $0xd0] sm:$0xff]
      %v2345 = vld [vmem:[#allocation2 + $0xd8] sm:$0xff]
      %v2346 = vld [vmem:[#allocation2 + $0xe0] sm:$0xff]
      %v2347 = vld [vmem:[#allocation2 + $0xe8] sm:$0xff]
      %v2348 = vld [vmem:[#allocation2 + $0xf0] sm:$0xff]
      %v2349 = vld [vmem:[#allocation2 + $0xf8] sm:$0xff]
      %v2351 = vsel %vm296, %v2285, 0
      %v2354 = vsel %vm296, %v2286, 0
      %v2357 = vsel %vm296, %v2287, 0
      %v2360 = vsel %vm296, %v2288, 0
      %v2363 = vsel %vm296, %v2289, 0
      %v2366 = vsel %vm296, %v2290, 0
      %v2369 = vsel %vm296, %v2291, 0
      %v2372 = vsel %vm296, %v2292, 0
      %v2375 = vsel %vm296, %v2293, 0
      %v2378 = vsel %vm296, %v2294, 0
      %v2381 = vsel %vm296, %v2295, 0
      %v2384 = vsel %vm296, %v2296, 0
      %v2387 = vsel %vm296, %v2297, 0
      %v2390 = vsel %vm296, %v2298, 0
      %v2393 = vsel %vm296, %v2299, 0
      %v2396 = vsel %vm296, %v2300, 0
      %v2399 = vsel %vm296, %v2301, 0
      %v2402 = vsel %vm296, %v2302, 0
      %v2405 = vsel %vm296, %v2303, 0
      %v2408 = vsel %vm296, %v2304, 0
      %v2411 = vsel %vm296, %v2305, 0
      %v2414 = vsel %vm296, %v2306, 0
      %v2417 = vsel %vm296, %v2307, 0
      %v2420 = vsel %vm296, %v2308, 0
      %v2423 = vsel %vm296, %v2309, 0
      %v2426 = vsel %vm296, %v2310, 0
      %v2429 = vsel %vm296, %v2311, 0
      %v2432 = vsel %vm296, %v2312, 0
      %v2435 = vsel %vm296, %v2313, 0
      %v2438 = vsel %vm296, %v2314, 0
      %v2441 = vsel %vm296, %v2315, 0
      %v2444 = vsel %vm296, %v2316, 0
      %v2447 = vsel %vm393, %v2317, 0
      %2449 = vmatpush.msra.mxu0 0.0
      %2450 = vmatpush.msra.mxu0 0.0
      %2451 = vmatpush.msra.mxu0 0.0
      %2452 = vmatpush.msra.mxu0 0.0
      %2453 = vmatpush.msra.mxu0 0.0
      %2454 = vmatpush.msra.mxu0 0.0
      %2455 = vmatpush.msra.mxu0 0.0
      %2456 = vmatpush.msra.mxu0 0.0
      %2457 = vmatpush.msra.mxu0 0.0
      %2458 = vmatpush.msra.mxu0 0.0
      %2459 = vmatpush.msra.mxu0 0.0
      %2460 = vmatpush.msra.mxu0 0.0
      %2461 = vmatpush.msra.mxu0 0.0
      %2462 = vmatpush.msra.mxu0 0.0
      %2463 = vmatpush.msra.mxu0 0.0
      %2464 = vmatpush.msra.mxu0 %v2447
      %2465 = vmatmul.f32.gmra.mxu0 %v2351
      %v2466 = vpop.f32.mrf.mxu0
      %v2467 = vadd.f32 0.0, %v2466
      %2468 = vmatmul.f32.gmra.mxu0 %v2354
      %v2469 = vpop.f32.mrf.mxu0
      %v2470 = vadd.f32 0.0, %v2469
      %2471 = vmatmul.f32.gmra.mxu0 %v2357
      %v2472 = vpop.f32.mrf.mxu0
      %v2473 = vadd.f32 0.0, %v2472
      %2474 = vmatmul.f32.gmra.mxu0 %v2360
      %v2475 = vpop.f32.mrf.mxu0
      %v2476 = vadd.f32 0.0, %v2475
      %2477 = vmatmul.f32.gmra.mxu0 %v2363
      %v2478 = vpop.f32.mrf.mxu0
      %v2479 = vadd.f32 0.0, %v2478
      %2480 = vmatmul.f32.gmra.mxu0 %v2366
      %v2481 = vpop.f32.mrf.mxu0
      %v2482 = vadd.f32 0.0, %v2481
      %2483 = vmatmul.f32.gmra.mxu0 %v2369
      %v2484 = vpop.f32.mrf.mxu0
      %v2485 = vadd.f32 0.0, %v2484
      %2486 = vmatmul.f32.gmra.mxu0 %v2372
      %v2487 = vpop.f32.mrf.mxu0
      %v2488 = vadd.f32 0.0, %v2487
      %2489 = vmatmul.f32.gmra.mxu0 %v2375
      %v2490 = vpop.f32.mrf.mxu0
      %v2491 = vadd.f32 0.0, %v2490
      %2492 = vmatmul.f32.gmra.mxu0 %v2378
      %v2493 = vpop.f32.mrf.mxu0
      %v2494 = vadd.f32 0.0, %v2493
      %2495 = vmatmul.f32.gmra.mxu0 %v2381
      %v2496 = vpop.f32.mrf.mxu0
      %v2497 = vadd.f32 0.0, %v2496
      %2498 = vmatmul.f32.gmra.mxu0 %v2384
      %v2499 = vpop.f32.mrf.mxu0
      %v2500 = vadd.f32 0.0, %v2499
      %2501 = vmatmul.f32.gmra.mxu0 %v2387
      %v2502 = vpop.f32.mrf.mxu0
      %v2503 = vadd.f32 0.0, %v2502
      %2504 = vmatmul.f32.gmra.mxu0 %v2390
      %v2505 = vpop.f32.mrf.mxu0
      %v2506 = vadd.f32 0.0, %v2505
      %2507 = vmatmul.f32.gmra.mxu0 %v2393
      %v2508 = vpop.f32.mrf.mxu0
      %v2509 = vadd.f32 0.0, %v2508
      %2510 = vmatmul.f32.gmra.mxu0 %v2396
      %v2511 = vpop.f32.mrf.mxu0
      %v2512 = vadd.f32 0.0, %v2511
      %2513 = vmatmul.f32.gmra.mxu0 %v2399
      %v2514 = vpop.f32.mrf.mxu0
      %v2515 = vadd.f32 0.0, %v2514
      %2516 = vmatmul.f32.gmra.mxu0 %v2402
      %v2517 = vpop.f32.mrf.mxu0
      %v2518 = vadd.f32 0.0, %v2517
      %2519 = vmatmul.f32.gmra.mxu0 %v2405
      %v2520 = vpop.f32.mrf.mxu0
      %v2521 = vadd.f32 0.0, %v2520
      %2522 = vmatmul.f32.gmra.mxu0 %v2408
      %v2523 = vpop.f32.mrf.mxu0
      %v2524 = vadd.f32 0.0, %v2523
      %2525 = vmatmul.f32.gmra.mxu0 %v2411
      %v2526 = vpop.f32.mrf.mxu0
      %v2527 = vadd.f32 0.0, %v2526
      %2528 = vmatmul.f32.gmra.mxu0 %v2414
      %v2529 = vpop.f32.mrf.mxu0
      %v2530 = vadd.f32 0.0, %v2529
      %2531 = vmatmul.f32.gmra.mxu0 %v2417
      %v2532 = vpop.f32.mrf.mxu0
      %v2533 = vadd.f32 0.0, %v2532
      %2534 = vmatmul.f32.gmra.mxu0 %v2420
      %v2535 = vpop.f32.mrf.mxu0
      %v2536 = vadd.f32 0.0, %v2535
      %2537 = vmatmul.f32.gmra.mxu0 %v2423
      %v2538 = vpop.f32.mrf.mxu0
      %v2539 = vadd.f32 0.0, %v2538
      %2540 = vmatmul.f32.gmra.mxu0 %v2426
      %v2541 = vpop.f32.mrf.mxu0
      %v2542 = vadd.f32 0.0, %v2541
      %2543 = vmatmul.f32.gmra.mxu0 %v2429
      %v2544 = vpop.f32.mrf.mxu0
      %v2545 = vadd.f32 0.0, %v2544
      %2546 = vmatmul.f32.gmra.mxu0 %v2432
      %v2547 = vpop.f32.mrf.mxu0
      %v2548 = vadd.f32 0.0, %v2547
      %2549 = vmatmul.f32.gmra.mxu0 %v2435
      %v2550 = vpop.f32.mrf.mxu0
      %v2551 = vadd.f32 0.0, %v2550
      %2552 = vmatmul.f32.gmra.mxu0 %v2438
      %v2553 = vpop.f32.mrf.mxu0
      %v2554 = vadd.f32 0.0, %v2553
      %2555 = vmatmul.f32.gmra.mxu0 %v2441
      %v2556 = vpop.f32.mrf.mxu0
      %v2557 = vadd.f32 0.0, %v2556
      %2558 = vmatmul.f32.gmra.mxu0 %v2444
      %v2559 = vpop.f32.mrf.mxu0
      %v2560 = vadd.f32 0.0, %v2559
      %2561 = vdwg.mxu0
      %v2562 = vadd.f32 %v2318, %v2467
      %v2563 = vadd.f32 %v2319, %v2470
      %v2564 = vadd.f32 %v2320, %v2473
      %v2565 = vadd.f32 %v2321, %v2476
      %v2566 = vadd.f32 %v2322, %v2479
      %v2567 = vadd.f32 %v2323, %v2482
      %v2568 = vadd.f32 %v2324, %v2485
      %v2569 = vadd.f32 %v2325, %v2488
      %v2570 = vadd.f32 %v2326, %v2491
      %v2571 = vadd.f32 %v2327, %v2494
      %v2572 = vadd.f32 %v2328, %v2497
      %v2573 = vadd.f32 %v2329, %v2500
      %v2574 = vadd.f32 %v2330, %v2503
      %v2575 = vadd.f32 %v2331, %v2506
      %v2576 = vadd.f32 %v2332, %v2509
      %v2577 = vadd.f32 %v2333, %v2512
      %v2578 = vadd.f32 %v2334, %v2515
      %v2579 = vadd.f32 %v2335, %v2518
      %v2580 = vadd.f32 %v2336, %v2521
      %v2581 = vadd.f32 %v2337, %v2524
      %v2582 = vadd.f32 %v2338, %v2527
      %v2583 = vadd.f32 %v2339, %v2530
      %v2584 = vadd.f32 %v2340, %v2533
      %v2585 = vadd.f32 %v2341, %v2536
      %v2586 = vadd.f32 %v2342, %v2539
      %v2587 = vadd.f32 %v2343, %v2542
      %v2588 = vadd.f32 %v2344, %v2545
      %v2589 = vadd.f32 %v2345, %v2548
      %v2590 = vadd.f32 %v2346, %v2551
      %v2591 = vadd.f32 %v2347, %v2554
      %v2592 = vadd.f32 %v2348, %v2557
      %v2593 = vadd.f32 %v2349, %v2560
      %2594 = vst [vmem:[#allocation2] sm:$0xff] %v2562
      %2595 = vst [vmem:[#allocation2 + $0x8] sm:$0xff] %v2563
      %2596 = vst [vmem:[#allocation2 + $0x10] sm:$0xff] %v2564
      %2597 = vst [vmem:[#allocation2 + $0x18] sm:$0xff] %v2565
      %2598 = vst [vmem:[#allocation2 + $0x20] sm:$0xff] %v2566
      %2599 = vst [vmem:[#allocation2 + $0x28] sm:$0xff] %v2567
      %2600 = vst [vmem:[#allocation2 + $0x30] sm:$0xff] %v2568
      %2601 = vst [vmem:[#allocation2 + $0x38] sm:$0xff] %v2569
      %2602 = vst [vmem:[#allocation2 + $0x40] sm:$0xff] %v2570
      %2603 = vst [vmem:[#allocation2 + $0x48] sm:$0xff] %v2571
      %2604 = vst [vmem:[#allocation2 + $0x50] sm:$0xff] %v2572
      %2605 = vst [vmem:[#allocation2 + $0x58] sm:$0xff] %v2573
      %2606 = vst [vmem:[#allocation2 + $0x60] sm:$0xff] %v2574
      %2607 = vst [vmem:[#allocation2 + $0x68] sm:$0xff] %v2575
      %2608 = vst [vmem:[#allocation2 + $0x70] sm:$0xff] %v2576
      %2609 = vst [vmem:[#allocation2 + $0x78] sm:$0xff] %v2577
      %2610 = vst [vmem:[#allocation2 + $0x80] sm:$0xff] %v2578
      %2611 = vst [vmem:[#allocation2 + $0x88] sm:$0xff] %v2579
      %2612 = vst [vmem:[#allocation2 + $0x90] sm:$0xff] %v2580
      %2613 = vst [vmem:[#allocation2 + $0x98] sm:$0xff] %v2581
      %2614 = vst [vmem:[#allocation2 + $0xa0] sm:$0xff] %v2582
      %2615 = vst [vmem:[#allocation2 + $0xa8] sm:$0xff] %v2583
      %2616 = vst [vmem:[#allocation2 + $0xb0] sm:$0xff] %v2584
      %2617 = vst [vmem:[#allocation2 + $0xb8] sm:$0xff] %v2585
      %2618 = vst [vmem:[#allocation2 + $0xc0] sm:$0xff] %v2586
      %2619 = vst [vmem:[#allocation2 + $0xc8] sm:$0xff] %v2587
      %2620 = vst [vmem:[#allocation2 + $0xd0] sm:$0xff] %v2588
      %2621 = vst [vmem:[#allocation2 + $0xd8] sm:$0xff] %v2589
      %2622 = vst [vmem:[#allocation2 + $0xe0] sm:$0xff] %v2590
      %2623 = vst [vmem:[#allocation2 + $0xe8] sm:$0xff] %v2591
      %2624 = vst [vmem:[#allocation2 + $0xf0] sm:$0xff] %v2592
      %2625 = vst [vmem:[#allocation2 + $0xf8] sm:$0xff] %v2593
      %v2626 = vld [vmem:[%s2284 + $0x1] sm:$0xff]
      %v2627 = vld [vmem:[%s2284 + $0x9] sm:$0xff]
      %v2628 = vld [vmem:[%s2284 + $0x19] sm:$0xff]
      %v2629 = vld [vmem:[%s2284 + $0x21] sm:$0xff]
      %v2630 = vld [vmem:[%s2284 + $0x31] sm:$0xff]
      %v2631 = vld [vmem:[%s2284 + $0x39] sm:$0xff]
      %v2632 = vld [vmem:[%s2284 + $0x49] sm:$0xff]
      %v2633 = vld [vmem:[%s2284 + $0x51] sm:$0xff]
      %v2634 = vld [vmem:[%s2284 + $0x61] sm:$0xff]
      %v2635 = vld [vmem:[%s2284 + $0x69] sm:$0xff]
      %v2636 = vld [vmem:[%s2284 + $0x79] sm:$0xff]
      %v2637 = vld [vmem:[%s2284 + $0x81] sm:$0xff]
      %v2638 = vld [vmem:[%s2284 + $0x91] sm:$0xff]
      %v2639 = vld [vmem:[%s2284 + $0x99] sm:$0xff]
      %v2640 = vld [vmem:[%s2284 + $0xa9] sm:$0xff]
      %v2641 = vld [vmem:[%s2284 + $0xb1] sm:$0xff]
      %v2642 = vld [vmem:[%s2284 + $0xc1] sm:$0xff]
      %v2643 = vld [vmem:[%s2284 + $0xc9] sm:$0xff]
      %v2644 = vld [vmem:[%s2284 + $0xd9] sm:$0xff]
      %v2645 = vld [vmem:[%s2284 + $0xe1] sm:$0xff]
      %v2646 = vld [vmem:[%s2284 + $0xf1] sm:$0xff]
      %v2647 = vld [vmem:[%s2284 + $0xf9] sm:$0xff]
      %v2648 = vld [vmem:[%s2284 + $0x109] sm:$0xff]
      %v2649 = vld [vmem:[%s2284 + $0x111] sm:$0xff]
      %v2650 = vld [vmem:[%s2284 + $0x121] sm:$0xff]
      %v2651 = vld [vmem:[%s2284 + $0x129] sm:$0xff]
      %v2652 = vld [vmem:[%s2284 + $0x139] sm:$0xff]
      %v2653 = vld [vmem:[%s2284 + $0x141] sm:$0xff]
      %v2654 = vld [vmem:[%s2284 + $0x151] sm:$0xff]
      %v2655 = vld [vmem:[%s2284 + $0x159] sm:$0xff]
      %v2656 = vld [vmem:[%s2284 + $0x169] sm:$0xff]
      %v2657 = vld [vmem:[%s2284 + $0x171] sm:$0xff]
      %v2658 = vld [vmem:[%s1 + $0x1c] sm:$0xf]
      %v2659 = vld [vmem:[#allocation2] sm:$0xff]
      %v2660 = vld [vmem:[#allocation2 + $0x8] sm:$0xff]
      %v2661 = vld [vmem:[#allocation2 + $0x10] sm:$0xff]
      %v2662 = vld [vmem:[#allocation2 + $0x18] sm:$0xff]
      %v2663 = vld [vmem:[#allocation2 + $0x20] sm:$0xff]
      %v2664 = vld [vmem:[#allocation2 + $0x28] sm:$0xff]
      %v2665 = vld [vmem:[#allocation2 + $0x30] sm:$0xff]
      %v2666 = vld [vmem:[#allocation2 + $0x38] sm:$0xff]
      %v2667 = vld [vmem:[#allocation2 + $0x40] sm:$0xff]
      %v2668 = vld [vmem:[#allocation2 + $0x48] sm:$0xff]
      %v2669 = vld [vmem:[#allocation2 + $0x50] sm:$0xff]
      %v2670 = vld [vmem:[#allocation2 + $0x58] sm:$0xff]
      %v2671 = vld [vmem:[#allocation2 + $0x60] sm:$0xff]
      %v2672 = vld [vmem:[#allocation2 + $0x68] sm:$0xff]
      %v2673 = vld [vmem:[#allocation2 + $0x70] sm:$0xff]
      %v2674 = vld [vmem:[#allocation2 + $0x78] sm:$0xff]
      %v2675 = vld [vmem:[#allocation2 + $0x80] sm:$0xff]
      %v2676 = vld [vmem:[#allocation2 + $0x88] sm:$0xff]
      %v2677 = vld [vmem:[#allocation2 + $0x90] sm:$0xff]
      %v2678 = vld [vmem:[#allocation2 + $0x98] sm:$0xff]
      %v2679 = vld [vmem:[#allocation2 + $0xa0] sm:$0xff]
      %v2680 = vld [vmem:[#allocation2 + $0xa8] sm:$0xff]
      %v2681 = vld [vmem:[#allocation2 + $0xb0] sm:$0xff]
      %v2682 = vld [vmem:[#allocation2 + $0xb8] sm:$0xff]
      %v2683 = vld [vmem:[#allocation2 + $0xc0] sm:$0xff]
      %v2684 = vld [vmem:[#allocation2 + $0xc8] sm:$0xff]
      %v2685 = vld [vmem:[#allocation2 + $0xd0] sm:$0xff]
      %v2686 = vld [vmem:[#allocation2 + $0xd8] sm:$0xff]
      %v2687 = vld [vmem:[#allocation2 + $0xe0] sm:$0xff]
      %v2688 = vld [vmem:[#allocation2 + $0xe8] sm:$0xff]
      %v2689 = vld [vmem:[#allocation2 + $0xf0] sm:$0xff]
      %v2690 = vld [vmem:[#allocation2 + $0xf8] sm:$0xff]
      %v2692 = vsel %vm296, %v2626, 0
      %v2695 = vsel %vm296, %v2627, 0
      %v2698 = vsel %vm296, %v2628, 0
      %v2701 = vsel %vm296, %v2629, 0
      %v2704 = vsel %vm296, %v2630, 0
      %v2707 = vsel %vm296, %v2631, 0
      %v2710 = vsel %vm296, %v2632, 0
      %v2713 = vsel %vm296, %v2633, 0
      %v2716 = vsel %vm296, %v2634, 0
      %v2719 = vsel %vm296, %v2635, 0
      %v2722 = vsel %vm296, %v2636, 0
      %v2725 = vsel %vm296, %v2637, 0
      %v2728 = vsel %vm296, %v2638, 0
      %v2731 = vsel %vm296, %v2639, 0
      %v2734 = vsel %vm296, %v2640, 0
      %v2737 = vsel %vm296, %v2641, 0
      %v2740 = vsel %vm296, %v2642, 0
      %v2743 = vsel %vm296, %v2643, 0
      %v2746 = vsel %vm296, %v2644, 0
      %v2749 = vsel %vm296, %v2645, 0
      %v2752 = vsel %vm296, %v2646, 0
      %v2755 = vsel %vm296, %v2647, 0
      %v2758 = vsel %vm296, %v2648, 0
      %v2761 = vsel %vm296, %v2649, 0
      %v2764 = vsel %vm296, %v2650, 0
      %v2767 = vsel %vm296, %v2651, 0
      %v2770 = vsel %vm296, %v2652, 0
      %v2773 = vsel %vm296, %v2653, 0
      %v2776 = vsel %vm296, %v2654, 0
      %v2779 = vsel %vm296, %v2655, 0
      %v2782 = vsel %vm296, %v2656, 0
      %v2785 = vsel %vm296, %v2657, 0
      %v2788 = vsel %vm393, %v2658, 0
      %2790 = vmatpush.msra.mxu0 0.0
      %2791 = vmatpush.msra.mxu0 0.0
      %2792 = vmatpush.msra.mxu0 0.0
      %2793 = vmatpush.msra.mxu0 0.0
      %2794 = vmatpush.msra.mxu0 0.0
      %2795 = vmatpush.msra.mxu0 0.0
      %2796 = vmatpush.msra.mxu0 0.0
      %2797 = vmatpush.msra.mxu0 0.0
      %2798 = vmatpush.msra.mxu0 0.0
      %2799 = vmatpush.msra.mxu0 0.0
      %2800 = vmatpush.msra.mxu0 0.0
      %2801 = vmatpush.msra.mxu0 0.0
      %2802 = vmatpush.msra.mxu0 0.0
      %2803 = vmatpush.msra.mxu0 0.0
      %2804 = vmatpush.msra.mxu0 0.0
      %2805 = vmatpush.msra.mxu0 %v2788
      %2806 = vmatmul.f32.gmra.mxu0 %v2692
      %v2807 = vpop.f32.mrf.mxu0
      %v2808 = vadd.f32 0.0, %v2807
      %2809 = vmatmul.f32.gmra.mxu0 %v2695
      %v2810 = vpop.f32.mrf.mxu0
      %v2811 = vadd.f32 0.0, %v2810
      %2812 = vmatmul.f32.gmra.mxu0 %v2698
      %v2813 = vpop.f32.mrf.mxu0
      %v2814 = vadd.f32 0.0, %v2813
      %2815 = vmatmul.f32.gmra.mxu0 %v2701
      %v2816 = vpop.f32.mrf.mxu0
      %v2817 = vadd.f32 0.0, %v2816
      %2818 = vmatmul.f32.gmra.mxu0 %v2704
      %v2819 = vpop.f32.mrf.mxu0
      %v2820 = vadd.f32 0.0, %v2819
      %2821 = vmatmul.f32.gmra.mxu0 %v2707
      %v2822 = vpop.f32.mrf.mxu0
      %v2823 = vadd.f32 0.0, %v2822
      %2824 = vmatmul.f32.gmra.mxu0 %v2710
      %v2825 = vpop.f32.mrf.mxu0
      %v2826 = vadd.f32 0.0, %v2825
      %2827 = vmatmul.f32.gmra.mxu0 %v2713
      %v2828 = vpop.f32.mrf.mxu0
      %v2829 = vadd.f32 0.0, %v2828
      %2830 = vmatmul.f32.gmra.mxu0 %v2716
      %v2831 = vpop.f32.mrf.mxu0
      %v2832 = vadd.f32 0.0, %v2831
      %2833 = vmatmul.f32.gmra.mxu0 %v2719
      %v2834 = vpop.f32.mrf.mxu0
      %v2835 = vadd.f32 0.0, %v2834
      %2836 = vmatmul.f32.gmra.mxu0 %v2722
      %v2837 = vpop.f32.mrf.mxu0
      %v2838 = vadd.f32 0.0, %v2837
      %2839 = vmatmul.f32.gmra.mxu0 %v2725
      %v2840 = vpop.f32.mrf.mxu0
      %v2841 = vadd.f32 0.0, %v2840
      %2842 = vmatmul.f32.gmra.mxu0 %v2728
      %v2843 = vpop.f32.mrf.mxu0
      %v2844 = vadd.f32 0.0, %v2843
      %2845 = vmatmul.f32.gmra.mxu0 %v2731
      %v2846 = vpop.f32.mrf.mxu0
      %v2847 = vadd.f32 0.0, %v2846
      %2848 = vmatmul.f32.gmra.mxu0 %v2734
      %v2849 = vpop.f32.mrf.mxu0
      %v2850 = vadd.f32 0.0, %v2849
      %2851 = vmatmul.f32.gmra.mxu0 %v2737
      %v2852 = vpop.f32.mrf.mxu0
      %v2853 = vadd.f32 0.0, %v2852
      %2854 = vmatmul.f32.gmra.mxu0 %v2740
      %v2855 = vpop.f32.mrf.mxu0
      %v2856 = vadd.f32 0.0, %v2855
      %2857 = vmatmul.f32.gmra.mxu0 %v2743
      %v2858 = vpop.f32.mrf.mxu0
      %v2859 = vadd.f32 0.0, %v2858
      %2860 = vmatmul.f32.gmra.mxu0 %v2746
      %v2861 = vpop.f32.mrf.mxu0
      %v2862 = vadd.f32 0.0, %v2861
      %2863 = vmatmul.f32.gmra.mxu0 %v2749
      %v2864 = vpop.f32.mrf.mxu0
      %v2865 = vadd.f32 0.0, %v2864
      %2866 = vmatmul.f32.gmra.mxu0 %v2752
      %v2867 = vpop.f32.mrf.mxu0
      %v2868 = vadd.f32 0.0, %v2867
      %2869 = vmatmul.f32.gmra.mxu0 %v2755
      %v2870 = vpop.f32.mrf.mxu0
      %v2871 = vadd.f32 0.0, %v2870
      %2872 = vmatmul.f32.gmra.mxu0 %v2758
      %v2873 = vpop.f32.mrf.mxu0
      %v2874 = vadd.f32 0.0, %v2873
      %2875 = vmatmul.f32.gmra.mxu0 %v2761
      %v2876 = vpop.f32.mrf.mxu0
      %v2877 = vadd.f32 0.0, %v2876
      %2878 = vmatmul.f32.gmra.mxu0 %v2764
      %v2879 = vpop.f32.mrf.mxu0
      %v2880 = vadd.f32 0.0, %v2879
      %2881 = vmatmul.f32.gmra.mxu0 %v2767
      %v2882 = vpop.f32.mrf.mxu0
      %v2883 = vadd.f32 0.0, %v2882
      %2884 = vmatmul.f32.gmra.mxu0 %v2770
      %v2885 = vpop.f32.mrf.mxu0
      %v2886 = vadd.f32 0.0, %v2885
      %2887 = vmatmul.f32.gmra.mxu0 %v2773
      %v2888 = vpop.f32.mrf.mxu0
      %v2889 = vadd.f32 0.0, %v2888
      %2890 = vmatmul.f32.gmra.mxu0 %v2776
      %v2891 = vpop.f32.mrf.mxu0
      %v2892 = vadd.f32 0.0, %v2891
      %2893 = vmatmul.f32.gmra.mxu0 %v2779
      %v2894 = vpop.f32.mrf.mxu0
      %v2895 = vadd.f32 0.0, %v2894
      %2896 = vmatmul.f32.gmra.mxu0 %v2782
      %v2897 = vpop.f32.mrf.mxu0
      %v2898 = vadd.f32 0.0, %v2897
      %2899 = vmatmul.f32.gmra.mxu0 %v2785
      %v2900 = vpop.f32.mrf.mxu0
      %v2901 = vadd.f32 0.0, %v2900
      %2902 = vdwg.mxu0
      %v2903 = vadd.f32 %v2659, %v2808
      %v2904 = vadd.f32 %v2660, %v2811
      %v2905 = vadd.f32 %v2661, %v2814
      %v2906 = vadd.f32 %v2662, %v2817
      %v2907 = vadd.f32 %v2663, %v2820
      %v2908 = vadd.f32 %v2664, %v2823
      %v2909 = vadd.f32 %v2665, %v2826
      %v2910 = vadd.f32 %v2666, %v2829
      %v2911 = vadd.f32 %v2667, %v2832
      %v2912 = vadd.f32 %v2668, %v2835
      %v2913 = vadd.f32 %v2669, %v2838
      %v2914 = vadd.f32 %v2670, %v2841
      %v2915 = vadd.f32 %v2671, %v2844
      %v2916 = vadd.f32 %v2672, %v2847
      %v2917 = vadd.f32 %v2673, %v2850
      %v2918 = vadd.f32 %v2674, %v2853
      %v2919 = vadd.f32 %v2675, %v2856
      %v2920 = vadd.f32 %v2676, %v2859
      %v2921 = vadd.f32 %v2677, %v2862
      %v2922 = vadd.f32 %v2678, %v2865
      %v2923 = vadd.f32 %v2679, %v2868
      %v2924 = vadd.f32 %v2680, %v2871
      %v2925 = vadd.f32 %v2681, %v2874
      %v2926 = vadd.f32 %v2682, %v2877
      %v2927 = vadd.f32 %v2683, %v2880
      %v2928 = vadd.f32 %v2684, %v2883
      %v2929 = vadd.f32 %v2685, %v2886
      %v2930 = vadd.f32 %v2686, %v2889
      %v2931 = vadd.f32 %v2687, %v2892
      %v2932 = vadd.f32 %v2688, %v2895
      %v2933 = vadd.f32 %v2689, %v2898
      %v2934 = vadd.f32 %v2690, %v2901
      %2935 = vst [vmem:[#allocation2] sm:$0xff] %v2903
      %2936 = vst [vmem:[#allocation2 + $0x8] sm:$0xff] %v2904
      %2937 = vst [vmem:[#allocation2 + $0x10] sm:$0xff] %v2905
      %2938 = vst [vmem:[#allocation2 + $0x18] sm:$0xff] %v2906
      %2939 = vst [vmem:[#allocation2 + $0x20] sm:$0xff] %v2907
      %2940 = vst [vmem:[#allocation2 + $0x28] sm:$0xff] %v2908
      %2941 = vst [vmem:[#allocation2 + $0x30] sm:$0xff] %v2909
      %2942 = vst [vmem:[#allocation2 + $0x38] sm:$0xff] %v2910
      %2943 = vst [vmem:[#allocation2 + $0x40] sm:$0xff] %v2911
      %2944 = vst [vmem:[#allocation2 + $0x48] sm:$0xff] %v2912
      %2945 = vst [vmem:[#allocation2 + $0x50] sm:$0xff] %v2913
      %2946 = vst [vmem:[#allocation2 + $0x58] sm:$0xff] %v2914
      %2947 = vst [vmem:[#allocation2 + $0x60] sm:$0xff] %v2915
      %2948 = vst [vmem:[#allocation2 + $0x68] sm:$0xff] %v2916
      %2949 = vst [vmem:[#allocation2 + $0x70] sm:$0xff] %v2917
      %2950 = vst [vmem:[#allocation2 + $0x78] sm:$0xff] %v2918
      %2951 = vst [vmem:[#allocation2 + $0x80] sm:$0xff] %v2919
      %2952 = vst [vmem:[#allocation2 + $0x88] sm:$0xff] %v2920
      %2953 = vst [vmem:[#allocation2 + $0x90] sm:$0xff] %v2921
      %2954 = vst [vmem:[#allocation2 + $0x98] sm:$0xff] %v2922
      %2955 = vst [vmem:[#allocation2 + $0xa0] sm:$0xff] %v2923
      %2956 = vst [vmem:[#allocation2 + $0xa8] sm:$0xff] %v2924
      %2957 = vst [vmem:[#allocation2 + $0xb0] sm:$0xff] %v2925
      %2958 = vst [vmem:[#allocation2 + $0xb8] sm:$0xff] %v2926
      %2959 = vst [vmem:[#allocation2 + $0xc0] sm:$0xff] %v2927
      %2960 = vst [vmem:[#allocation2 + $0xc8] sm:$0xff] %v2928
      %2961 = vst [vmem:[#allocation2 + $0xd0] sm:$0xff] %v2929
      %2962 = vst [vmem:[#allocation2 + $0xd8] sm:$0xff] %v2930
      %2963 = vst [vmem:[#allocation2 + $0xe0] sm:$0xff] %v2931
      %2964 = vst [vmem:[#allocation2 + $0xe8] sm:$0xff] %v2932
      %2965 = vst [vmem:[#allocation2 + $0xf0] sm:$0xff] %v2933
      %2966 = vst [vmem:[#allocation2 + $0xf8] sm:$0xff] %v2934
      %v2967 = vld [vmem:[%s2284 + $0x2] sm:$0xff]
      %v2968 = vld [vmem:[%s2284 + $0xa] sm:$0xff]
      %v2969 = vld [vmem:[%s2284 + $0x1a] sm:$0xff]
      %v2970 = vld [vmem:[%s2284 + $0x22] sm:$0xff]
      %v2971 = vld [vmem:[%s2284 + $0x32] sm:$0xff]
      %v2972 = vld [vmem:[%s2284 + $0x3a] sm:$0xff]
      %v2973 = vld [vmem:[%s2284 + $0x4a] sm:$0xff]
      %v2974 = vld [vmem:[%s2284 + $0x52] sm:$0xff]
      %v2975 = vld [vmem:[%s2284 + $0x62] sm:$0xff]
      %v2976 = vld [vmem:[%s2284 + $0x6a] sm:$0xff]
      %v2977 = vld [vmem:[%s2284 + $0x7a] sm:$0xff]
      %v2978 = vld [vmem:[%s2284 + $0x82] sm:$0xff]
      %v2979 = vld [vmem:[%s2284 + $0x92] sm:$0xff]
      %v2980 = vld [vmem:[%s2284 + $0x9a] sm:$0xff]
      %v2981 = vld [vmem:[%s2284 + $0xaa] sm:$0xff]
      %v2982 = vld [vmem:[%s2284 + $0xb2] sm:$0xff]
      %v2983 = vld [vmem:[%s2284 + $0xc2] sm:$0xff]
      %v2984 = vld [vmem:[%s2284 + $0xca] sm:$0xff]
      %v2985 = vld [vmem:[%s2284 + $0xda] sm:$0xff]
      %v2986 = vld [vmem:[%s2284 + $0xe2] sm:$0xff]
      %v2987 = vld [vmem:[%s2284 + $0xf2] sm:$0xff]
      %v2988 = vld [vmem:[%s2284 + $0xfa] sm:$0xff]
      %v2989 = vld [vmem:[%s2284 + $0x10a] sm:$0xff]
      %v2990 = vld [vmem:[%s2284 + $0x112] sm:$0xff]
      %v2991 = vld [vmem:[%s2284 + $0x122] sm:$0xff]
      %v2992 = vld [vmem:[%s2284 + $0x12a] sm:$0xff]
      %v2993 = vld [vmem:[%s2284 + $0x13a] sm:$0xff]
      %v2994 = vld [vmem:[%s2284 + $0x142] sm:$0xff]
      %v2995 = vld [vmem:[%s2284 + $0x152] sm:$0xff]
      %v2996 = vld [vmem:[%s2284 + $0x15a] sm:$0xff]
      %v2997 = vld [vmem:[%s2284 + $0x16a] sm:$0xff]
      %v2998 = vld [vmem:[%s2284 + $0x172] sm:$0xff]
      %v2999 = vld [vmem:[%s1 + $0x20] sm:$0xf]
      %v3000 = vld [vmem:[#allocation2] sm:$0xff]
      %v3001 = vld [vmem:[#allocation2 + $0x8] sm:$0xff]
      %v3002 = vld [vmem:[#allocation2 + $0x10] sm:$0xff]
      %v3003 = vld [vmem:[#allocation2 + $0x18] sm:$0xff]
      %v3004 = vld [vmem:[#allocation2 + $0x20] sm:$0xff]
      %v3005 = vld [vmem:[#allocation2 + $0x28] sm:$0xff]
      %v3006 = vld [vmem:[#allocation2 + $0x30] sm:$0xff]
      %v3007 = vld [vmem:[#allocation2 + $0x38] sm:$0xff]
      %v3008 = vld [vmem:[#allocation2 + $0x40] sm:$0xff]
      %v3009 = vld [vmem:[#allocation2 + $0x48] sm:$0xff]
      %v3010 = vld [vmem:[#allocation2 + $0x50] sm:$0xff]
      %v3011 = vld [vmem:[#allocation2 + $0x58] sm:$0xff]
      %v3012 = vld [vmem:[#allocation2 + $0x60] sm:$0xff]
      %v3013 = vld [vmem:[#allocation2 + $0x68] sm:$0xff]
      %v3014 = vld [vmem:[#allocation2 + $0x70] sm:$0xff]
      %v3015 = vld [vmem:[#allocation2 + $0x78] sm:$0xff]
      %v3016 = vld [vmem:[#allocation2 + $0x80] sm:$0xff]
      %v3017 = vld [vmem:[#allocation2 + $0x88] sm:$0xff]
      %v3018 = vld [vmem:[#allocation2 + $0x90] sm:$0xff]
      %v3019 = vld [vmem:[#allocation2 + $0x98] sm:$0xff]
      %v3020 = vld [vmem:[#allocation2 + $0xa0] sm:$0xff]
      %v3021 = vld [vmem:[#allocation2 + $0xa8] sm:$0xff]
      %v3022 = vld [vmem:[#allocation2 + $0xb0] sm:$0xff]
      %v3023 = vld [vmem:[#allocation2 + $0xb8] sm:$0xff]
      %v3024 = vld [vmem:[#allocation2 + $0xc0] sm:$0xff]
      %v3025 = vld [vmem:[#allocation2 + $0xc8] sm:$0xff]
      %v3026 = vld [vmem:[#allocation2 + $0xd0] sm:$0xff]
      %v3027 = vld [vmem:[#allocation2 + $0xd8] sm:$0xff]
      %v3028 = vld [vmem:[#allocation2 + $0xe0] sm:$0xff]
      %v3029 = vld [vmem:[#allocation2 + $0xe8] sm:$0xff]
      %v3030 = vld [vmem:[#allocation2 + $0xf0] sm:$0xff]
      %v3031 = vld [vmem:[#allocation2 + $0xf8] sm:$0xff]
      %v3033 = vsel %vm296, %v2967, 0
      %v3036 = vsel %vm296, %v2968, 0
      %v3039 = vsel %vm296, %v2969, 0
      %v3042 = vsel %vm296, %v2970, 0
      %v3045 = vsel %vm296, %v2971, 0
      %v3048 = vsel %vm296, %v2972, 0
      %v3051 = vsel %vm296, %v2973, 0
      %v3054 = vsel %vm296, %v2974, 0
      %v3057 = vsel %vm296, %v2975, 0
      %v3060 = vsel %vm296, %v2976, 0
      %v3063 = vsel %vm296, %v2977, 0
      %v3066 = vsel %vm296, %v2978, 0
      %v3069 = vsel %vm296, %v2979, 0
      %v3072 = vsel %vm296, %v2980, 0
      %v3075 = vsel %vm296, %v2981, 0
      %v3078 = vsel %vm296, %v2982, 0
      %v3081 = vsel %vm296, %v2983, 0
      %v3084 = vsel %vm296, %v2984, 0
      %v3087 = vsel %vm296, %v2985, 0
      %v3090 = vsel %vm296, %v2986, 0
      %v3093 = vsel %vm296, %v2987, 0
      %v3096 = vsel %vm296, %v2988, 0
      %v3099 = vsel %vm296, %v2989, 0
      %v3102 = vsel %vm296, %v2990, 0
      %v3105 = vsel %vm296, %v2991, 0
      %v3108 = vsel %vm296, %v2992, 0
      %v3111 = vsel %vm296, %v2993, 0
      %v3114 = vsel %vm296, %v2994, 0
      %v3117 = vsel %vm296, %v2995, 0
      %v3120 = vsel %vm296, %v2996, 0
      %v3123 = vsel %vm296, %v2997, 0
      %v3126 = vsel %vm296, %v2998, 0
      %v3129 = vsel %vm393, %v2999, 0
      %3131 = vmatpush.msra.mxu0 0.0
      %3132 = vmatpush.msra.mxu0 0.0
      %3133 = vmatpush.msra.mxu0 0.0
      %3134 = vmatpush.msra.mxu0 0.0
      %3135 = vmatpush.msra.mxu0 0.0
      %3136 = vmatpush.msra.mxu0 0.0
      %3137 = vmatpush.msra.mxu0 0.0
      %3138 = vmatpush.msra.mxu0 0.0
      %3139 = vmatpush.msra.mxu0 0.0
      %3140 = vmatpush.msra.mxu0 0.0
      %3141 = vmatpush.msra.mxu0 0.0
      %3142 = vmatpush.msra.mxu0 0.0
      %3143 = vmatpush.msra.mxu0 0.0
      %3144 = vmatpush.msra.mxu0 0.0
      %3145 = vmatpush.msra.mxu0 0.0
      %3146 = vmatpush.msra.mxu0 %v3129
      %3147 = vmatmul.f32.gmra.mxu0 %v3033
      %v3148 = vpop.f32.mrf.mxu0
      %v3149 = vadd.f32 0.0, %v3148
      %3150 = vmatmul.f32.gmra.mxu0 %v3036
      %v3151 = vpop.f32.mrf.mxu0
      %v3152 = vadd.f32 0.0, %v3151
      %3153 = vmatmul.f32.gmra.mxu0 %v3039
      %v3154 = vpop.f32.mrf.mxu0
      %v3155 = vadd.f32 0.0, %v3154
      %3156 = vmatmul.f32.gmra.mxu0 %v3042
      %v3157 = vpop.f32.mrf.mxu0
      %v3158 = vadd.f32 0.0, %v3157
      %3159 = vmatmul.f32.gmra.mxu0 %v3045
      %v3160 = vpop.f32.mrf.mxu0
      %v3161 = vadd.f32 0.0, %v3160
      %3162 = vmatmul.f32.gmra.mxu0 %v3048
      %v3163 = vpop.f32.mrf.mxu0
      %v3164 = vadd.f32 0.0, %v3163
      %3165 = vmatmul.f32.gmra.mxu0 %v3051
      %v3166 = vpop.f32.mrf.mxu0
      %v3167 = vadd.f32 0.0, %v3166
      %3168 = vmatmul.f32.gmra.mxu0 %v3054
      %v3169 = vpop.f32.mrf.mxu0
      %v3170 = vadd.f32 0.0, %v3169
      %3171 = vmatmul.f32.gmra.mxu0 %v3057
      %v3172 = vpop.f32.mrf.mxu0
      %v3173 = vadd.f32 0.0, %v3172
      %3174 = vmatmul.f32.gmra.mxu0 %v3060
      %v3175 = vpop.f32.mrf.mxu0
      %v3176 = vadd.f32 0.0, %v3175
      %3177 = vmatmul.f32.gmra.mxu0 %v3063
      %v3178 = vpop.f32.mrf.mxu0
      %v3179 = vadd.f32 0.0, %v3178
      %3180 = vmatmul.f32.gmra.mxu0 %v3066
      %v3181 = vpop.f32.mrf.mxu0
      %v3182 = vadd.f32 0.0, %v3181
      %3183 = vmatmul.f32.gmra.mxu0 %v3069
      %v3184 = vpop.f32.mrf.mxu0
      %v3185 = vadd.f32 0.0, %v3184
      %3186 = vmatmul.f32.gmra.mxu0 %v3072
      %v3187 = vpop.f32.mrf.mxu0
      %v3188 = vadd.f32 0.0, %v3187
      %3189 = vmatmul.f32.gmra.mxu0 %v3075
      %v3190 = vpop.f32.mrf.mxu0
      %v3191 = vadd.f32 0.0, %v3190
      %3192 = vmatmul.f32.gmra.mxu0 %v3078
      %v3193 = vpop.f32.mrf.mxu0
      %v3194 = vadd.f32 0.0, %v3193
      %3195 = vmatmul.f32.gmra.mxu0 %v3081
      %v3196 = vpop.f32.mrf.mxu0
      %v3197 = vadd.f32 0.0, %v3196
      %3198 = vmatmul.f32.gmra.mxu0 %v3084
      %v3199 = vpop.f32.mrf.mxu0
      %v3200 = vadd.f32 0.0, %v3199
      %3201 = vmatmul.f32.gmra.mxu0 %v3087
      %v3202 = vpop.f32.mrf.mxu0
      %v3203 = vadd.f32 0.0, %v3202
      %3204 = vmatmul.f32.gmra.mxu0 %v3090
      %v3205 = vpop.f32.mrf.mxu0
      %v3206 = vadd.f32 0.0, %v3205
      %3207 = vmatmul.f32.gmra.mxu0 %v3093
      %v3208 = vpop.f32.mrf.mxu0
      %v3209 = vadd.f32 0.0, %v3208
      %3210 = vmatmul.f32.gmra.mxu0 %v3096
      %v3211 = vpop.f32.mrf.mxu0
      %v3212 = vadd.f32 0.0, %v3211
      %3213 = vmatmul.f32.gmra.mxu0 %v3099
      %v3214 = vpop.f32.mrf.mxu0
      %v3215 = vadd.f32 0.0, %v3214
      %3216 = vmatmul.f32.gmra.mxu0 %v3102
      %v3217 = vpop.f32.mrf.mxu0
      %v3218 = vadd.f32 0.0, %v3217
      %3219 = vmatmul.f32.gmra.mxu0 %v3105
      %v3220 = vpop.f32.mrf.mxu0
      %v3221 = vadd.f32 0.0, %v3220
      %3222 = vmatmul.f32.gmra.mxu0 %v3108
      %v3223 = vpop.f32.mrf.mxu0
      %v3224 = vadd.f32 0.0, %v3223
      %3225 = vmatmul.f32.gmra.mxu0 %v3111
      %v3226 = vpop.f32.mrf.mxu0
      %v3227 = vadd.f32 0.0, %v3226
      %3228 = vmatmul.f32.gmra.mxu0 %v3114
      %v3229 = vpop.f32.mrf.mxu0
      %v3230 = vadd.f32 0.0, %v3229
      %3231 = vmatmul.f32.gmra.mxu0 %v3117
      %v3232 = vpop.f32.mrf.mxu0
      %v3233 = vadd.f32 0.0, %v3232
      %3234 = vmatmul.f32.gmra.mxu0 %v3120
      %v3235 = vpop.f32.mrf.mxu0
      %v3236 = vadd.f32 0.0, %v3235
      %3237 = vmatmul.f32.gmra.mxu0 %v3123
      %v3238 = vpop.f32.mrf.mxu0
      %v3239 = vadd.f32 0.0, %v3238
      %3240 = vmatmul.f32.gmra.mxu0 %v3126
      %v3241 = vpop.f32.mrf.mxu0
      %v3242 = vadd.f32 0.0, %v3241
      %3243 = vdwg.mxu0
      %v3244 = vadd.f32 %v3000, %v3149
      %v3245 = vadd.f32 %v3001, %v3152
      %v3246 = vadd.f32 %v3002, %v3155
      %v3247 = vadd.f32 %v3003, %v3158
      %v3248 = vadd.f32 %v3004, %v3161
      %v3249 = vadd.f32 %v3005, %v3164
      %v3250 = vadd.f32 %v3006, %v3167
      %v3251 = vadd.f32 %v3007, %v3170
      %v3252 = vadd.f32 %v3008, %v3173
      %v3253 = vadd.f32 %v3009, %v3176
      %v3254 = vadd.f32 %v3010, %v3179
      %v3255 = vadd.f32 %v3011, %v3182
      %v3256 = vadd.f32 %v3012, %v3185
      %v3257 = vadd.f32 %v3013, %v3188
      %v3258 = vadd.f32 %v3014, %v3191
      %v3259 = vadd.f32 %v3015, %v3194
      %v3260 = vadd.f32 %v3016, %v3197
      %v3261 = vadd.f32 %v3017, %v3200
      %v3262 = vadd.f32 %v3018, %v3203
      %v3263 = vadd.f32 %v3019, %v3206
      %v3264 = vadd.f32 %v3020, %v3209
      %v3265 = vadd.f32 %v3021, %v3212
      %v3266 = vadd.f32 %v3022, %v3215
      %v3267 = vadd.f32 %v3023, %v3218
      %v3268 = vadd.f32 %v3024, %v3221
      %v3269 = vadd.f32 %v3025, %v3224
      %v3270 = vadd.f32 %v3026, %v3227
      %v3271 = vadd.f32 %v3027, %v3230
      %v3272 = vadd.f32 %v3028, %v3233
      %v3273 = vadd.f32 %v3029, %v3236
      %v3274 = vadd.f32 %v3030, %v3239
      %v3275 = vadd.f32 %v3031, %v3242
      %3276 = vst [vmem:[#allocation2] sm:$0xff] %v3244
      %3277 = vst [vmem:[#allocation2 + $0x8] sm:$0xff] %v3245
      %3278 = vst [vmem:[#allocation2 + $0x10] sm:$0xff] %v3246
      %3279 = vst [vmem:[#allocation2 + $0x18] sm:$0xff] %v3247
      %3280 = vst [vmem:[#allocation2 + $0x20] sm:$0xff] %v3248
      %3281 = vst [vmem:[#allocation2 + $0x28] sm:$0xff] %v3249
      %3282 = vst [vmem:[#allocation2 + $0x30] sm:$0xff] %v3250
      %3283 = vst [vmem:[#allocation2 + $0x38] sm:$0xff] %v3251
      %3284 = vst [vmem:[#allocation2 + $0x40] sm:$0xff] %v3252
      %3285 = vst [vmem:[#allocation2 + $0x48] sm:$0xff] %v3253
      %3286 = vst [vmem:[#allocation2 + $0x50] sm:$0xff] %v3254
      %3287 = vst [vmem:[#allocation2 + $0x58] sm:$0xff] %v3255
      %3288 = vst [vmem:[#allocation2 + $0x60] sm:$0xff] %v3256
      %3289 = vst [vmem:[#allocation2 + $0x68] sm:$0xff] %v3257
      %3290 = vst [vmem:[#allocation2 + $0x70] sm:$0xff] %v3258
      %3291 = vst [vmem:[#allocation2 + $0x78] sm:$0xff] %v3259
      %3292 = vst [vmem:[#allocation2 + $0x80] sm:$0xff] %v3260
      %3293 = vst [vmem:[#allocation2 + $0x88] sm:$0xff] %v3261
      %3294 = vst [vmem:[#allocation2 + $0x90] sm:$0xff] %v3262
      %3295 = vst [vmem:[#allocation2 + $0x98] sm:$0xff] %v3263
      %3296 = vst [vmem:[#allocation2 + $0xa0] sm:$0xff] %v3264
      %3297 = vst [vmem:[#allocation2 + $0xa8] sm:$0xff] %v3265
      %3298 = vst [vmem:[#allocation2 + $0xb0] sm:$0xff] %v3266
      %3299 = vst [vmem:[#allocation2 + $0xb8] sm:$0xff] %v3267
      %3300 = vst [vmem:[#allocation2 + $0xc0] sm:$0xff] %v3268
      %3301 = vst [vmem:[#allocation2 + $0xc8] sm:$0xff] %v3269
      %3302 = vst [vmem:[#allocation2 + $0xd0] sm:$0xff] %v3270
      %3303 = vst [vmem:[#allocation2 + $0xd8] sm:$0xff] %v3271
      %3304 = vst [vmem:[#allocation2 + $0xe0] sm:$0xff] %v3272
      %3305 = vst [vmem:[#allocation2 + $0xe8] sm:$0xff] %v3273
      %3306 = vst [vmem:[#allocation2 + $0xf0] sm:$0xff] %v3274
      %3307 = vst [vmem:[#allocation2 + $0xf8] sm:$0xff] %v3275
      %v3308 = vld [vmem:[#allocation2] sm:$0xff]
      %v3309 = vld [vmem:[#allocation2 + $0x8] sm:$0xff]
      %v3310 = vld [vmem:[#allocation2 + $0x10] sm:$0xff]
      %v3311 = vld [vmem:[#allocation2 + $0x18] sm:$0xff]
      %v3312 = vld [vmem:[#allocation2 + $0x20] sm:$0xff]
      %v3313 = vld [vmem:[#allocation2 + $0x28] sm:$0xff]
      %v3314 = vld [vmem:[#allocation2 + $0x30] sm:$0xff]
      %v3315 = vld [vmem:[#allocation2 + $0x38] sm:$0xff]
      %v3316 = vld [vmem:[#allocation2 + $0x40] sm:$0xff]
      %v3317 = vld [vmem:[#allocation2 + $0x48] sm:$0xff]
      %v3318 = vld [vmem:[#allocation2 + $0x50] sm:$0xff]
      %v3319 = vld [vmem:[#allocation2 + $0x58] sm:$0xff]
      %v3320 = vld [vmem:[#allocation2 + $0x60] sm:$0xff]
      %v3321 = vld [vmem:[#allocation2 + $0x68] sm:$0xff]
      %v3322 = vld [vmem:[#allocation2 + $0x70] sm:$0xff]
      %v3323 = vld [vmem:[#allocation2 + $0x78] sm:$0xff]
      %v3324 = vld [vmem:[#allocation2 + $0x80] sm:$0xff]
      %v3325 = vld [vmem:[#allocation2 + $0x88] sm:$0xff]
      %v3326 = vld [vmem:[#allocation2 + $0x90] sm:$0xff]
      %v3327 = vld [vmem:[#allocation2 + $0x98] sm:$0xff]
      %v3328 = vld [vmem:[#allocation2 + $0xa0] sm:$0xff]
      %v3329 = vld [vmem:[#allocation2 + $0xa8] sm:$0xff]
      %v3330 = vld [vmem:[#allocation2 + $0xb0] sm:$0xff]
      %v3331 = vld [vmem:[#allocation2 + $0xb8] sm:$0xff]
      %v3332 = vld [vmem:[#allocation2 + $0xc0] sm:$0xff]
      %v3333 = vld [vmem:[#allocation2 + $0xc8] sm:$0xff]
      %v3334 = vld [vmem:[#allocation2 + $0xd0] sm:$0xff]
      %v3335 = vld [vmem:[#allocation2 + $0xd8] sm:$0xff]
      %v3336 = vld [vmem:[#allocation2 + $0xe0] sm:$0xff]
      %v3337 = vld [vmem:[#allocation2 + $0xe8] sm:$0xff]
      %v3338 = vld [vmem:[#allocation2 + $0xf0] sm:$0xff]
      %v3339 = vld [vmem:[#allocation2 + $0xf8] sm:$0xff]
      %v3340 = vld [vmem:[%s2] sm:$0x1]
      %v3342 = vperm.slane %v3340, 0
      %v3344 = vadd.f32 %v3308, %v3342
      %v3345 = vadd.f32 %v3309, %v3342
      %v3346 = vadd.f32 %v3310, %v3342
      %v3347 = vadd.f32 %v3311, %v3342
      %v3348 = vadd.f32 %v3312, %v3342
      %v3349 = vadd.f32 %v3313, %v3342
      %v3350 = vadd.f32 %v3314, %v3342
      %v3351 = vadd.f32 %v3315, %v3342
      %v3352 = vadd.f32 %v3316, %v3342
      %v3353 = vadd.f32 %v3317, %v3342
      %v3354 = vadd.f32 %v3318, %v3342
      %v3355 = vadd.f32 %v3319, %v3342
      %v3356 = vadd.f32 %v3320, %v3342
      %v3357 = vadd.f32 %v3321, %v3342
      %v3358 = vadd.f32 %v3322, %v3342
      %v3359 = vadd.f32 %v3323, %v3342
      %v3360 = vadd.f32 %v3324, %v3342
      %v3361 = vadd.f32 %v3325, %v3342
      %v3362 = vadd.f32 %v3326, %v3342
      %v3363 = vadd.f32 %v3327, %v3342
      %v3364 = vadd.f32 %v3328, %v3342
      %v3365 = vadd.f32 %v3329, %v3342
      %v3366 = vadd.f32 %v3330, %v3342
      %v3367 = vadd.f32 %v3331, %v3342
      %v3368 = vadd.f32 %v3332, %v3342
      %v3369 = vadd.f32 %v3333, %v3342
      %v3370 = vadd.f32 %v3334, %v3342
      %v3371 = vadd.f32 %v3335, %v3342
      %v3372 = vadd.f32 %v3336, %v3342
      %v3373 = vadd.f32 %v3337, %v3342
      %v3374 = vadd.f32 %v3338, %v3342
      %v3375 = vadd.f32 %v3339, %v3342
      %v3376 = vmax.f32 %v3344, 0.0
      %v3377 = vmax.f32 %v3345, 0.0
      %v3378 = vmax.f32 %v3346, 0.0
      %v3379 = vmax.f32 %v3347, 0.0
      %v3380 = vmax.f32 %v3348, 0.0
      %v3381 = vmax.f32 %v3349, 0.0
      %v3382 = vmax.f32 %v3350, 0.0
      %v3383 = vmax.f32 %v3351, 0.0
      %v3384 = vmax.f32 %v3352, 0.0
      %v3385 = vmax.f32 %v3353, 0.0
      %v3386 = vmax.f32 %v3354, 0.0
      %v3387 = vmax.f32 %v3355, 0.0
      %v3388 = vmax.f32 %v3356, 0.0
      %v3389 = vmax.f32 %v3357, 0.0
      %v3390 = vmax.f32 %v3358, 0.0
      %v3391 = vmax.f32 %v3359, 0.0
      %v3392 = vmax.f32 %v3360, 0.0
      %v3393 = vmax.f32 %v3361, 0.0
      %v3394 = vmax.f32 %v3362, 0.0
      %v3395 = vmax.f32 %v3363, 0.0
      %v3396 = vmax.f32 %v3364, 0.0
      %v3397 = vmax.f32 %v3365, 0.0
      %v3398 = vmax.f32 %v3366, 0.0
      %v3399 = vmax.f32 %v3367, 0.0
      %v3400 = vmax.f32 %v3368, 0.0
      %v3401 = vmax.f32 %v3369, 0.0
      %v3402 = vmax.f32 %v3370, 0.0
      %v3403 = vmax.f32 %v3371, 0.0
      %v3404 = vmax.f32 %v3372, 0.0
      %v3405 = vmax.f32 %v3373, 0.0
      %v3406 = vmax.f32 %v3374, 0.0
      %v3407 = vmax.f32 %v3375, 0.0
      %3408 = vst [vmem:[%s194] sm:$0xff] %v3376
      %3409 = vst [vmem:[%s194 + $0x8] sm:$0xff] %v3377
      %3410 = vst [vmem:[%s194 + $0x10] sm:$0xff] %v3378
      %3411 = vst [vmem:[%s194 + $0x18] sm:$0xff] %v3379
      %3412 = vst [vmem:[%s194 + $0x20] sm:$0xff] %v3380
      %3413 = vst [vmem:[%s194 + $0x28] sm:$0xff] %v3381
      %3414 = vst [vmem:[%s194 + $0x30] sm:$0xff] %v3382
      %3415 = vst [vmem:[%s194 + $0x38] sm:$0xff] %v3383
      %3416 = vst [vmem:[%s194 + $0x40] sm:$0xff] %v3384
      %3417 = vst [vmem:[%s194 + $0x48] sm:$0xff] %v3385
      %3418 = vst [vmem:[%s194 + $0x50] sm:$0xff] %v3386
      %3419 = vst [vmem:[%s194 + $0x58] sm:$0xff] %v3387
      %3420 = vst [vmem:[%s194 + $0x60] sm:$0xff] %v3388
      %3421 = vst [vmem:[%s194 + $0x68] sm:$0xff] %v3389
      %3422 = vst [vmem:[%s194 + $0x70] sm:$0xff] %v3390
      %3423 = vst [vmem:[%s194 + $0x78] sm:$0xff] %v3391
      %3424 = vst [vmem:[%s194 + $0x80] sm:$0xff] %v3392
      %3425 = vst [vmem:[%s194 + $0x88] sm:$0xff] %v3393
      %3426 = vst [vmem:[%s194 + $0x90] sm:$0xff] %v3394
      %3427 = vst [vmem:[%s194 + $0x98] sm:$0xff] %v3395
      %3428 = vst [vmem:[%s194 + $0xa0] sm:$0xff] %v3396
      %3429 = vst [vmem:[%s194 + $0xa8] sm:$0xff] %v3397
      %3430 = vst [vmem:[%s194 + $0xb0] sm:$0xff] %v3398
      %3431 = vst [vmem:[%s194 + $0xb8] sm:$0xff] %v3399
      %3432 = vst [vmem:[%s194 + $0xc0] sm:$0xff] %v3400
      %3433 = vst [vmem:[%s194 + $0xc8] sm:$0xff] %v3401
      %3434 = vst [vmem:[%s194 + $0xd0] sm:$0xff] %v3402
      %3435 = vst [vmem:[%s194 + $0xd8] sm:$0xff] %v3403
      %3436 = vst [vmem:[%s194 + $0xe0] sm:$0xff] %v3404
      %3437 = vst [vmem:[%s194 + $0xe8] sm:$0xff] %v3405
      %3438 = vst [vmem:[%s194 + $0xf0] sm:$0xff] %v3406
      %3439 = vst [vmem:[%s194 + $0xf8] sm:$0xff] %v3407
      %s3440 = smul.u32 16, %s19
      %p3441 = scmp.lt.s32.totalorder %s18, 1
      %s3442 = scalar_select %p3441, %s18, 1
      %p3443 = scmp.lt.s32.totalorder %s3440, 15
      %s3444 = scalar_select %p3443, %s3440, 15
      %s3445 = smul.addr %s3444, 2
      %s3446 = smul.addr %s3442, 32
      %s3447 = sadd.s32 %s3445, %s3446
      %s3448 = smul.addr %s3447, 8
      %s3449 = scalar_lea.vmem %s3, %s3448
      // Predicated region
      $region33: #{basic_conv2d.1} parent=31 // pred_check
        %p3450 = pneg %p114
      $region34: #{basic_conv2d.1} parent=31 // pred_check_branch
        %3452 = sbr.rel (%p3450) target = $region36
      $region35: #{basic_conv2d.1} parent=31 // pred_region
        %s3453 = smul.u32 16, %s19
      $region36: #{basic_conv2d.1} parent=31 // pred_fallthru
        _
    $region32: #{basic_conv2d.1} parent=5 // pred_fallthru
      _
    %p3454 = scmp.le.s32.totalorder 2, %s9
    // Predicated region
    $region37: #{basic_conv2d.1} parent=5 // pred_check
      %p3455 = pneg %p3454
    $region38: #{basic_conv2d.1} parent=5 // pred_check_branch
      %3457 = sbr.rel (%p3455) target = $region40
    $region39: #{basic_conv2d.1} parent=5 // pred_region
      %s3458 = ssub.s32 %s9, 2
      // Predicated region
      $region41: #{basic_conv2d.1} parent=39 // pred_check
        %p3459 = pneg %p120
      $region42: #{basic_conv2d.1} parent=39 // pred_check_branch
        %3461 = sbr.rel (%p3459) target = $region44
      $region43: #{basic_conv2d.1} parent=39 // pred_region
        %s3462 = smul.u32 16, %s21
        %p3463 = scmp.lt.s32.totalorder %s20, 1
        %s3464 = scalar_select %p3463, %s20, 1
        %p3465 = scmp.lt.s32.totalorder %s3462, 15
        %s3466 = scalar_select %p3465, %s3462, 15
        %s3467 = smul.addr %s3466, 2
        %s3468 = smul.addr %s3464, 32
        %s3469 = sadd.s32 %s3467, %s3468
        %s3470 = smul.addr %s3469, 8
        %s3471 = scalar_lea.vmem %s3, %s3470
      $region44: #{basic_conv2d.1} parent=39 // pred_fallthru
        _
    $region40: #{basic_conv2d.1} parent=5 // pred_fallthru
      _
  $region6: #{basic_conv2d.1} parent=0 // loop_footer
    %s13 = sadd.s32 1, %s9
  $region7: #{basic_conv2d.1} parent=0 // loop_footer_branch
    %8 = sbr.rel target = $region3
  $region8: #{basic_conv2d.1} parent=0 // loop_exit
    _

</llo_original>
